<compile_context>
chip_gen: v6e
topology: v6e:2x2x1
jax: 0.10.0
libtpu: 0.0.40
codegen_flags: <defaults>
</compile_context>

<pallas_src>
import functools

import jax
import jax.numpy as jnp
import numpy as np
from jax.experimental import pallas as pl
from jax.experimental.pallas import tpu as pltpu

_LANE = 128
_SUBLANE = 8


def _pad_up(v, m):
    return ((v + m - 1) // m) * m


def _conv_bn_relu6_kernel(x_ref, w_ref, bias_ref, o_ref, col_ref, *,
                          ksize, out_h, out_w, kkc, tile_rows):
    """One grid step = one block of images, fully fused conv + BN + ReLU6.

    x_ref   : (block_b, Hp, Wp, Cin)   zero-padded NHWC input block (compute dtype)
    w_ref   : (KKC_p, Cout_p)          BN-folded weights, tap-major im2col layout
    bias_ref: (1, Cout_p)              BN-folded bias (f32)
    o_ref   : (block_b*H*W, Cout_p)    lane-dense output slab
    col_ref : (block_b*H*W, KKC_p)     VMEM im2col scratch (compute dtype)
    """
    block_b = x_ref.shape[0]
    cin = x_ref.shape[-1]
    rows = block_b * out_h * out_w
    kkc_p = col_ref.shape[-1]

    # ---- im2col packing: one pass over the input block --------------------
    # (Folds the K*K taps into the contraction dim; removes per-tap matmul
    #  operand relayouts and the K*K accumulator read-modify-write.)
    if kkc_p > kkc:
        # Zero the lane padding so 0-weights never multiply garbage (NaN-safe).
        col_ref[:, kkc:] = jnp.zeros((rows, kkc_p - kkc), col_ref.dtype)
    for kh in range(ksize):
        for kw in range(ksize):
            tap = kh * ksize + kw
            patch = x_ref[:, kh:kh + out_h, kw:kw + out_w, :]   # (B, H, W, Cin)
            col_ref[:, tap * cin:(tap + 1) * cin] = patch.reshape(rows, cin)

    # ---- row-tiled deep matmul (contraction = K*K*Cin) + bias + ReLU6 ------
    # Dropout2d: p = 0.0 (eval) -> identity.  BN already folded into w/bias.
    bias = bias_ref[...]                                        # (1, Cout_p) f32
    n_tiles = rows // tile_rows
    for t in range(n_tiles):                                    # static, few iters
        r0, r1 = t * tile_rows, (t + 1) * tile_rows
        acc = jnp.dot(col_ref[r0:r1, :], w_ref[...],
                      preferred_element_type=jnp.float32)       # f32 accumulate
        y = jnp.minimum(jnp.maximum(acc + bias, 0.0), 6.0)      # ReLU6
        o_ref[r0:r1, :] = y.astype(o_ref.dtype)                 # one store / tile


def conv_block_2d(x_nchw, conv_w, bn_mean, bn_var, *, eps=1e-5,
                  block_b=None, compute_dtype=jnp.bfloat16, out_dtype=None,
                  vmem_budget_bytes=48 * 2**20):
    """x_nchw: (N, Cin, H, W); conv_w: torch layout (Cout, Cin, K, K);
    bn_mean/bn_var: (Cout,) eval running stats. Returns (N, Cout, H, W)."""
    N, cin, H, W = x_nchw.shape
    cout, cin2, K, K2 = conv_w.shape
    assert cin2 == cin and K == K2 and K % 2 == 1, "odd square kernel, groups=1"
    if out_dtype is None:
        out_dtype = x_nchw.dtype
    pad = K // 2
    Hp, Wp = H + 2 * pad, W + 2 * pad
    cout_p = _pad_up(cout, _LANE)
    kkc = K * K * cin
    kkc_p = _pad_up(kkc, _LANE)
    cdt = np.dtype(compute_dtype).itemsize
    odt = np.dtype(out_dtype).itemsize

    # ---- fold eval BatchNorm2d(affine=False) into conv weights + bias ------
    scale = jax.lax.rsqrt(bn_var.astype(jnp.float32) + eps)            # (Cout,)
    bias = (-bn_mean.astype(jnp.float32) * scale)                       # (Cout,)
    w = conv_w.astype(jnp.float32) * scale[:, None, None, None]
    # (Cout, Cin, K, K) -> im2col layout (K*K*Cin, Cout), tap-major / Cin-minor.
    w = jnp.transpose(w, (2, 3, 1, 0)).reshape(kkc, cout)
    w = jnp.pad(w, ((0, kkc_p - kkc), (0, cout_p - cout))).astype(compute_dtype)
    bias = jnp.pad(bias, (0, cout_p - cout)).reshape(1, cout_p).astype(jnp.float32)

    # ---- layout plumbing: NCHW -> NHWC, 'same' zero pad, cast (fused copy) --
    x = jnp.transpose(x_nchw, (0, 2, 3, 1)).astype(compute_dtype)
    x = jnp.pad(x, ((0, 0), (pad, pad), (pad, pad), (0, 0)))

    # ---- VMEM-budget-aware batch blocking (v7x-safe target) -----------------
    def vmem_need(b):
        rows = b * H * W
        x_blk = b * Hp * _pad_up(Wp, _SUBLANE) * _pad_up(cin, _LANE) * cdt
        col = _pad_up(rows, _SUBLANE) * kkc_p * cdt
        wgt = _pad_up(kkc_p, _SUBLANE) * cout_p * cdt
        o_blk = _pad_up(rows, _SUBLANE) * cout_p * odt
        return 2 * x_blk + col + wgt + 2 * o_blk + _SUBLANE * cout_p * 4

    def rows_ok(b):
        return (b * H * W) % _SUBLANE == 0

    if block_b is None:
        divs = [d for d in range(N, 0, -1) if N % d == 0]
        cands = [d for d in divs
                 if d <= max(1, N // 2) and rows_ok(d)
                 and vmem_need(d) <= vmem_budget_bytes]
        even = [d for d in cands if (N // d) % 2 == 0]   # dual-TC load balance
        block_b = (even or cands or [N])[0]
    block_b = max(1, min(int(block_b), N))
    n_pad = _pad_up(N, block_b)                          # pad batch, don't assert
    if n_pad // block_b > 1 and not rows_ok(block_b):
        block_b, n_pad = N, N                            # single full-batch step
    if n_pad != N:
        x = jnp.pad(x, ((0, n_pad - N), (0, 0), (0, 0), (0, 0)))

    rows_blk = block_b * H * W
    tile_rows = rows_blk
    for t in (512, 256, 128, 64, 32, 16, 8):
        if rows_blk % t == 0:
            tile_rows = t
            break
    grid = (n_pad // block_b,)

    kernel = functools.partial(_conv_bn_relu6_kernel, ksize=K, out_h=H, out_w=W,
                               kkc=kkc, tile_rows=tile_rows)
    vmem_limit = int(min(max(vmem_need(block_b) * 1.3, 20 * 2**20), 56 * 2**20))

    def build_call(single_buffer_consts):
        def const_spec(shape):
            idx = lambda b: (0, 0)
            if single_buffer_consts:
                return pl.BlockSpec(shape, idx, pipeline_mode=pl.Buffered(1))
            return pl.BlockSpec(shape, idx)

        return pl.pallas_call(
            kernel,
            out_shape=jax.ShapeDtypeStruct((n_pad * H * W, cout_p), out_dtype),
            grid_spec=pltpu.PrefetchScalarGridSpec(
                num_scalar_prefetch=0,
                grid=grid,
                in_specs=[
                    pl.BlockSpec((block_b, Hp, Wp, cin), lambda b: (b, 0, 0, 0)),
                    const_spec((kkc_p, cout_p)),
                    const_spec((1, cout_p)),
                ],
                out_specs=pl.BlockSpec((rows_blk, cout_p), lambda b: (b, 0)),
                scratch_shapes=[pltpu.VMEM((rows_blk, kkc_p), compute_dtype)],
            ),
            compiler_params=pltpu.CompilerParams(
                dimension_semantics=("parallel",),
                vmem_limit_bytes=vmem_limit),
        )

    try:
        out = build_call(True)(x, w, bias)
    except Exception:
        # pl.Buffered(1) / pipeline_mode unsupported on this jax version:
        # fall back to default double-buffered constant operands.
        out = build_call(False)(x, w, bias)

    out = out.reshape(n_pad, H, W, cout_p)[:N, :, :, :cout]   # drop pads
    return jnp.transpose(out, (0, 3, 1, 2))                    # back to NCHW


def _reference(x_nchw, conv_w, bn_mean, bn_var, eps=1e-5):
    """Pure-JAX replica of the PyTorch eval forward for verification."""
    conv = jax.lax.conv_general_dilated(
        x_nchw, conv_w, window_strides=(1, 1), padding='SAME',
        dimension_numbers=('NCHW', 'OIHW', 'NCHW'),
        precision=jax.lax.Precision.HIGHEST)
    y = (conv - bn_mean[None, :, None, None]) * jax.lax.rsqrt(
        bn_var[None, :, None, None] + eps)
    return jnp.clip(y, 0.0, 6.0)                               # ReLU6


if __name__ == "__main__":
    # Small shapes consistent with the module: NCHW input, 3x3 'same' conv.
    N, Cin, H, W = 2, 4, 16, 16
    Cout, K = 8, 3

    key = jax.random.PRNGKey(0)
    k1, k2, k3, k4 = jax.random.split(key, 4)
    x = jax.random.normal(k1, (N, Cin, H, W), jnp.float32)
    conv_w = jax.random.normal(k2, (Cout, Cin, K, K), jnp.float32) * 0.1
    bn_mean = jax.random.normal(k3, (Cout,), jnp.float32) * 0.1
    bn_var = jax.nn.softplus(jax.random.normal(k4, (Cout,), jnp.float32)) + 0.5

    ref = jax.block_until_ready(_reference(x, conv_w, bn_mean, bn_var))

    # Structural check with f32 MXU operands (tight-ish tolerance).
    out_f32 = jax.block_until_ready(
        conv_block_2d(x, conv_w, bn_mean, bn_var, compute_dtype=jnp.float32))
    assert out_f32.shape == (N, Cout, H, W), out_f32.shape
    err_f32 = float(jnp.max(jnp.abs(out_f32 - ref)))
    assert err_f32 < 1e-2, f"f32 path max abs err {err_f32}"

    # Default fast path: bf16 MXU operands, f32 accumulate (looser tolerance).
    out_bf16 = jax.block_until_ready(conv_block_2d(x, conv_w, bn_mean, bn_var))
    assert out_bf16.shape == (N, Cout, H, W), out_bf16.shape
    err_bf16 = float(jnp.max(jnp.abs(out_bf16 - ref)))
    assert err_bf16 < 5e-2, f"bf16 path max abs err {err_bf16}"

    print("KERNEL_OK")
</pallas_src>

<mosaic_0001>
module attributes {stable_mosaic.version = 11 : i64} {
  func.func @_conv_bn_relu6_kernel(%arg0: i32, %arg1: memref<1x18x18x4xf32, #tpu.memory_space<vmem>>, %arg2: memref<128x128xf32, #tpu.memory_space<vmem>>, %arg3: memref<1x128xf32, #tpu.memory_space<vmem>>, %arg4: memref<256x128xf32, #tpu.memory_space<vmem>>, %arg5: memref<256x128xf32, #tpu.memory_space<vmem>>) attributes {dimension_semantics = [#tpu.dimension_semantics<parallel>], iteration_bounds = array<i64: 2>, scalar_prefetch = 0 : i64, scratch_operands = 1 : i64, tpu.core_type = #tpu.core_type<tc>, window_params = [{transform_indices = @transform_0, window_bounds = array<i64: 1, 18, 18, 4>}, {pipeline_mode = #tpu.pipeline_mode<synchronous>, transform_indices = @transform_1, window_bounds = array<i64: 128, 128>}, {pipeline_mode = #tpu.pipeline_mode<synchronous>, transform_indices = @transform_2, window_bounds = array<i64: 1, 128>}, {transform_indices = @transform_3, window_bounds = array<i64: 256, 128>}]} {
    %cst = arith.constant 0.000000e+00 : f32
    %0 = vector.broadcast %cst : f32 to vector<256x92xf32>
    %c0 = arith.constant 0 : index
    %c36 = arith.constant 36 : index
    %1 = vector.load %arg5[%c0, %c36] : memref<256x128xf32, #tpu.memory_space<vmem>>, vector<256x92xf32>
    tpu.vector_store %arg5[%c0, %c36], %0 {strides = array<i32>} : memref<256x128xf32, #tpu.memory_space<vmem>>, vector<256x92xf32>,
    %c0_0 = arith.constant 0 : index
    %c0_1 = arith.constant 0 : index
    %c0_2 = arith.constant 0 : index
    %c0_3 = arith.constant 0 : index
    %2 = vector.load %arg1[%c0_0, %c0_1, %c0_2, %c0_3] : memref<1x18x18x4xf32, #tpu.memory_space<vmem>>, vector<1x16x16x4xf32>
    %3 = vector.shape_cast %2 : vector<1x16x16x4xf32> to vector<256x4xf32>
    %c0_4 = arith.constant 0 : index
    %c0_5 = arith.constant 0 : index
    %4 = vector.load %arg5[%c0_4, %c0_5] : memref<256x128xf32, #tpu.memory_space<vmem>>, vector<256x4xf32>
    tpu.vector_store %arg5[%c0_4, %c0_5], %3 {strides = array<i32>} : memref<256x128xf32, #tpu.memory_space<vmem>>, vector<256x4xf32>,
    %c0_6 = arith.constant 0 : index
    %c0_7 = arith.constant 0 : index
    %c1 = arith.constant 1 : index
    %c0_8 = arith.constant 0 : index
    %5 = vector.load %arg1[%c0_6, %c0_7, %c1, %c0_8] : memref<1x18x18x4xf32, #tpu.memory_space<vmem>>, vector<1x16x16x4xf32>
    %6 = vector.shape_cast %5 : vector<1x16x16x4xf32> to vector<256x4xf32>
    %c0_9 = arith.constant 0 : index
    %c4 = arith.constant 4 : index
    %7 = vector.load %arg5[%c0_9, %c4] : memref<256x128xf32, #tpu.memory_space<vmem>>, vector<256x4xf32>
    tpu.vector_store %arg5[%c0_9, %c4], %6 {strides = array<i32>} : memref<256x128xf32, #tpu.memory_space<vmem>>, vector<256x4xf32>,
    %c0_10 = arith.constant 0 : index
    %c0_11 = arith.constant 0 : index
    %c2 = arith.constant 2 : index
    %c0_12 = arith.constant 0 : index
    %8 = vector.load %arg1[%c0_10, %c0_11, %c2, %c0_12] : memref<1x18x18x4xf32, #tpu.memory_space<vmem>>, vector<1x16x16x4xf32>
    %9 = vector.shape_cast %8 : vector<1x16x16x4xf32> to vector<256x4xf32>
    %c0_13 = arith.constant 0 : index
    %c8 = arith.constant 8 : index
    %10 = vector.load %arg5[%c0_13, %c8] : memref<256x128xf32, #tpu.memory_space<vmem>>, vector<256x4xf32>
    tpu.vector_store %arg5[%c0_13, %c8], %9 {strides = array<i32>} : memref<256x128xf32, #tpu.memory_space<vmem>>, vector<256x4xf32>,
    %c0_14 = arith.constant 0 : index
    %c1_15 = arith.constant 1 : index
    %c0_16 = arith.constant 0 : index
    %c0_17 = arith.constant 0 : index
    %11 = vector.load %arg1[%c0_14, %c1_15, %c0_16, %c0_17] : memref<1x18x18x4xf32, #tpu.memory_space<vmem>>, vector<1x16x16x4xf32>
    %12 = vector.shape_cast %11 : vector<1x16x16x4xf32> to vector<256x4xf32>
    %c0_18 = arith.constant 0 : index
    %c12 = arith.constant 12 : index
    %13 = vector.load %arg5[%c0_18, %c12] : memref<256x128xf32, #tpu.memory_space<vmem>>, vector<256x4xf32>
    tpu.vector_store %arg5[%c0_18, %c12], %12 {strides = array<i32>} : memref<256x128xf32, #tpu.memory_space<vmem>>, vector<256x4xf32>,
    %c0_19 = arith.constant 0 : index
    %c1_20 = arith.constant 1 : index
    %c1_21 = arith.constant 1 : index
    %c0_22 = arith.constant 0 : index
    %14 = vector.load %arg1[%c0_19, %c1_20, %c1_21, %c0_22] : memref<1x18x18x4xf32, #tpu.memory_space<vmem>>, vector<1x16x16x4xf32>
    %15 = vector.shape_cast %14 : vector<1x16x16x4xf32> to vector<256x4xf32>
    %c0_23 = arith.constant 0 : index
    %c16 = arith.constant 16 : index
    %16 = vector.load %arg5[%c0_23, %c16] : memref<256x128xf32, #tpu.memory_space<vmem>>, vector<256x4xf32>
    tpu.vector_store %arg5[%c0_23, %c16], %15 {strides = array<i32>} : memref<256x128xf32, #tpu.memory_space<vmem>>, vector<256x4xf32>,
    %c0_24 = arith.constant 0 : index
    %c1_25 = arith.constant 1 : index
    %c2_26 = arith.constant 2 : index
    %c0_27 = arith.constant 0 : index
    %17 = vector.load %arg1[%c0_24, %c1_25, %c2_26, %c0_27] : memref<1x18x18x4xf32, #tpu.memory_space<vmem>>, vector<1x16x16x4xf32>
    %18 = vector.shape_cast %17 : vector<1x16x16x4xf32> to vector<256x4xf32>
    %c0_28 = arith.constant 0 : index
    %c20 = arith.constant 20 : index
    %19 = vector.load %arg5[%c0_28, %c20] : memref<256x128xf32, #tpu.memory_space<vmem>>, vector<256x4xf32>
    tpu.vector_store %arg5[%c0_28, %c20], %18 {strides = array<i32>} : memref<256x128xf32, #tpu.memory_space<vmem>>, vector<256x4xf32>,
    %c0_29 = arith.constant 0 : index
    %c2_30 = arith.constant 2 : index
    %c0_31 = arith.constant 0 : index
    %c0_32 = arith.constant 0 : index
    %20 = vector.load %arg1[%c0_29, %c2_30, %c0_31, %c0_32] : memref<1x18x18x4xf32, #tpu.memory_space<vmem>>, vector<1x16x16x4xf32>
    %21 = vector.shape_cast %20 : vector<1x16x16x4xf32> to vector<256x4xf32>
    %c0_33 = arith.constant 0 : index
    %c24 = arith.constant 24 : index
    %22 = vector.load %arg5[%c0_33, %c24] : memref<256x128xf32, #tpu.memory_space<vmem>>, vector<256x4xf32>
    tpu.vector_store %arg5[%c0_33, %c24], %21 {strides = array<i32>} : memref<256x128xf32, #tpu.memory_space<vmem>>, vector<256x4xf32>,
    %c0_34 = arith.constant 0 : index
    %c2_35 = arith.constant 2 : index
    %c1_36 = arith.constant 1 : index
    %c0_37 = arith.constant 0 : index
    %23 = vector.load %arg1[%c0_34, %c2_35, %c1_36, %c0_37] : memref<1x18x18x4xf32, #tpu.memory_space<vmem>>, vector<1x16x16x4xf32>
    %24 = vector.shape_cast %23 : vector<1x16x16x4xf32> to vector<256x4xf32>
    %c0_38 = arith.constant 0 : index
    %c28 = arith.constant 28 : index
    %25 = vector.load %arg5[%c0_38, %c28] : memref<256x128xf32, #tpu.memory_space<vmem>>, vector<256x4xf32>
    tpu.vector_store %arg5[%c0_38, %c28], %24 {strides = array<i32>} : memref<256x128xf32, #tpu.memory_space<vmem>>, vector<256x4xf32>,
    %c0_39 = arith.constant 0 : index
    %c2_40 = arith.constant 2 : index
    %c2_41 = arith.constant 2 : index
    %c0_42 = arith.constant 0 : index
    %26 = vector.load %arg1[%c0_39, %c2_40, %c2_41, %c0_42] : memref<1x18x18x4xf32, #tpu.memory_space<vmem>>, vector<1x16x16x4xf32>
    %27 = vector.shape_cast %26 : vector<1x16x16x4xf32> to vector<256x4xf32>
    %c0_43 = arith.constant 0 : index
    %c32 = arith.constant 32 : index
    %28 = vector.load %arg5[%c0_43, %c32] : memref<256x128xf32, #tpu.memory_space<vmem>>, vector<256x4xf32>
    tpu.vector_store %arg5[%c0_43, %c32], %27 {strides = array<i32>} : memref<256x128xf32, #tpu.memory_space<vmem>>, vector<256x4xf32>,
    %c0_44 = arith.constant 0 : index
    %c0_45 = arith.constant 0 : index
    %29 = vector.load %arg3[%c0_44, %c0_45] : memref<1x128xf32, #tpu.memory_space<vmem>>, vector<1x128xf32>
    %c0_46 = arith.constant 0 : index
    %c0_47 = arith.constant 0 : index
    %30 = vector.load %arg5[%c0_46, %c0_47] : memref<256x128xf32, #tpu.memory_space<vmem>>, vector<256x128xf32>
    %c0_48 = arith.constant 0 : index
    %c0_49 = arith.constant 0 : index
    %31 = vector.load %arg2[%c0_48, %c0_49] : memref<128x128xf32, #tpu.memory_space<vmem>>, vector<128x128xf32>
    %cst_50 = arith.constant dense<0.000000e+00> : vector<256x128xf32>
    %32 = tpu.matmul %30, %31, %cst_50 {dimension_numbers = #tpu.dot_dimension_numbers<[1], [0], [0], [1], [0, 0, 1, 1], [], []>} : vector<256x128xf32>, vector<128x128xf32>, vector<256x128xf32> -> vector<256x128xf32>
    %33 = vector.broadcast %29 : vector<1x128xf32> to vector<256x128xf32>
    %34 = arith.addf %32, %33 : vector<256x128xf32>
    %cst_51 = arith.constant 0.000000e+00 : f32
    %35 = vector.broadcast %cst_51 : f32 to vector<256x128xf32>
    %36 = arith.maximumf %34, %35 : vector<256x128xf32>
    %cst_52 = arith.constant 6.000000e+00 : f32
    %37 = vector.broadcast %cst_52 : f32 to vector<256x128xf32>
    %38 = arith.minimumf %36, %37 : vector<256x128xf32>
    %c0_53 = arith.constant 0 : index
    %c0_54 = arith.constant 0 : index
    %39 = vector.load %arg4[%c0_53, %c0_54] : memref<256x128xf32, #tpu.memory_space<vmem>>, vector<256x128xf32>
    tpu.vector_store %arg4[%c0_53, %c0_54], %38 {strides = array<i32>} : memref<256x128xf32, #tpu.memory_space<vmem>>, vector<256x128xf32>,
    return
  }
  func.func @transform_0(%arg0: i32) -> (i32, i32, i32, i32) {
    %c0_i32 = arith.constant 0 : i32
    %c0_i32_0 = arith.constant 0 : i32
    %c0_i32_1 = arith.constant 0 : i32
    %c0_i32_2 = arith.constant 0 : i32
    return %arg0, %c0_i32, %c0_i32_0, %c0_i32_1 : i32, i32, i32, i32
  }
  func.func @transform_1(%arg0: i32) -> (i32, i32) {
    %c0_i32 = arith.constant 0 : i32
    %c0_i32_0 = arith.constant 0 : i32
    %c0_i32_1 = arith.constant 0 : i32
    return %c0_i32, %c0_i32_0 : i32, i32
  }
  func.func @transform_2(%arg0: i32) -> (i32, i32) {
    %c0_i32 = arith.constant 0 : i32
    %c0_i32_0 = arith.constant 0 : i32
    %c0_i32_1 = arith.constant 0 : i32
    return %c0_i32, %c0_i32_0 : i32, i32
  }
  func.func @transform_3(%arg0: i32) -> (i32, i32) {
    %c0_i32 = arith.constant 0 : i32
    %c0_i32_0 = arith.constant 0 : i32
    return %arg0, %c0_i32 : i32, i32
  }
}

module attributes {stable_mosaic.version = 11 : i64} {
  func.func @_conv_bn_relu6_kernel(%arg0: i32, %arg1: memref<1x18x18x4xf32, #tpu.memory_space<vmem>>, %arg2: memref<128x128xf32, #tpu.memory_space<vmem>>, %arg3: memref<1x128xf32, #tpu.memory_space<vmem>>, %arg4: memref<256x128xf32, #tpu.memory_space<vmem>>, %arg5: memref<256x128xf32, #tpu.memory_space<vmem>>) attributes {dimension_semantics = [#tpu.dimension_semantics<parallel>], iteration_bounds = array<i64: 2>, scalar_prefetch = 0 : i64, scratch_operands = 1 : i64, tpu.core_type = #tpu.core_type<tc>, window_params = [{transform_indices = @transform_0, window_bounds = array<i64: 1, 18, 18, 4>}, {pipeline_mode = #tpu.pipeline_mode<synchronous>, transform_indices = @transform_1, window_bounds = array<i64: 128, 128>}, {pipeline_mode = #tpu.pipeline_mode<synchronous>, transform_indices = @transform_2, window_bounds = array<i64: 1, 128>}, {transform_indices = @transform_3, window_bounds = array<i64: 256, 128>}]} {
    %cst = arith.constant 0.000000e+00 : f32
    %0 = vector.broadcast %cst : f32 to vector<256x92xf32>
    %c0 = arith.constant 0 : index
    %c36 = arith.constant 36 : index
    %1 = vector.load %arg5[%c0, %c36] : memref<256x128xf32, #tpu.memory_space<vmem>>, vector<256x92xf32>
    tpu.vector_store %arg5[%c0, %c36], %0 {strides = array<i32>} : memref<256x128xf32, #tpu.memory_space<vmem>>, vector<256x92xf32>,
    %c0_0 = arith.constant 0 : index
    %c0_1 = arith.constant 0 : index
    %c0_2 = arith.constant 0 : index
    %c0_3 = arith.constant 0 : index
    %2 = vector.load %arg1[%c0_0, %c0_1, %c0_2, %c0_3] : memref<1x18x18x4xf32, #tpu.memory_space<vmem>>, vector<1x16x16x4xf32>
    %3 = vector.shape_cast %2 : vector<1x16x16x4xf32> to vector<256x4xf32>
    %c0_4 = arith.constant 0 : index
    %c0_5 = arith.constant 0 : index
    %4 = vector.load %arg5[%c0_4, %c0_5] : memref<256x128xf32, #tpu.memory_space<vmem>>, vector<256x4xf32>
    tpu.vector_store %arg5[%c0_4, %c0_5], %3 {strides = array<i32>} : memref<256x128xf32, #tpu.memory_space<vmem>>, vector<256x4xf32>,
    %c0_6 = arith.constant 0 : index
    %c0_7 = arith.constant 0 : index
    %c1 = arith.constant 1 : index
    %c0_8 = arith.constant 0 : index
    %5 = vector.load %arg1[%c0_6, %c0_7, %c1, %c0_8] : memref<1x18x18x4xf32, #tpu.memory_space<vmem>>, vector<1x16x16x4xf32>
    %6 = vector.shape_cast %5 : vector<1x16x16x4xf32> to vector<256x4xf32>
    %c0_9 = arith.constant 0 : index
    %c4 = arith.constant 4 : index
    %7 = vector.load %arg5[%c0_9, %c4] : memref<256x128xf32, #tpu.memory_space<vmem>>, vector<256x4xf32>
    tpu.vector_store %arg5[%c0_9, %c4], %6 {strides = array<i32>} : memref<256x128xf32, #tpu.memory_space<vmem>>, vector<256x4xf32>,
    %c0_10 = arith.constant 0 : index
    %c0_11 = arith.constant 0 : index
    %c2 = arith.constant 2 : index
    %c0_12 = arith.constant 0 : index
    %8 = vector.load %arg1[%c0_10, %c0_11, %c2, %c0_12] : memref<1x18x18x4xf32, #tpu.memory_space<vmem>>, vector<1x16x16x4xf32>
    %9 = vector.shape_cast %8 : vector<1x16x16x4xf32> to vector<256x4xf32>
    %c0_13 = arith.constant 0 : index
    %c8 = arith.constant 8 : index
    %10 = vector.load %arg5[%c0_13, %c8] : memref<256x128xf32, #tpu.memory_space<vmem>>, vector<256x4xf32>
    tpu.vector_store %arg5[%c0_13, %c8], %9 {strides = array<i32>} : memref<256x128xf32, #tpu.memory_space<vmem>>, vector<256x4xf32>,
    %c0_14 = arith.constant 0 : index
    %c1_15 = arith.constant 1 : index
    %c0_16 = arith.constant 0 : index
    %c0_17 = arith.constant 0 : index
    %11 = vector.load %arg1[%c0_14, %c1_15, %c0_16, %c0_17] : memref<1x18x18x4xf32, #tpu.memory_space<vmem>>, vector<1x16x16x4xf32>
    %12 = vector.shape_cast %11 : vector<1x16x16x4xf32> to vector<256x4xf32>
    %c0_18 = arith.constant 0 : index
    %c12 = arith.constant 12 : index
    %13 = vector.load %arg5[%c0_18, %c12] : memref<256x128xf32, #tpu.memory_space<vmem>>, vector<256x4xf32>
    tpu.vector_store %arg5[%c0_18, %c12], %12 {strides = array<i32>} : memref<256x128xf32, #tpu.memory_space<vmem>>, vector<256x4xf32>,
    %c0_19 = arith.constant 0 : index
    %c1_20 = arith.constant 1 : index
    %c1_21 = arith.constant 1 : index
    %c0_22 = arith.constant 0 : index
    %14 = vector.load %arg1[%c0_19, %c1_20, %c1_21, %c0_22] : memref<1x18x18x4xf32, #tpu.memory_space<vmem>>, vector<1x16x16x4xf32>
    %15 = vector.shape_cast %14 : vector<1x16x16x4xf32> to vector<256x4xf32>
    %c0_23 = arith.constant 0 : index
    %c16 = arith.constant 16 : index
    %16 = vector.load %arg5[%c0_23, %c16] : memref<256x128xf32, #tpu.memory_space<vmem>>, vector<256x4xf32>
    tpu.vector_store %arg5[%c0_23, %c16], %15 {strides = array<i32>} : memref<256x128xf32, #tpu.memory_space<vmem>>, vector<256x4xf32>,
    %c0_24 = arith.constant 0 : index
    %c1_25 = arith.constant 1 : index
    %c2_26 = arith.constant 2 : index
    %c0_27 = arith.constant 0 : index
    %17 = vector.load %arg1[%c0_24, %c1_25, %c2_26, %c0_27] : memref<1x18x18x4xf32, #tpu.memory_space<vmem>>, vector<1x16x16x4xf32>
    %18 = vector.shape_cast %17 : vector<1x16x16x4xf32> to vector<256x4xf32>
    %c0_28 = arith.constant 0 : index
    %c20 = arith.constant 20 : index
    %19 = vector.load %arg5[%c0_28, %c20] : memref<256x128xf32, #tpu.memory_space<vmem>>, vector<256x4xf32>
    tpu.vector_store %arg5[%c0_28, %c20], %18 {strides = array<i32>} : memref<256x128xf32, #tpu.memory_space<vmem>>, vector<256x4xf32>,
    %c0_29 = arith.constant 0 : index
    %c2_30 = arith.constant 2 : index
    %c0_31 = arith.constant 0 : index
    %c0_32 = arith.constant 0 : index
    %20 = vector.load %arg1[%c0_29, %c2_30, %c0_31, %c0_32] : memref<1x18x18x4xf32, #tpu.memory_space<vmem>>, vector<1x16x16x4xf32>
    %21 = vector.shape_cast %20 : vector<1x16x16x4xf32> to vector<256x4xf32>
    %c0_33 = arith.constant 0 : index
    %c24 = arith.constant 24 : index
    %22 = vector.load %arg5[%c0_33, %c24] : memref<256x128xf32, #tpu.memory_space<vmem>>, vector<256x4xf32>
    tpu.vector_store %arg5[%c0_33, %c24], %21 {strides = array<i32>} : memref<256x128xf32, #tpu.memory_space<vmem>>, vector<256x4xf32>,
    %c0_34 = arith.constant 0 : index
    %c2_35 = arith.constant 2 : index
    %c1_36 = arith.constant 1 : index
    %c0_37 = arith.constant 0 : index
    %23 = vector.load %arg1[%c0_34, %c2_35, %c1_36, %c0_37] : memref<1x18x18x4xf32, #tpu.memory_space<vmem>>, vector<1x16x16x4xf32>
    %24 = vector.shape_cast %23 : vector<1x16x16x4xf32> to vector<256x4xf32>
    %c0_38 = arith.constant 0 : index
    %c28 = arith.constant 28 : index
    %25 = vector.load %arg5[%c0_38, %c28] : memref<256x128xf32, #tpu.memory_space<vmem>>, vector<256x4xf32>
    tpu.vector_store %arg5[%c0_38, %c28], %24 {strides = array<i32>} : memref<256x128xf32, #tpu.memory_space<vmem>>, vector<256x4xf32>,
    %c0_39 = arith.constant 0 : index
    %c2_40 = arith.constant 2 : index
    %c2_41 = arith.constant 2 : index
    %c0_42 = arith.constant 0 : index
    %26 = vector.load %arg1[%c0_39, %c2_40, %c2_41, %c0_42] : memref<1x18x18x4xf32, #tpu.memory_space<vmem>>, vector<1x16x16x4xf32>
    %27 = vector.shape_cast %26 : vector<1x16x16x4xf32> to vector<256x4xf32>
    %c0_43 = arith.constant 0 : index
    %c32 = arith.constant 32 : index
    %28 = vector.load %arg5[%c0_43, %c32] : memref<256x128xf32, #tpu.memory_space<vmem>>, vector<256x4xf32>
    tpu.vector_store %arg5[%c0_43, %c32], %27 {strides = array<i32>} : memref<256x128xf32, #tpu.memory_space<vmem>>, vector<256x4xf32>,
    %c0_44 = arith.constant 0 : index
    %c0_45 = arith.constant 0 : index
    %29 = vector.load %arg3[%c0_44, %c0_45] : memref<1x128xf32, #tpu.memory_space<vmem>>, vector<1x128xf32>
    %c0_46 = arith.constant 0 : index
    %c0_47 = arith.constant 0 : index
    %30 = vector.load %arg5[%c0_46, %c0_47] : memref<256x128xf32, #tpu.memory_space<vmem>>, vector<256x128xf32>
    %c0_48 = arith.constant 0 : index
    %c0_49 = arith.constant 0 : index
    %31 = vector.load %arg2[%c0_48, %c0_49] : memref<128x128xf32, #tpu.memory_space<vmem>>, vector<128x128xf32>
    %cst_50 = arith.constant dense<0.000000e+00> : vector<256x128xf32>
    %32 = tpu.matmul %30, %31, %cst_50 {dimension_numbers = #tpu.dot_dimension_numbers<[1], [0], [0], [1], [0, 0, 1, 1], [], []>} : vector<256x128xf32>, vector<128x128xf32>, vector<256x128xf32> -> vector<256x128xf32>
    %33 = vector.broadcast %29 : vector<1x128xf32> to vector<256x128xf32>
    %34 = arith.addf %32, %33 : vector<256x128xf32>
    %cst_51 = arith.constant 0.000000e+00 : f32
    %35 = vector.broadcast %cst_51 : f32 to vector<256x128xf32>
    %36 = arith.maximumf %34, %35 : vector<256x128xf32>
    %cst_52 = arith.constant 6.000000e+00 : f32
    %37 = vector.broadcast %cst_52 : f32 to vector<256x128xf32>
    %38 = arith.minimumf %36, %37 : vector<256x128xf32>
    %c0_53 = arith.constant 0 : index
    %c0_54 = arith.constant 0 : index
    %39 = vector.load %arg4[%c0_53, %c0_54] : memref<256x128xf32, #tpu.memory_space<vmem>>, vector<256x128xf32>
    tpu.vector_store %arg4[%c0_53, %c0_54], %38 {strides = array<i32>} : memref<256x128xf32, #tpu.memory_space<vmem>>, vector<256x128xf32>,
    return
  }
  func.func @transform_0(%arg0: i32) -> (i32, i32, i32, i32) {
    %c0_i32 = arith.constant 0 : i32
    %c0_i32_0 = arith.constant 0 : i32
    %c0_i32_1 = arith.constant 0 : i32
    %c0_i32_2 = arith.constant 0 : i32
    return %arg0, %c0_i32, %c0_i32_0, %c0_i32_1 : i32, i32, i32, i32
  }
  func.func @transform_1(%arg0: i32) -> (i32, i32) {
    %c0_i32 = arith.constant 0 : i32
    %c0_i32_0 = arith.constant 0 : i32
    %c0_i32_1 = arith.constant 0 : i32
    return %c0_i32, %c0_i32_0 : i32, i32
  }
  func.func @transform_2(%arg0: i32) -> (i32, i32) {
    %c0_i32 = arith.constant 0 : i32
    %c0_i32_0 = arith.constant 0 : i32
    %c0_i32_1 = arith.constant 0 : i32
    return %c0_i32, %c0_i32_0 : i32, i32
  }
  func.func @transform_3(%arg0: i32) -> (i32, i32) {
    %c0_i32 = arith.constant 0 : i32
    %c0_i32_0 = arith.constant 0 : i32
    return %arg0, %c0_i32 : i32, i32
  }
}

</mosaic_0001>

<llo_original>
// kernel: tpu_custom_call.1
$region0: #{tpu_custom_call.1}
  #allocation0 [shape = 'u32[]', space=smem, size = 0x4, offset = 0x4, fixed_abs, tag = 'smem constant byte address 0x4 - core index']
  #allocation1 [shape = 'u32[144,128]{1,0:T(1,128)}', space=vmem, size = 0x12000, scoped, tag = 'internal scratch']
  #allocation2 [shape = 'f32[256,128]{1,0:T(8,128)}', space=vmem, size = 0x20000, scoped, tag = 'scratch operand']
  %s0 = inlined_call_operand.vmem [shape: f32[2,18,18,4], index: 0, kind: input, shape index: {}]
  %s1 = inlined_call_operand.vmem [shape: f32[128,128], index: 1, kind: input, shape index: {}]
  %s2 = inlined_call_operand.vmem [shape: f32[1,128], index: 2, kind: input, shape index: {}]
  %s3 = inlined_call_operand.hbm [shape: f32[512,128], index: 3, kind: output, shape index: {}]
  %s4 = sld [smem:[#allocation0]]
  $region45: #{tpu_custom_call.1} parent=0
    _
  %s6 = ssub.s32 1, %s4
  %s7 = scalar_select 0, %s6, %s4
  $region1: #{tpu_custom_call.1} parent=0
    #allocation3 [shape = 'u8[262144]{0}', space=vmem, size = 0x40000, scoped, tag = 'output window, operand 0']
    #allocation4 [shape = 's32[2]{0}', space=sflag, size = 0x8, scoped, tag = 'scoped memory for tpu_custom_call.1']
    %8 = vsyncpa [#allocation4], 0
    %s9 = scalar_lea.sflag [#allocation4], 1
    %10 = vsyncpa %s9, 0
    loop: start=0, step=1, limit=4
    $region2: #{tpu_custom_call.1} parent=1 // loop_pre_header
      _
    $region3: #{tpu_custom_call.1} parent=1 // loop_header
      %s12 = sphi 0, %s16
      %p13 = scmp.ge.s32.totalorder %s12, 4
      %s22 = sphi 0, %s24
      %s25 = sphi 0, %s22
      %s26 = sphi 0, %s25
      %s42 = sphi 0, %s26
      %s46 = sphi 0, %s46
      %s48 = sphi 0, %s46
      %s49 = sphi 0, %s48
      %s63 = sphi 0, %s49
      %s67 = sphi 0, %s67
      %s69 = sphi 0, %s67
      %s70 = sphi 0, %s69
      %s84 = sphi 0, %s70
      %s90 = sphi 0, %s92
      %s93 = sphi 0, %s90
      %s94 = sphi 0, %s93
      %s110 = sphi 0, %s94
    $region4: #{tpu_custom_call.1} parent=1 // loop_header_branch
      %15 = sbr.rel (%p13) target = $region8
    $region5: #{tpu_custom_call.1} parent=1 // loop_body
      %s17 = ssub.s32 %s12, 1
      %s18 = ssub.s32 %s12, 2
      %s19 = sadd.s32 %s12, 1
      %s20 = ssub.s32 %s12, %s19
      %p21 = scmp.eq.s32.totalorder %s20, 0
      %s23 = sadd.s32 %s22, 1
      %s24 = scalar_select %p21, %s22, %s23
      %p27 = pneg %p21
      %p28 = scmp.eq.s32.totalorder %s12, 1
      %p29 = por %p27, %p28
      %p30 = scmp.ne.s32.totalorder %s22, %s25
      %p31 = scmp.eq.s32.totalorder %s12, 0
      %p32 = por %p30, %p31
      %p33 = scmp.ne.s32.totalorder %s22, %s25
      %p34 = scmp.eq.s32.totalorder %s17, 1
      %p35 = por %p33, %p34
      %p36 = scmp.ne.s32.totalorder %s25, %s26
      %p37 = scmp.eq.s32.totalorder %s17, 0
      %p38 = por %p36, %p37
      %p39 = scmp.ne.s32.totalorder %s25, %s26
      %p40 = scmp.eq.s32.totalorder %s18, 1
      %p41 = por %p39, %p40
      %p43 = scmp.ne.s32.totalorder %s26, %s42
      %p44 = scmp.eq.s32.totalorder %s18, 0
      %p45 = por %p43, %p44
      %s47 = sadd.s32 %s46, 1
      %p50 = scmp.eq.s32.totalorder %s12, 1
      %p51 = scmp.ne.s32.totalorder %s46, %s48
      %p52 = scmp.eq.s32.totalorder %s12, 0
      %p53 = por %p51, %p52
      %p54 = scmp.ne.s32.totalorder %s46, %s48
      %p55 = scmp.eq.s32.totalorder %s17, 1
      %p56 = por %p54, %p55
      %p57 = scmp.ne.s32.totalorder %s48, %s49
      %p58 = scmp.eq.s32.totalorder %s17, 0
      %p59 = por %p57, %p58
      %p60 = scmp.ne.s32.totalorder %s48, %s49
      %p61 = scmp.eq.s32.totalorder %s18, 1
      %p62 = por %p60, %p61
      %p64 = scmp.ne.s32.totalorder %s49, %s63
      %p65 = scmp.eq.s32.totalorder %s18, 0
      %p66 = por %p64, %p65
      %s68 = sadd.s32 %s67, 1
      %p71 = scmp.eq.s32.totalorder %s12, 1
      %p72 = scmp.ne.s32.totalorder %s67, %s69
      %p73 = scmp.eq.s32.totalorder %s12, 0
      %p74 = por %p72, %p73
      %p75 = scmp.ne.s32.totalorder %s67, %s69
      %p76 = scmp.eq.s32.totalorder %s17, 1
      %p77 = por %p75, %p76
      %p78 = scmp.ne.s32.totalorder %s69, %s70
      %p79 = scmp.eq.s32.totalorder %s17, 0
      %p80 = por %p78, %p79
      %p81 = scmp.ne.s32.totalorder %s69, %s70
      %p82 = scmp.eq.s32.totalorder %s18, 1
      %p83 = por %p81, %p82
      %p85 = scmp.ne.s32.totalorder %s70, %s84
      %p86 = scmp.eq.s32.totalorder %s18, 0
      %p87 = por %p85, %p86
      %s88 = ssub.s32 %s12, %s19
      %p89 = scmp.eq.s32.totalorder %s88, 0
      %s91 = sadd.s32 %s90, 1
      %s92 = scalar_select %p89, %s90, %s91
      %p95 = pneg %p89
      %p96 = scmp.eq.s32.totalorder %s12, 1
      %p97 = por %p95, %p96
      %p98 = scmp.ne.s32.totalorder %s90, %s93
      %p99 = scmp.eq.s32.totalorder %s12, 0
      %p100 = por %p98, %p99
      %p101 = scmp.ne.s32.totalorder %s90, %s93
      %p102 = scmp.eq.s32.totalorder %s17, 1
      %p103 = por %p101, %p102
      %p104 = scmp.ne.s32.totalorder %s93, %s94
      %p105 = scmp.eq.s32.totalorder %s17, 0
      %p106 = por %p104, %p105
      %p107 = scmp.ne.s32.totalorder %s93, %s94
      %p108 = scmp.eq.s32.totalorder %s18, 1
      %p109 = por %p107, %p108
      %p111 = scmp.ne.s32.totalorder %s94, %s110
      %p112 = scmp.eq.s32.totalorder %s18, 0
      %p113 = por %p111, %p112
      %p114 = scmp.le.s32.totalorder 1, %s12
      %p115 = scmp.lt.s32.totalorder %s12, 3
      %p116 = pnand %p114, %p115
      %p117 = pneg %p116
      // Predicated region
      $region9: #{tpu_custom_call.1} parent=5 // pred_check
        _
      $region10: #{tpu_custom_call.1} parent=5 // pred_check_branch
        %119 = sbr.rel (%p116) target = $region12
      $region11: #{tpu_custom_call.1} parent=5 // pred_region
        %s120 = ssub.s32 %s12, 1
        // Predicated region
        $region13: #{tpu_custom_call.1} parent=11 // pred_check
          %p121 = pneg %p59
        $region14: #{tpu_custom_call.1} parent=11 // pred_check_branch
          %123 = sbr.rel (%p121) target = $region16
        $region15: #{tpu_custom_call.1} parent=11 // pred_region
          _
        $region16: #{tpu_custom_call.1} parent=11 // pred_fallthru
          _
        // Predicated region
        $region17: #{tpu_custom_call.1} parent=11 // pred_check
          %p124 = pneg %p80
        $region18: #{tpu_custom_call.1} parent=11 // pred_check_branch
          %126 = sbr.rel (%p124) target = $region20
        $region19: #{tpu_custom_call.1} parent=11 // pred_region
          _
        $region20: #{tpu_custom_call.1} parent=11 // pred_fallthru
          _
      $region12: #{tpu_custom_call.1} parent=5 // pred_fallthru
        _
      %p127 = scmp.lt.s32.totalorder %s12, 2
      // Predicated region
      $region21: #{tpu_custom_call.1} parent=5 // pred_check
        %p128 = pneg %p127
      $region22: #{tpu_custom_call.1} parent=5 // pred_check_branch
        %130 = sbr.rel (%p128) target = $region24
      $region23: #{tpu_custom_call.1} parent=5 // pred_region
        // Predicated region
        $region25: #{tpu_custom_call.1} parent=23 // pred_check
          %p131 = pneg %p32
        $region26: #{tpu_custom_call.1} parent=23 // pred_check_branch
          %133 = sbr.rel (%p131) target = $region28
        $region27: #{tpu_custom_call.1} parent=23 // pred_region
          %p134 = scmp.lt.s32.totalorder %s12, 1
          %s135 = scalar_select %p134, %s12, 1
          %s136 = smul.addr %s135, 54
          %s137 = smul.addr %s136, 8
          %s138 = scalar_lea.vmem %s0, %s137
        $region28: #{tpu_custom_call.1} parent=23 // pred_fallthru
          _
      $region24: #{tpu_custom_call.1} parent=5 // pred_fallthru
        _
      %p139 = scmp.le.s32.totalorder 1, %s12
      %p140 = scmp.lt.s32.totalorder %s12, 3
      %p141 = pnand %p139, %p140
      %p142 = pneg %p141
      // Predicated region
      $region29: #{tpu_custom_call.1} parent=5 // pred_check
        _
      $region30: #{tpu_custom_call.1} parent=5 // pred_check_branch
        %144 = sbr.rel (%p141) target = $region32
      $region31: #{tpu_custom_call.1} parent=5 // pred_region
        %s145 = ssub.s32 %s12, 1
        %p146 = scmp.lt.s32.totalorder %s17, 1
        %s147 = scalar_select %p146, %s17, 1
        %s148 = smul.addr %s147, 54
        %s149 = smul.addr %s148, 8
        %s150 = scalar_lea.vmem %s0, %s149
        %p151 = pneg %p38
        %p152 = pneg %p35
        %p153 = pneg %p59
        %p154 = pneg %p56
        %p155 = pneg %p80
        %p156 = pneg %p77
        %p157 = pneg %p106
        %p158 = pneg %p103
        %s159 = sand.u32 %s93, 1
        %s160 = scalar_lea.sflag [#allocation4], %s159
        %s161 = sand.u32 %s93, 1
        %s162 = smul.addr %s161, 256
        %s163 = scalar_lea.vmem [#allocation3], %s162
        %p164 = scmp.lt.s32.totalorder %s17, 1
        %s165 = scalar_select %p164, %s17, 1
        %s166 = smul.addr %s165, 54
        %s167 = smul.addr %s166, 8
        %s168 = scalar_lea.vmem %s0, %s167
        %s169 = smul.u32 32, %s17
        %vm170 = vcmask 1047840
        %171 = vst.msk [vmem:[#allocation2] sm:$0xff] %vm170, 0.0
        %172 = vst.msk [vmem:[#allocation2 + $0x8] sm:$0xff] %vm170, 0.0
        %173 = vst.msk [vmem:[#allocation2 + $0x10] sm:$0xff] %vm170, 0.0
        %174 = vst.msk [vmem:[#allocation2 + $0x18] sm:$0xff] %vm170, 0.0
        %175 = vst.msk [vmem:[#allocation2 + $0x20] sm:$0xff] %vm170, 0.0
        %176 = vst.msk [vmem:[#allocation2 + $0x28] sm:$0xff] %vm170, 0.0
        %177 = vst.msk [vmem:[#allocation2 + $0x30] sm:$0xff] %vm170, 0.0
        %178 = vst.msk [vmem:[#allocation2 + $0x38] sm:$0xff] %vm170, 0.0
        %179 = vst.msk [vmem:[#allocation2 + $0x40] sm:$0xff] %vm170, 0.0
        %180 = vst.msk [vmem:[#allocation2 + $0x48] sm:$0xff] %vm170, 0.0
        %181 = vst.msk [vmem:[#allocation2 + $0x50] sm:$0xff] %vm170, 0.0
        %182 = vst.msk [vmem:[#allocation2 + $0x58] sm:$0xff] %vm170, 0.0
        %183 = vst.msk [vmem:[#allocation2 + $0x60] sm:$0xff] %vm170, 0.0
        %184 = vst.msk [vmem:[#allocation2 + $0x68] sm:$0xff] %vm170, 0.0
        %185 = vst.msk [vmem:[#allocation2 + $0x70] sm:$0xff] %vm170, 0.0
        %186 = vst.msk [vmem:[#allocation2 + $0x78] sm:$0xff] %vm170, 0.0
        %187 = vst.msk [vmem:[#allocation2 + $0x80] sm:$0xff] %vm170, 0.0
        %188 = vst.msk [vmem:[#allocation2 + $0x88] sm:$0xff] %vm170, 0.0
        %189 = vst.msk [vmem:[#allocation2 + $0x90] sm:$0xff] %vm170, 0.0
        %190 = vst.msk [vmem:[#allocation2 + $0x98] sm:$0xff] %vm170, 0.0
        %191 = vst.msk [vmem:[#allocation2 + $0xa0] sm:$0xff] %vm170, 0.0
        %192 = vst.msk [vmem:[#allocation2 + $0xa8] sm:$0xff] %vm170, 0.0
        %193 = vst.msk [vmem:[#allocation2 + $0xb0] sm:$0xff] %vm170, 0.0
        %194 = vst.msk [vmem:[#allocation2 + $0xb8] sm:$0xff] %vm170, 0.0
        %195 = vst.msk [vmem:[#allocation2 + $0xc0] sm:$0xff] %vm170, 0.0
        %196 = vst.msk [vmem:[#allocation2 + $0xc8] sm:$0xff] %vm170, 0.0
        %197 = vst.msk [vmem:[#allocation2 + $0xd0] sm:$0xff] %vm170, 0.0
        %198 = vst.msk [vmem:[#allocation2 + $0xd8] sm:$0xff] %vm170, 0.0
        %199 = vst.msk [vmem:[#allocation2 + $0xe0] sm:$0xff] %vm170, 0.0
        %200 = vst.msk [vmem:[#allocation2 + $0xe8] sm:$0xff] %vm170, 0.0
        %201 = vst.msk [vmem:[#allocation2 + $0xf0] sm:$0xff] %vm170, 0.0
        %202 = vst.msk [vmem:[#allocation2 + $0xf8] sm:$0xff] %vm170, 0.0
        %v203 = vld [vmem:[%s168] sm:$0xff]
        %v204 = vld [vmem:[%s168 + $0x8] sm:$0xff]
        %v205 = vld [vmem:[%s168 + $0x18] sm:$0xff]
        %v206 = vld [vmem:[%s168 + $0x20] sm:$0xff]
        %v207 = vld [vmem:[%s168 + $0x30] sm:$0xff]
        %v208 = vld [vmem:[%s168 + $0x38] sm:$0xff]
        %v209 = vld [vmem:[%s168 + $0x48] sm:$0xff]
        %v210 = vld [vmem:[%s168 + $0x50] sm:$0xff]
        %v211 = vld [vmem:[%s168 + $0x60] sm:$0xff]
        %v212 = vld [vmem:[%s168 + $0x68] sm:$0xff]
        %v213 = vld [vmem:[%s168 + $0x78] sm:$0xff]
        %v214 = vld [vmem:[%s168 + $0x80] sm:$0xff]
        %v215 = vld [vmem:[%s168 + $0x90] sm:$0xff]
        %v216 = vld [vmem:[%s168 + $0x98] sm:$0xff]
        %v217 = vld [vmem:[%s168 + $0xa8] sm:$0xff]
        %v218 = vld [vmem:[%s168 + $0xb0] sm:$0xff]
        %v219 = vld [vmem:[%s168 + $0xc0] sm:$0xff]
        %v220 = vld [vmem:[%s168 + $0xc8] sm:$0xff]
        %v221 = vld [vmem:[%s168 + $0xd8] sm:$0xff]
        %v222 = vld [vmem:[%s168 + $0xe0] sm:$0xff]
        %v223 = vld [vmem:[%s168 + $0xf0] sm:$0xff]
        %v224 = vld [vmem:[%s168 + $0xf8] sm:$0xff]
        %v225 = vld [vmem:[%s168 + $0x108] sm:$0xff]
        %v226 = vld [vmem:[%s168 + $0x110] sm:$0xff]
        %v227 = vld [vmem:[%s168 + $0x120] sm:$0xff]
        %v228 = vld [vmem:[%s168 + $0x128] sm:$0xff]
        %v229 = vld [vmem:[%s168 + $0x138] sm:$0xff]
        %v230 = vld [vmem:[%s168 + $0x140] sm:$0xff]
        %v231 = vld [vmem:[%s168 + $0x150] sm:$0xff]
        %v232 = vld [vmem:[%s168 + $0x158] sm:$0xff]
        %v233 = vld [vmem:[%s168 + $0x168] sm:$0xff]
        %v234 = vld [vmem:[%s168 + $0x170] sm:$0xff]
        %vm235 = vcmask 31744
        %236 = vst.msk [vmem:[#allocation2] sm:$0xff] %vm235, %v203
        %237 = vst.msk [vmem:[#allocation2 + $0x8] sm:$0xff] %vm235, %v204
        %238 = vst.msk [vmem:[#allocation2 + $0x10] sm:$0xff] %vm235, %v205
        %239 = vst.msk [vmem:[#allocation2 + $0x18] sm:$0xff] %vm235, %v206
        %240 = vst.msk [vmem:[#allocation2 + $0x20] sm:$0xff] %vm235, %v207
        %241 = vst.msk [vmem:[#allocation2 + $0x28] sm:$0xff] %vm235, %v208
        %242 = vst.msk [vmem:[#allocation2 + $0x30] sm:$0xff] %vm235, %v209
        %243 = vst.msk [vmem:[#allocation2 + $0x38] sm:$0xff] %vm235, %v210
        %244 = vst.msk [vmem:[#allocation2 + $0x40] sm:$0xff] %vm235, %v211
        %245 = vst.msk [vmem:[#allocation2 + $0x48] sm:$0xff] %vm235, %v212
        %246 = vst.msk [vmem:[#allocation2 + $0x50] sm:$0xff] %vm235, %v213
        %247 = vst.msk [vmem:[#allocation2 + $0x58] sm:$0xff] %vm235, %v214
        %248 = vst.msk [vmem:[#allocation2 + $0x60] sm:$0xff] %vm235, %v215
        %249 = vst.msk [vmem:[#allocation2 + $0x68] sm:$0xff] %vm235, %v216
        %250 = vst.msk [vmem:[#allocation2 + $0x70] sm:$0xff] %vm235, %v217
        %251 = vst.msk [vmem:[#allocation2 + $0x78] sm:$0xff] %vm235, %v218
        %252 = vst.msk [vmem:[#allocation2 + $0x80] sm:$0xff] %vm235, %v219
        %253 = vst.msk [vmem:[#allocation2 + $0x88] sm:$0xff] %vm235, %v220
        %254 = vst.msk [vmem:[#allocation2 + $0x90] sm:$0xff] %vm235, %v221
        %255 = vst.msk [vmem:[#allocation2 + $0x98] sm:$0xff] %vm235, %v222
        %256 = vst.msk [vmem:[#allocation2 + $0xa0] sm:$0xff] %vm235, %v223
        %257 = vst.msk [vmem:[#allocation2 + $0xa8] sm:$0xff] %vm235, %v224
        %258 = vst.msk [vmem:[#allocation2 + $0xb0] sm:$0xff] %vm235, %v225
        %259 = vst.msk [vmem:[#allocation2 + $0xb8] sm:$0xff] %vm235, %v226
        %260 = vst.msk [vmem:[#allocation2 + $0xc0] sm:$0xff] %vm235, %v227
        %261 = vst.msk [vmem:[#allocation2 + $0xc8] sm:$0xff] %vm235, %v228
        %262 = vst.msk [vmem:[#allocation2 + $0xd0] sm:$0xff] %vm235, %v229
        %263 = vst.msk [vmem:[#allocation2 + $0xd8] sm:$0xff] %vm235, %v230
        %264 = vst.msk [vmem:[#allocation2 + $0xe0] sm:$0xff] %vm235, %v231
        %265 = vst.msk [vmem:[#allocation2 + $0xe8] sm:$0xff] %vm235, %v232
        %266 = vst.msk [vmem:[#allocation2 + $0xf0] sm:$0xff] %vm235, %v233
        %267 = vst.msk [vmem:[#allocation2 + $0xf8] sm:$0xff] %vm235, %v234
        %v268 = vld [vmem:[%s168 + $0x1] sm:$0xff]
        %v269 = vld [vmem:[%s168 + $0x9] sm:$0xff]
        %v270 = vld [vmem:[%s168 + $0x19] sm:$0xff]
        %v271 = vld [vmem:[%s168 + $0x21] sm:$0xff]
        %v272 = vld [vmem:[%s168 + $0x31] sm:$0xff]
        %v273 = vld [vmem:[%s168 + $0x39] sm:$0xff]
        %v274 = vld [vmem:[%s168 + $0x49] sm:$0xff]
        %v275 = vld [vmem:[%s168 + $0x51] sm:$0xff]
        %v276 = vld [vmem:[%s168 + $0x61] sm:$0xff]
        %v277 = vld [vmem:[%s168 + $0x69] sm:$0xff]
        %v278 = vld [vmem:[%s168 + $0x79] sm:$0xff]
        %v279 = vld [vmem:[%s168 + $0x81] sm:$0xff]
        %v280 = vld [vmem:[%s168 + $0x91] sm:$0xff]
        %v281 = vld [vmem:[%s168 + $0x99] sm:$0xff]
        %v282 = vld [vmem:[%s168 + $0xa9] sm:$0xff]
        %v283 = vld [vmem:[%s168 + $0xb1] sm:$0xff]
        %v284 = vld [vmem:[%s168 + $0xc1] sm:$0xff]
        %v285 = vld [vmem:[%s168 + $0xc9] sm:$0xff]
        %v286 = vld [vmem:[%s168 + $0xd9] sm:$0xff]
        %v287 = vld [vmem:[%s168 + $0xe1] sm:$0xff]
        %v288 = vld [vmem:[%s168 + $0xf1] sm:$0xff]
        %v289 = vld [vmem:[%s168 + $0xf9] sm:$0xff]
        %v290 = vld [vmem:[%s168 + $0x109] sm:$0xff]
        %v291 = vld [vmem:[%s168 + $0x111] sm:$0xff]
        %v292 = vld [vmem:[%s168 + $0x121] sm:$0xff]
        %v293 = vld [vmem:[%s168 + $0x129] sm:$0xff]
        %v294 = vld [vmem:[%s168 + $0x139] sm:$0xff]
        %v295 = vld [vmem:[%s168 + $0x141] sm:$0xff]
        %v296 = vld [vmem:[%s168 + $0x151] sm:$0xff]
        %v297 = vld [vmem:[%s168 + $0x159] sm:$0xff]
        %v298 = vld [vmem:[%s168 + $0x169] sm:$0xff]
        %v299 = vld [vmem:[%s168 + $0x171] sm:$0xff]
        %332 = vrot.lane.b32.xlu0 %v268, 4
        %v333 = vpop.permute.xlu0 %332
        %334 = vrot.lane.b32.xlu0 %v269, 4
        %v335 = vpop.permute.xlu0 %334
        %336 = vrot.lane.b32.xlu0 %v270, 4
        %v337 = vpop.permute.xlu0 %336
        %338 = vrot.lane.b32.xlu0 %v271, 4
        %v339 = vpop.permute.xlu0 %338
        %340 = vrot.lane.b32.xlu0 %v272, 4
        %v341 = vpop.permute.xlu0 %340
        %342 = vrot.lane.b32.xlu0 %v273, 4
        %v343 = vpop.permute.xlu0 %342
        %344 = vrot.lane.b32.xlu0 %v274, 4
        %v345 = vpop.permute.xlu0 %344
        %346 = vrot.lane.b32.xlu0 %v275, 4
        %v347 = vpop.permute.xlu0 %346
        %348 = vrot.lane.b32.xlu0 %v276, 4
        %v349 = vpop.permute.xlu0 %348
        %350 = vrot.lane.b32.xlu0 %v277, 4
        %v351 = vpop.permute.xlu0 %350
        %352 = vrot.lane.b32.xlu0 %v278, 4
        %v353 = vpop.permute.xlu0 %352
        %354 = vrot.lane.b32.xlu0 %v279, 4
        %v355 = vpop.permute.xlu0 %354
        %356 = vrot.lane.b32.xlu0 %v280, 4
        %v357 = vpop.permute.xlu0 %356
        %358 = vrot.lane.b32.xlu0 %v281, 4
        %v359 = vpop.permute.xlu0 %358
        %360 = vrot.lane.b32.xlu0 %v282, 4
        %v361 = vpop.permute.xlu0 %360
        %362 = vrot.lane.b32.xlu0 %v283, 4
        %v363 = vpop.permute.xlu0 %362
        %364 = vrot.lane.b32.xlu0 %v284, 4
        %v365 = vpop.permute.xlu0 %364
        %366 = vrot.lane.b32.xlu0 %v285, 4
        %v367 = vpop.permute.xlu0 %366
        %368 = vrot.lane.b32.xlu0 %v286, 4
        %v369 = vpop.permute.xlu0 %368
        %370 = vrot.lane.b32.xlu0 %v287, 4
        %v371 = vpop.permute.xlu0 %370
        %372 = vrot.lane.b32.xlu0 %v288, 4
        %v373 = vpop.permute.xlu0 %372
        %374 = vrot.lane.b32.xlu0 %v289, 4
        %v375 = vpop.permute.xlu0 %374
        %376 = vrot.lane.b32.xlu0 %v290, 4
        %v377 = vpop.permute.xlu0 %376
        %378 = vrot.lane.b32.xlu0 %v291, 4
        %v379 = vpop.permute.xlu0 %378
        %380 = vrot.lane.b32.xlu0 %v292, 4
        %v381 = vpop.permute.xlu0 %380
        %382 = vrot.lane.b32.xlu0 %v293, 4
        %v383 = vpop.permute.xlu0 %382
        %384 = vrot.lane.b32.xlu0 %v294, 4
        %v385 = vpop.permute.xlu0 %384
        %386 = vrot.lane.b32.xlu0 %v295, 4
        %v387 = vpop.permute.xlu0 %386
        %388 = vrot.lane.b32.xlu0 %v296, 4
        %v389 = vpop.permute.xlu0 %388
        %390 = vrot.lane.b32.xlu0 %v297, 4
        %v391 = vpop.permute.xlu0 %390
        %392 = vrot.lane.b32.xlu0 %v298, 4
        %v393 = vpop.permute.xlu0 %392
        %394 = vrot.lane.b32.xlu0 %v299, 4
        %v395 = vpop.permute.xlu0 %394
        %vm428 = vcmask 64544
        %429 = vst.msk [vmem:[#allocation2] sm:$0xff] %vm428, %v333
        %430 = vst.msk [vmem:[#allocation2 + $0x8] sm:$0xff] %vm428, %v335
        %431 = vst.msk [vmem:[#allocation2 + $0x10] sm:$0xff] %vm428, %v337
        %432 = vst.msk [vmem:[#allocation2 + $0x18] sm:$0xff] %vm428, %v339
        %433 = vst.msk [vmem:[#allocation2 + $0x20] sm:$0xff] %vm428, %v341
        %434 = vst.msk [vmem:[#allocation2 + $0x28] sm:$0xff] %vm428, %v343
        %435 = vst.msk [vmem:[#allocation2 + $0x30] sm:$0xff] %vm428, %v345
        %436 = vst.msk [vmem:[#allocation2 + $0x38] sm:$0xff] %vm428, %v347
        %437 = vst.msk [vmem:[#allocation2 + $0x40] sm:$0xff] %vm428, %v349
        %438 = vst.msk [vmem:[#allocation2 + $0x48] sm:$0xff] %vm428, %v351
        %439 = vst.msk [vmem:[#allocation2 + $0x50] sm:$0xff] %vm428, %v353
        %440 = vst.msk [vmem:[#allocation2 + $0x58] sm:$0xff] %vm428, %v355
        %441 = vst.msk [vmem:[#allocation2 + $0x60] sm:$0xff] %vm428, %v357
        %442 = vst.msk [vmem:[#allocation2 + $0x68] sm:$0xff] %vm428, %v359
        %443 = vst.msk [vmem:[#allocation2 + $0x70] sm:$0xff] %vm428, %v361
        %444 = vst.msk [vmem:[#allocation2 + $0x78] sm:$0xff] %vm428, %v363
        %445 = vst.msk [vmem:[#allocation2 + $0x80] sm:$0xff] %vm428, %v365
        %446 = vst.msk [vmem:[#allocation2 + $0x88] sm:$0xff] %vm428, %v367
        %447 = vst.msk [vmem:[#allocation2 + $0x90] sm:$0xff] %vm428, %v369
        %448 = vst.msk [vmem:[#allocation2 + $0x98] sm:$0xff] %vm428, %v371
        %449 = vst.msk [vmem:[#allocation2 + $0xa0] sm:$0xff] %vm428, %v373
        %450 = vst.msk [vmem:[#allocation2 + $0xa8] sm:$0xff] %vm428, %v375
        %451 = vst.msk [vmem:[#allocation2 + $0xb0] sm:$0xff] %vm428, %v377
        %452 = vst.msk [vmem:[#allocation2 + $0xb8] sm:$0xff] %vm428, %v379
        %453 = vst.msk [vmem:[#allocation2 + $0xc0] sm:$0xff] %vm428, %v381
        %454 = vst.msk [vmem:[#allocation2 + $0xc8] sm:$0xff] %vm428, %v383
        %455 = vst.msk [vmem:[#allocation2 + $0xd0] sm:$0xff] %vm428, %v385
        %456 = vst.msk [vmem:[#allocation2 + $0xd8] sm:$0xff] %vm428, %v387
        %457 = vst.msk [vmem:[#allocation2 + $0xe0] sm:$0xff] %vm428, %v389
        %458 = vst.msk [vmem:[#allocation2 + $0xe8] sm:$0xff] %vm428, %v391
        %459 = vst.msk [vmem:[#allocation2 + $0xf0] sm:$0xff] %vm428, %v393
        %460 = vst.msk [vmem:[#allocation2 + $0xf8] sm:$0xff] %vm428, %v395
        %v461 = vld [vmem:[%s168 + $0x2] sm:$0xff]
        %v462 = vld [vmem:[%s168 + $0xa] sm:$0xff]
        %v463 = vld [vmem:[%s168 + $0x1a] sm:$0xff]
        %v464 = vld [vmem:[%s168 + $0x22] sm:$0xff]
        %v465 = vld [vmem:[%s168 + $0x32] sm:$0xff]
        %v466 = vld [vmem:[%s168 + $0x3a] sm:$0xff]
        %v467 = vld [vmem:[%s168 + $0x4a] sm:$0xff]
        %v468 = vld [vmem:[%s168 + $0x52] sm:$0xff]
        %v469 = vld [vmem:[%s168 + $0x62] sm:$0xff]
        %v470 = vld [vmem:[%s168 + $0x6a] sm:$0xff]
        %v471 = vld [vmem:[%s168 + $0x7a] sm:$0xff]
        %v472 = vld [vmem:[%s168 + $0x82] sm:$0xff]
        %v473 = vld [vmem:[%s168 + $0x92] sm:$0xff]
        %v474 = vld [vmem:[%s168 + $0x9a] sm:$0xff]
        %v475 = vld [vmem:[%s168 + $0xaa] sm:$0xff]
        %v476 = vld [vmem:[%s168 + $0xb2] sm:$0xff]
        %v477 = vld [vmem:[%s168 + $0xc2] sm:$0xff]
        %v478 = vld [vmem:[%s168 + $0xca] sm:$0xff]
        %v479 = vld [vmem:[%s168 + $0xda] sm:$0xff]
        %v480 = vld [vmem:[%s168 + $0xe2] sm:$0xff]
        %v481 = vld [vmem:[%s168 + $0xf2] sm:$0xff]
        %v482 = vld [vmem:[%s168 + $0xfa] sm:$0xff]
        %v483 = vld [vmem:[%s168 + $0x10a] sm:$0xff]
        %v484 = vld [vmem:[%s168 + $0x112] sm:$0xff]
        %v485 = vld [vmem:[%s168 + $0x122] sm:$0xff]
        %v486 = vld [vmem:[%s168 + $0x12a] sm:$0xff]
        %v487 = vld [vmem:[%s168 + $0x13a] sm:$0xff]
        %v488 = vld [vmem:[%s168 + $0x142] sm:$0xff]
        %v489 = vld [vmem:[%s168 + $0x152] sm:$0xff]
        %v490 = vld [vmem:[%s168 + $0x15a] sm:$0xff]
        %v491 = vld [vmem:[%s168 + $0x16a] sm:$0xff]
        %v492 = vld [vmem:[%s168 + $0x172] sm:$0xff]
        %525 = vrot.lane.b32.xlu0 %v461, 8
        %v526 = vpop.permute.xlu0 %525
        %527 = vrot.lane.b32.xlu0 %v462, 8
        %v528 = vpop.permute.xlu0 %527
        %529 = vrot.lane.b32.xlu0 %v463, 8
        %v530 = vpop.permute.xlu0 %529
        %531 = vrot.lane.b32.xlu0 %v464, 8
        %v532 = vpop.permute.xlu0 %531
        %533 = vrot.lane.b32.xlu0 %v465, 8
        %v534 = vpop.permute.xlu0 %533
        %535 = vrot.lane.b32.xlu0 %v466, 8
        %v536 = vpop.permute.xlu0 %535
        %537 = vrot.lane.b32.xlu0 %v467, 8
        %v538 = vpop.permute.xlu0 %537
        %539 = vrot.lane.b32.xlu0 %v468, 8
        %v540 = vpop.permute.xlu0 %539
        %541 = vrot.lane.b32.xlu0 %v469, 8
        %v542 = vpop.permute.xlu0 %541
        %543 = vrot.lane.b32.xlu0 %v470, 8
        %v544 = vpop.permute.xlu0 %543
        %545 = vrot.lane.b32.xlu0 %v471, 8
        %v546 = vpop.permute.xlu0 %545
        %547 = vrot.lane.b32.xlu0 %v472, 8
        %v548 = vpop.permute.xlu0 %547
        %549 = vrot.lane.b32.xlu0 %v473, 8
        %v550 = vpop.permute.xlu0 %549
        %551 = vrot.lane.b32.xlu0 %v474, 8
        %v552 = vpop.permute.xlu0 %551
        %553 = vrot.lane.b32.xlu0 %v475, 8
        %v554 = vpop.permute.xlu0 %553
        %555 = vrot.lane.b32.xlu0 %v476, 8
        %v556 = vpop.permute.xlu0 %555
        %557 = vrot.lane.b32.xlu0 %v477, 8
        %v558 = vpop.permute.xlu0 %557
        %559 = vrot.lane.b32.xlu0 %v478, 8
        %v560 = vpop.permute.xlu0 %559
        %561 = vrot.lane.b32.xlu0 %v479, 8
        %v562 = vpop.permute.xlu0 %561
        %563 = vrot.lane.b32.xlu0 %v480, 8
        %v564 = vpop.permute.xlu0 %563
        %565 = vrot.lane.b32.xlu0 %v481, 8
        %v566 = vpop.permute.xlu0 %565
        %567 = vrot.lane.b32.xlu0 %v482, 8
        %v568 = vpop.permute.xlu0 %567
        %569 = vrot.lane.b32.xlu0 %v483, 8
        %v570 = vpop.permute.xlu0 %569
        %571 = vrot.lane.b32.xlu0 %v484, 8
        %v572 = vpop.permute.xlu0 %571
        %573 = vrot.lane.b32.xlu0 %v485, 8
        %v574 = vpop.permute.xlu0 %573
        %575 = vrot.lane.b32.xlu0 %v486, 8
        %v576 = vpop.permute.xlu0 %575
        %577 = vrot.lane.b32.xlu0 %v487, 8
        %v578 = vpop.permute.xlu0 %577
        %579 = vrot.lane.b32.xlu0 %v488, 8
        %v580 = vpop.permute.xlu0 %579
        %581 = vrot.lane.b32.xlu0 %v489, 8
        %v582 = vpop.permute.xlu0 %581
        %583 = vrot.lane.b32.xlu0 %v490, 8
        %v584 = vpop.permute.xlu0 %583
        %585 = vrot.lane.b32.xlu0 %v491, 8
        %v586 = vpop.permute.xlu0 %585
        %587 = vrot.lane.b32.xlu0 %v492, 8
        %v588 = vpop.permute.xlu0 %587
        %vm621 = vcmask 97344
        %622 = vst.msk [vmem:[#allocation2] sm:$0xff] %vm621, %v526
        %623 = vst.msk [vmem:[#allocation2 + $0x8] sm:$0xff] %vm621, %v528
        %624 = vst.msk [vmem:[#allocation2 + $0x10] sm:$0xff] %vm621, %v530
        %625 = vst.msk [vmem:[#allocation2 + $0x18] sm:$0xff] %vm621, %v532
        %626 = vst.msk [vmem:[#allocation2 + $0x20] sm:$0xff] %vm621, %v534
        %627 = vst.msk [vmem:[#allocation2 + $0x28] sm:$0xff] %vm621, %v536
        %628 = vst.msk [vmem:[#allocation2 + $0x30] sm:$0xff] %vm621, %v538
        %629 = vst.msk [vmem:[#allocation2 + $0x38] sm:$0xff] %vm621, %v540
        %630 = vst.msk [vmem:[#allocation2 + $0x40] sm:$0xff] %vm621, %v542
        %631 = vst.msk [vmem:[#allocation2 + $0x48] sm:$0xff] %vm621, %v544
        %632 = vst.msk [vmem:[#allocation2 + $0x50] sm:$0xff] %vm621, %v546
        %633 = vst.msk [vmem:[#allocation2 + $0x58] sm:$0xff] %vm621, %v548
        %634 = vst.msk [vmem:[#allocation2 + $0x60] sm:$0xff] %vm621, %v550
        %635 = vst.msk [vmem:[#allocation2 + $0x68] sm:$0xff] %vm621, %v552
        %636 = vst.msk [vmem:[#allocation2 + $0x70] sm:$0xff] %vm621, %v554
        %637 = vst.msk [vmem:[#allocation2 + $0x78] sm:$0xff] %vm621, %v556
        %638 = vst.msk [vmem:[#allocation2 + $0x80] sm:$0xff] %vm621, %v558
        %639 = vst.msk [vmem:[#allocation2 + $0x88] sm:$0xff] %vm621, %v560
        %640 = vst.msk [vmem:[#allocation2 + $0x90] sm:$0xff] %vm621, %v562
        %641 = vst.msk [vmem:[#allocation2 + $0x98] sm:$0xff] %vm621, %v564
        %642 = vst.msk [vmem:[#allocation2 + $0xa0] sm:$0xff] %vm621, %v566
        %643 = vst.msk [vmem:[#allocation2 + $0xa8] sm:$0xff] %vm621, %v568
        %644 = vst.msk [vmem:[#allocation2 + $0xb0] sm:$0xff] %vm621, %v570
        %645 = vst.msk [vmem:[#allocation2 + $0xb8] sm:$0xff] %vm621, %v572
        %646 = vst.msk [vmem:[#allocation2 + $0xc0] sm:$0xff] %vm621, %v574
        %647 = vst.msk [vmem:[#allocation2 + $0xc8] sm:$0xff] %vm621, %v576
        %648 = vst.msk [vmem:[#allocation2 + $0xd0] sm:$0xff] %vm621, %v578
        %649 = vst.msk [vmem:[#allocation2 + $0xd8] sm:$0xff] %vm621, %v580
        %650 = vst.msk [vmem:[#allocation2 + $0xe0] sm:$0xff] %vm621, %v582
        %651 = vst.msk [vmem:[#allocation2 + $0xe8] sm:$0xff] %vm621, %v584
        %652 = vst.msk [vmem:[#allocation2 + $0xf0] sm:$0xff] %vm621, %v586
        %653 = vst.msk [vmem:[#allocation2 + $0xf8] sm:$0xff] %vm621, %v588
        %s654 = scalar_lea.vmem %s168, 24
        %v655 = vld [vmem:[%s654] sm:$0xff]
        %v656 = vld [vmem:[%s654 + $0x8] sm:$0xff]
        %v657 = vld [vmem:[%s654 + $0x18] sm:$0xff]
        %v658 = vld [vmem:[%s654 + $0x20] sm:$0xff]
        %v659 = vld [vmem:[%s654 + $0x30] sm:$0xff]
        %v660 = vld [vmem:[%s654 + $0x38] sm:$0xff]
        %v661 = vld [vmem:[%s654 + $0x48] sm:$0xff]
        %v662 = vld [vmem:[%s654 + $0x50] sm:$0xff]
        %v663 = vld [vmem:[%s654 + $0x60] sm:$0xff]
        %v664 = vld [vmem:[%s654 + $0x68] sm:$0xff]
        %v665 = vld [vmem:[%s654 + $0x78] sm:$0xff]
        %v666 = vld [vmem:[%s654 + $0x80] sm:$0xff]
        %v667 = vld [vmem:[%s654 + $0x90] sm:$0xff]
        %v668 = vld [vmem:[%s654 + $0x98] sm:$0xff]
        %v669 = vld [vmem:[%s654 + $0xa8] sm:$0xff]
        %v670 = vld [vmem:[%s654 + $0xb0] sm:$0xff]
        %v671 = vld [vmem:[%s654 + $0xc0] sm:$0xff]
        %v672 = vld [vmem:[%s654 + $0xc8] sm:$0xff]
        %v673 = vld [vmem:[%s654 + $0xd8] sm:$0xff]
        %v674 = vld [vmem:[%s654 + $0xe0] sm:$0xff]
        %v675 = vld [vmem:[%s654 + $0xf0] sm:$0xff]
        %v676 = vld [vmem:[%s654 + $0xf8] sm:$0xff]
        %v677 = vld [vmem:[%s654 + $0x108] sm:$0xff]
        %v678 = vld [vmem:[%s654 + $0x110] sm:$0xff]
        %v679 = vld [vmem:[%s654 + $0x120] sm:$0xff]
        %v680 = vld [vmem:[%s654 + $0x128] sm:$0xff]
        %v681 = vld [vmem:[%s654 + $0x138] sm:$0xff]
        %v682 = vld [vmem:[%s654 + $0x140] sm:$0xff]
        %v683 = vld [vmem:[%s654 + $0x150] sm:$0xff]
        %v684 = vld [vmem:[%s654 + $0x158] sm:$0xff]
        %v685 = vld [vmem:[%s654 + $0x168] sm:$0xff]
        %v686 = vld [vmem:[%s654 + $0x170] sm:$0xff]
        %719 = vrot.lane.b32.xlu0 %v655, 12
        %v720 = vpop.permute.xlu0 %719
        %721 = vrot.lane.b32.xlu0 %v656, 12
        %v722 = vpop.permute.xlu0 %721
        %723 = vrot.lane.b32.xlu0 %v657, 12
        %v724 = vpop.permute.xlu0 %723
        %725 = vrot.lane.b32.xlu0 %v658, 12
        %v726 = vpop.permute.xlu0 %725
        %727 = vrot.lane.b32.xlu0 %v659, 12
        %v728 = vpop.permute.xlu0 %727
        %729 = vrot.lane.b32.xlu0 %v660, 12
        %v730 = vpop.permute.xlu0 %729
        %731 = vrot.lane.b32.xlu0 %v661, 12
        %v732 = vpop.permute.xlu0 %731
        %733 = vrot.lane.b32.xlu0 %v662, 12
        %v734 = vpop.permute.xlu0 %733
        %735 = vrot.lane.b32.xlu0 %v663, 12
        %v736 = vpop.permute.xlu0 %735
        %737 = vrot.lane.b32.xlu0 %v664, 12
        %v738 = vpop.permute.xlu0 %737
        %739 = vrot.lane.b32.xlu0 %v665, 12
        %v740 = vpop.permute.xlu0 %739
        %741 = vrot.lane.b32.xlu0 %v666, 12
        %v742 = vpop.permute.xlu0 %741
        %743 = vrot.lane.b32.xlu0 %v667, 12
        %v744 = vpop.permute.xlu0 %743
        %745 = vrot.lane.b32.xlu0 %v668, 12
        %v746 = vpop.permute.xlu0 %745
        %747 = vrot.lane.b32.xlu0 %v669, 12
        %v748 = vpop.permute.xlu0 %747
        %749 = vrot.lane.b32.xlu0 %v670, 12
        %v750 = vpop.permute.xlu0 %749
        %751 = vrot.lane.b32.xlu0 %v671, 12
        %v752 = vpop.permute.xlu0 %751
        %753 = vrot.lane.b32.xlu0 %v672, 12
        %v754 = vpop.permute.xlu0 %753
        %755 = vrot.lane.b32.xlu0 %v673, 12
        %v756 = vpop.permute.xlu0 %755
        %757 = vrot.lane.b32.xlu0 %v674, 12
        %v758 = vpop.permute.xlu0 %757
        %759 = vrot.lane.b32.xlu0 %v675, 12
        %v760 = vpop.permute.xlu0 %759
        %761 = vrot.lane.b32.xlu0 %v676, 12
        %v762 = vpop.permute.xlu0 %761
        %763 = vrot.lane.b32.xlu0 %v677, 12
        %v764 = vpop.permute.xlu0 %763
        %765 = vrot.lane.b32.xlu0 %v678, 12
        %v766 = vpop.permute.xlu0 %765
        %767 = vrot.lane.b32.xlu0 %v679, 12
        %v768 = vpop.permute.xlu0 %767
        %769 = vrot.lane.b32.xlu0 %v680, 12
        %v770 = vpop.permute.xlu0 %769
        %771 = vrot.lane.b32.xlu0 %v681, 12
        %v772 = vpop.permute.xlu0 %771
        %773 = vrot.lane.b32.xlu0 %v682, 12
        %v774 = vpop.permute.xlu0 %773
        %775 = vrot.lane.b32.xlu0 %v683, 12
        %v776 = vpop.permute.xlu0 %775
        %777 = vrot.lane.b32.xlu0 %v684, 12
        %v778 = vpop.permute.xlu0 %777
        %779 = vrot.lane.b32.xlu0 %v685, 12
        %v780 = vpop.permute.xlu0 %779
        %781 = vrot.lane.b32.xlu0 %v686, 12
        %v782 = vpop.permute.xlu0 %781
        %vm815 = vcmask 130144
        %816 = vst.msk [vmem:[#allocation2] sm:$0xff] %vm815, %v720
        %817 = vst.msk [vmem:[#allocation2 + $0x8] sm:$0xff] %vm815, %v722
        %818 = vst.msk [vmem:[#allocation2 + $0x10] sm:$0xff] %vm815, %v724
        %819 = vst.msk [vmem:[#allocation2 + $0x18] sm:$0xff] %vm815, %v726
        %820 = vst.msk [vmem:[#allocation2 + $0x20] sm:$0xff] %vm815, %v728
        %821 = vst.msk [vmem:[#allocation2 + $0x28] sm:$0xff] %vm815, %v730
        %822 = vst.msk [vmem:[#allocation2 + $0x30] sm:$0xff] %vm815, %v732
        %823 = vst.msk [vmem:[#allocation2 + $0x38] sm:$0xff] %vm815, %v734
        %824 = vst.msk [vmem:[#allocation2 + $0x40] sm:$0xff] %vm815, %v736
        %825 = vst.msk [vmem:[#allocation2 + $0x48] sm:$0xff] %vm815, %v738
        %826 = vst.msk [vmem:[#allocation2 + $0x50] sm:$0xff] %vm815, %v740
        %827 = vst.msk [vmem:[#allocation2 + $0x58] sm:$0xff] %vm815, %v742
        %828 = vst.msk [vmem:[#allocation2 + $0x60] sm:$0xff] %vm815, %v744
        %829 = vst.msk [vmem:[#allocation2 + $0x68] sm:$0xff] %vm815, %v746
        %830 = vst.msk [vmem:[#allocation2 + $0x70] sm:$0xff] %vm815, %v748
        %831 = vst.msk [vmem:[#allocation2 + $0x78] sm:$0xff] %vm815, %v750
        %832 = vst.msk [vmem:[#allocation2 + $0x80] sm:$0xff] %vm815, %v752
        %833 = vst.msk [vmem:[#allocation2 + $0x88] sm:$0xff] %vm815, %v754
        %834 = vst.msk [vmem:[#allocation2 + $0x90] sm:$0xff] %vm815, %v756
        %835 = vst.msk [vmem:[#allocation2 + $0x98] sm:$0xff] %vm815, %v758
        %836 = vst.msk [vmem:[#allocation2 + $0xa0] sm:$0xff] %vm815, %v760
        %837 = vst.msk [vmem:[#allocation2 + $0xa8] sm:$0xff] %vm815, %v762
        %838 = vst.msk [vmem:[#allocation2 + $0xb0] sm:$0xff] %vm815, %v764
        %839 = vst.msk [vmem:[#allocation2 + $0xb8] sm:$0xff] %vm815, %v766
        %840 = vst.msk [vmem:[#allocation2 + $0xc0] sm:$0xff] %vm815, %v768
        %841 = vst.msk [vmem:[#allocation2 + $0xc8] sm:$0xff] %vm815, %v770
        %842 = vst.msk [vmem:[#allocation2 + $0xd0] sm:$0xff] %vm815, %v772
        %843 = vst.msk [vmem:[#allocation2 + $0xd8] sm:$0xff] %vm815, %v774
        %844 = vst.msk [vmem:[#allocation2 + $0xe0] sm:$0xff] %vm815, %v776
        %845 = vst.msk [vmem:[#allocation2 + $0xe8] sm:$0xff] %vm815, %v778
        %846 = vst.msk [vmem:[#allocation2 + $0xf0] sm:$0xff] %vm815, %v780
        %847 = vst.msk [vmem:[#allocation2 + $0xf8] sm:$0xff] %vm815, %v782
        %v848 = vld [vmem:[%s654 + $0x1] sm:$0xff]
        %v849 = vld [vmem:[%s654 + $0x9] sm:$0xff]
        %v850 = vld [vmem:[%s654 + $0x19] sm:$0xff]
        %v851 = vld [vmem:[%s654 + $0x21] sm:$0xff]
        %v852 = vld [vmem:[%s654 + $0x31] sm:$0xff]
        %v853 = vld [vmem:[%s654 + $0x39] sm:$0xff]
        %v854 = vld [vmem:[%s654 + $0x49] sm:$0xff]
        %v855 = vld [vmem:[%s654 + $0x51] sm:$0xff]
        %v856 = vld [vmem:[%s654 + $0x61] sm:$0xff]
        %v857 = vld [vmem:[%s654 + $0x69] sm:$0xff]
        %v858 = vld [vmem:[%s654 + $0x79] sm:$0xff]
        %v859 = vld [vmem:[%s654 + $0x81] sm:$0xff]
        %v860 = vld [vmem:[%s654 + $0x91] sm:$0xff]
        %v861 = vld [vmem:[%s654 + $0x99] sm:$0xff]
        %v862 = vld [vmem:[%s654 + $0xa9] sm:$0xff]
        %v863 = vld [vmem:[%s654 + $0xb1] sm:$0xff]
        %v864 = vld [vmem:[%s654 + $0xc1] sm:$0xff]
        %v865 = vld [vmem:[%s654 + $0xc9] sm:$0xff]
        %v866 = vld [vmem:[%s654 + $0xd9] sm:$0xff]
        %v867 = vld [vmem:[%s654 + $0xe1] sm:$0xff]
        %v868 = vld [vmem:[%s654 + $0xf1] sm:$0xff]
        %v869 = vld [vmem:[%s654 + $0xf9] sm:$0xff]
        %v870 = vld [vmem:[%s654 + $0x109] sm:$0xff]
        %v871 = vld [vmem:[%s654 + $0x111] sm:$0xff]
        %v872 = vld [vmem:[%s654 + $0x121] sm:$0xff]
        %v873 = vld [vmem:[%s654 + $0x129] sm:$0xff]
        %v874 = vld [vmem:[%s654 + $0x139] sm:$0xff]
        %v875 = vld [vmem:[%s654 + $0x141] sm:$0xff]
        %v876 = vld [vmem:[%s654 + $0x151] sm:$0xff]
        %v877 = vld [vmem:[%s654 + $0x159] sm:$0xff]
        %v878 = vld [vmem:[%s654 + $0x169] sm:$0xff]
        %v879 = vld [vmem:[%s654 + $0x171] sm:$0xff]
        %912 = vrot.lane.b32.xlu0 %v848, 16
        %v913 = vpop.permute.xlu0 %912
        %914 = vrot.lane.b32.xlu0 %v849, 16
        %v915 = vpop.permute.xlu0 %914
        %916 = vrot.lane.b32.xlu0 %v850, 16
        %v917 = vpop.permute.xlu0 %916
        %918 = vrot.lane.b32.xlu0 %v851, 16
        %v919 = vpop.permute.xlu0 %918
        %920 = vrot.lane.b32.xlu0 %v852, 16
        %v921 = vpop.permute.xlu0 %920
        %922 = vrot.lane.b32.xlu0 %v853, 16
        %v923 = vpop.permute.xlu0 %922
        %924 = vrot.lane.b32.xlu0 %v854, 16
        %v925 = vpop.permute.xlu0 %924
        %926 = vrot.lane.b32.xlu0 %v855, 16
        %v927 = vpop.permute.xlu0 %926
        %928 = vrot.lane.b32.xlu0 %v856, 16
        %v929 = vpop.permute.xlu0 %928
        %930 = vrot.lane.b32.xlu0 %v857, 16
        %v931 = vpop.permute.xlu0 %930
        %932 = vrot.lane.b32.xlu0 %v858, 16
        %v933 = vpop.permute.xlu0 %932
        %934 = vrot.lane.b32.xlu0 %v859, 16
        %v935 = vpop.permute.xlu0 %934
        %936 = vrot.lane.b32.xlu0 %v860, 16
        %v937 = vpop.permute.xlu0 %936
        %938 = vrot.lane.b32.xlu0 %v861, 16
        %v939 = vpop.permute.xlu0 %938
        %940 = vrot.lane.b32.xlu0 %v862, 16
        %v941 = vpop.permute.xlu0 %940
        %942 = vrot.lane.b32.xlu0 %v863, 16
        %v943 = vpop.permute.xlu0 %942
        %944 = vrot.lane.b32.xlu0 %v864, 16
        %v945 = vpop.permute.xlu0 %944
        %946 = vrot.lane.b32.xlu0 %v865, 16
        %v947 = vpop.permute.xlu0 %946
        %948 = vrot.lane.b32.xlu0 %v866, 16
        %v949 = vpop.permute.xlu0 %948
        %950 = vrot.lane.b32.xlu0 %v867, 16
        %v951 = vpop.permute.xlu0 %950
        %952 = vrot.lane.b32.xlu0 %v868, 16
        %v953 = vpop.permute.xlu0 %952
        %954 = vrot.lane.b32.xlu0 %v869, 16
        %v955 = vpop.permute.xlu0 %954
        %956 = vrot.lane.b32.xlu0 %v870, 16
        %v957 = vpop.permute.xlu0 %956
        %958 = vrot.lane.b32.xlu0 %v871, 16
        %v959 = vpop.permute.xlu0 %958
        %960 = vrot.lane.b32.xlu0 %v872, 16
        %v961 = vpop.permute.xlu0 %960
        %962 = vrot.lane.b32.xlu0 %v873, 16
        %v963 = vpop.permute.xlu0 %962
        %964 = vrot.lane.b32.xlu0 %v874, 16
        %v965 = vpop.permute.xlu0 %964
        %966 = vrot.lane.b32.xlu0 %v875, 16
        %v967 = vpop.permute.xlu0 %966
        %968 = vrot.lane.b32.xlu0 %v876, 16
        %v969 = vpop.permute.xlu0 %968
        %970 = vrot.lane.b32.xlu0 %v877, 16
        %v971 = vpop.permute.xlu0 %970
        %972 = vrot.lane.b32.xlu0 %v878, 16
        %v973 = vpop.permute.xlu0 %972
        %974 = vrot.lane.b32.xlu0 %v879, 16
        %v975 = vpop.permute.xlu0 %974
        %vm1008 = vcmask 162944
        %1009 = vst.msk [vmem:[#allocation2] sm:$0xff] %vm1008, %v913
        %1010 = vst.msk [vmem:[#allocation2 + $0x8] sm:$0xff] %vm1008, %v915
        %1011 = vst.msk [vmem:[#allocation2 + $0x10] sm:$0xff] %vm1008, %v917
        %1012 = vst.msk [vmem:[#allocation2 + $0x18] sm:$0xff] %vm1008, %v919
        %1013 = vst.msk [vmem:[#allocation2 + $0x20] sm:$0xff] %vm1008, %v921
        %1014 = vst.msk [vmem:[#allocation2 + $0x28] sm:$0xff] %vm1008, %v923
        %1015 = vst.msk [vmem:[#allocation2 + $0x30] sm:$0xff] %vm1008, %v925
        %1016 = vst.msk [vmem:[#allocation2 + $0x38] sm:$0xff] %vm1008, %v927
        %1017 = vst.msk [vmem:[#allocation2 + $0x40] sm:$0xff] %vm1008, %v929
        %1018 = vst.msk [vmem:[#allocation2 + $0x48] sm:$0xff] %vm1008, %v931
        %1019 = vst.msk [vmem:[#allocation2 + $0x50] sm:$0xff] %vm1008, %v933
        %1020 = vst.msk [vmem:[#allocation2 + $0x58] sm:$0xff] %vm1008, %v935
        %1021 = vst.msk [vmem:[#allocation2 + $0x60] sm:$0xff] %vm1008, %v937
        %1022 = vst.msk [vmem:[#allocation2 + $0x68] sm:$0xff] %vm1008, %v939
        %1023 = vst.msk [vmem:[#allocation2 + $0x70] sm:$0xff] %vm1008, %v941
        %1024 = vst.msk [vmem:[#allocation2 + $0x78] sm:$0xff] %vm1008, %v943
        %1025 = vst.msk [vmem:[#allocation2 + $0x80] sm:$0xff] %vm1008, %v945
        %1026 = vst.msk [vmem:[#allocation2 + $0x88] sm:$0xff] %vm1008, %v947
        %1027 = vst.msk [vmem:[#allocation2 + $0x90] sm:$0xff] %vm1008, %v949
        %1028 = vst.msk [vmem:[#allocation2 + $0x98] sm:$0xff] %vm1008, %v951
        %1029 = vst.msk [vmem:[#allocation2 + $0xa0] sm:$0xff] %vm1008, %v953
        %1030 = vst.msk [vmem:[#allocation2 + $0xa8] sm:$0xff] %vm1008, %v955
        %1031 = vst.msk [vmem:[#allocation2 + $0xb0] sm:$0xff] %vm1008, %v957
        %1032 = vst.msk [vmem:[#allocation2 + $0xb8] sm:$0xff] %vm1008, %v959
        %1033 = vst.msk [vmem:[#allocation2 + $0xc0] sm:$0xff] %vm1008, %v961
        %1034 = vst.msk [vmem:[#allocation2 + $0xc8] sm:$0xff] %vm1008, %v963
        %1035 = vst.msk [vmem:[#allocation2 + $0xd0] sm:$0xff] %vm1008, %v965
        %1036 = vst.msk [vmem:[#allocation2 + $0xd8] sm:$0xff] %vm1008, %v967
        %1037 = vst.msk [vmem:[#allocation2 + $0xe0] sm:$0xff] %vm1008, %v969
        %1038 = vst.msk [vmem:[#allocation2 + $0xe8] sm:$0xff] %vm1008, %v971
        %1039 = vst.msk [vmem:[#allocation2 + $0xf0] sm:$0xff] %vm1008, %v973
        %1040 = vst.msk [vmem:[#allocation2 + $0xf8] sm:$0xff] %vm1008, %v975
        %v1041 = vld [vmem:[%s654 + $0x2] sm:$0xff]
        %v1042 = vld [vmem:[%s654 + $0xa] sm:$0xff]
        %v1043 = vld [vmem:[%s654 + $0x1a] sm:$0xff]
        %v1044 = vld [vmem:[%s654 + $0x22] sm:$0xff]
        %v1045 = vld [vmem:[%s654 + $0x32] sm:$0xff]
        %v1046 = vld [vmem:[%s654 + $0x3a] sm:$0xff]
        %v1047 = vld [vmem:[%s654 + $0x4a] sm:$0xff]
        %v1048 = vld [vmem:[%s654 + $0x52] sm:$0xff]
        %v1049 = vld [vmem:[%s654 + $0x62] sm:$0xff]
        %v1050 = vld [vmem:[%s654 + $0x6a] sm:$0xff]
        %v1051 = vld [vmem:[%s654 + $0x7a] sm:$0xff]
        %v1052 = vld [vmem:[%s654 + $0x82] sm:$0xff]
        %v1053 = vld [vmem:[%s654 + $0x92] sm:$0xff]
        %v1054 = vld [vmem:[%s654 + $0x9a] sm:$0xff]
        %v1055 = vld [vmem:[%s654 + $0xaa] sm:$0xff]
        %v1056 = vld [vmem:[%s654 + $0xb2] sm:$0xff]
        %v1057 = vld [vmem:[%s654 + $0xc2] sm:$0xff]
        %v1058 = vld [vmem:[%s654 + $0xca] sm:$0xff]
        %v1059 = vld [vmem:[%s654 + $0xda] sm:$0xff]
        %v1060 = vld [vmem:[%s654 + $0xe2] sm:$0xff]
        %v1061 = vld [vmem:[%s654 + $0xf2] sm:$0xff]
        %v1062 = vld [vmem:[%s654 + $0xfa] sm:$0xff]
        %v1063 = vld [vmem:[%s654 + $0x10a] sm:$0xff]
        %v1064 = vld [vmem:[%s654 + $0x112] sm:$0xff]
        %v1065 = vld [vmem:[%s654 + $0x122] sm:$0xff]
        %v1066 = vld [vmem:[%s654 + $0x12a] sm:$0xff]
        %v1067 = vld [vmem:[%s654 + $0x13a] sm:$0xff]
        %v1068 = vld [vmem:[%s654 + $0x142] sm:$0xff]
        %v1069 = vld [vmem:[%s654 + $0x152] sm:$0xff]
        %v1070 = vld [vmem:[%s654 + $0x15a] sm:$0xff]
        %v1071 = vld [vmem:[%s654 + $0x16a] sm:$0xff]
        %v1072 = vld [vmem:[%s654 + $0x172] sm:$0xff]
        %1105 = vrot.lane.b32.xlu0 %v1041, 20
        %v1106 = vpop.permute.xlu0 %1105
        %1107 = vrot.lane.b32.xlu0 %v1042, 20
        %v1108 = vpop.permute.xlu0 %1107
        %1109 = vrot.lane.b32.xlu0 %v1043, 20
        %v1110 = vpop.permute.xlu0 %1109
        %1111 = vrot.lane.b32.xlu0 %v1044, 20
        %v1112 = vpop.permute.xlu0 %1111
        %1113 = vrot.lane.b32.xlu0 %v1045, 20
        %v1114 = vpop.permute.xlu0 %1113
        %1115 = vrot.lane.b32.xlu0 %v1046, 20
        %v1116 = vpop.permute.xlu0 %1115
        %1117 = vrot.lane.b32.xlu0 %v1047, 20
        %v1118 = vpop.permute.xlu0 %1117
        %1119 = vrot.lane.b32.xlu0 %v1048, 20
        %v1120 = vpop.permute.xlu0 %1119
        %1121 = vrot.lane.b32.xlu0 %v1049, 20
        %v1122 = vpop.permute.xlu0 %1121
        %1123 = vrot.lane.b32.xlu0 %v1050, 20
        %v1124 = vpop.permute.xlu0 %1123
        %1125 = vrot.lane.b32.xlu0 %v1051, 20
        %v1126 = vpop.permute.xlu0 %1125
        %1127 = vrot.lane.b32.xlu0 %v1052, 20
        %v1128 = vpop.permute.xlu0 %1127
        %1129 = vrot.lane.b32.xlu0 %v1053, 20
        %v1130 = vpop.permute.xlu0 %1129
        %1131 = vrot.lane.b32.xlu0 %v1054, 20
        %v1132 = vpop.permute.xlu0 %1131
        %1133 = vrot.lane.b32.xlu0 %v1055, 20
        %v1134 = vpop.permute.xlu0 %1133
        %1135 = vrot.lane.b32.xlu0 %v1056, 20
        %v1136 = vpop.permute.xlu0 %1135
        %1137 = vrot.lane.b32.xlu0 %v1057, 20
        %v1138 = vpop.permute.xlu0 %1137
        %1139 = vrot.lane.b32.xlu0 %v1058, 20
        %v1140 = vpop.permute.xlu0 %1139
        %1141 = vrot.lane.b32.xlu0 %v1059, 20
        %v1142 = vpop.permute.xlu0 %1141
        %1143 = vrot.lane.b32.xlu0 %v1060, 20
        %v1144 = vpop.permute.xlu0 %1143
        %1145 = vrot.lane.b32.xlu0 %v1061, 20
        %v1146 = vpop.permute.xlu0 %1145
        %1147 = vrot.lane.b32.xlu0 %v1062, 20
        %v1148 = vpop.permute.xlu0 %1147
        %1149 = vrot.lane.b32.xlu0 %v1063, 20
        %v1150 = vpop.permute.xlu0 %1149
        %1151 = vrot.lane.b32.xlu0 %v1064, 20
        %v1152 = vpop.permute.xlu0 %1151
        %1153 = vrot.lane.b32.xlu0 %v1065, 20
        %v1154 = vpop.permute.xlu0 %1153
        %1155 = vrot.lane.b32.xlu0 %v1066, 20
        %v1156 = vpop.permute.xlu0 %1155
        %1157 = vrot.lane.b32.xlu0 %v1067, 20
        %v1158 = vpop.permute.xlu0 %1157
        %1159 = vrot.lane.b32.xlu0 %v1068, 20
        %v1160 = vpop.permute.xlu0 %1159
        %1161 = vrot.lane.b32.xlu0 %v1069, 20
        %v1162 = vpop.permute.xlu0 %1161
        %1163 = vrot.lane.b32.xlu0 %v1070, 20
        %v1164 = vpop.permute.xlu0 %1163
        %1165 = vrot.lane.b32.xlu0 %v1071, 20
        %v1166 = vpop.permute.xlu0 %1165
        %1167 = vrot.lane.b32.xlu0 %v1072, 20
        %v1168 = vpop.permute.xlu0 %1167
        %vm1201 = vcmask 195744
        %1202 = vst.msk [vmem:[#allocation2] sm:$0xff] %vm1201, %v1106
        %1203 = vst.msk [vmem:[#allocation2 + $0x8] sm:$0xff] %vm1201, %v1108
        %1204 = vst.msk [vmem:[#allocation2 + $0x10] sm:$0xff] %vm1201, %v1110
        %1205 = vst.msk [vmem:[#allocation2 + $0x18] sm:$0xff] %vm1201, %v1112
        %1206 = vst.msk [vmem:[#allocation2 + $0x20] sm:$0xff] %vm1201, %v1114
        %1207 = vst.msk [vmem:[#allocation2 + $0x28] sm:$0xff] %vm1201, %v1116
        %1208 = vst.msk [vmem:[#allocation2 + $0x30] sm:$0xff] %vm1201, %v1118
        %1209 = vst.msk [vmem:[#allocation2 + $0x38] sm:$0xff] %vm1201, %v1120
        %1210 = vst.msk [vmem:[#allocation2 + $0x40] sm:$0xff] %vm1201, %v1122
        %1211 = vst.msk [vmem:[#allocation2 + $0x48] sm:$0xff] %vm1201, %v1124
        %1212 = vst.msk [vmem:[#allocation2 + $0x50] sm:$0xff] %vm1201, %v1126
        %1213 = vst.msk [vmem:[#allocation2 + $0x58] sm:$0xff] %vm1201, %v1128
        %1214 = vst.msk [vmem:[#allocation2 + $0x60] sm:$0xff] %vm1201, %v1130
        %1215 = vst.msk [vmem:[#allocation2 + $0x68] sm:$0xff] %vm1201, %v1132
        %1216 = vst.msk [vmem:[#allocation2 + $0x70] sm:$0xff] %vm1201, %v1134
        %1217 = vst.msk [vmem:[#allocation2 + $0x78] sm:$0xff] %vm1201, %v1136
        %1218 = vst.msk [vmem:[#allocation2 + $0x80] sm:$0xff] %vm1201, %v1138
        %1219 = vst.msk [vmem:[#allocation2 + $0x88] sm:$0xff] %vm1201, %v1140
        %1220 = vst.msk [vmem:[#allocation2 + $0x90] sm:$0xff] %vm1201, %v1142
        %1221 = vst.msk [vmem:[#allocation2 + $0x98] sm:$0xff] %vm1201, %v1144
        %1222 = vst.msk [vmem:[#allocation2 + $0xa0] sm:$0xff] %vm1201, %v1146
        %1223 = vst.msk [vmem:[#allocation2 + $0xa8] sm:$0xff] %vm1201, %v1148
        %1224 = vst.msk [vmem:[#allocation2 + $0xb0] sm:$0xff] %vm1201, %v1150
        %1225 = vst.msk [vmem:[#allocation2 + $0xb8] sm:$0xff] %vm1201, %v1152
        %1226 = vst.msk [vmem:[#allocation2 + $0xc0] sm:$0xff] %vm1201, %v1154
        %1227 = vst.msk [vmem:[#allocation2 + $0xc8] sm:$0xff] %vm1201, %v1156
        %1228 = vst.msk [vmem:[#allocation2 + $0xd0] sm:$0xff] %vm1201, %v1158
        %1229 = vst.msk [vmem:[#allocation2 + $0xd8] sm:$0xff] %vm1201, %v1160
        %1230 = vst.msk [vmem:[#allocation2 + $0xe0] sm:$0xff] %vm1201, %v1162
        %1231 = vst.msk [vmem:[#allocation2 + $0xe8] sm:$0xff] %vm1201, %v1164
        %1232 = vst.msk [vmem:[#allocation2 + $0xf0] sm:$0xff] %vm1201, %v1166
        %1233 = vst.msk [vmem:[#allocation2 + $0xf8] sm:$0xff] %vm1201, %v1168
        %s1234 = scalar_lea.vmem %s168, 48
        %v1235 = vld [vmem:[%s1234] sm:$0xff]
        %v1236 = vld [vmem:[%s1234 + $0x8] sm:$0xff]
        %v1237 = vld [vmem:[%s1234 + $0x18] sm:$0xff]
        %v1238 = vld [vmem:[%s1234 + $0x20] sm:$0xff]
        %v1239 = vld [vmem:[%s1234 + $0x30] sm:$0xff]
        %v1240 = vld [vmem:[%s1234 + $0x38] sm:$0xff]
        %v1241 = vld [vmem:[%s1234 + $0x48] sm:$0xff]
        %v1242 = vld [vmem:[%s1234 + $0x50] sm:$0xff]
        %v1243 = vld [vmem:[%s1234 + $0x60] sm:$0xff]
        %v1244 = vld [vmem:[%s1234 + $0x68] sm:$0xff]
        %v1245 = vld [vmem:[%s1234 + $0x78] sm:$0xff]
        %v1246 = vld [vmem:[%s1234 + $0x80] sm:$0xff]
        %v1247 = vld [vmem:[%s1234 + $0x90] sm:$0xff]
        %v1248 = vld [vmem:[%s1234 + $0x98] sm:$0xff]
        %v1249 = vld [vmem:[%s1234 + $0xa8] sm:$0xff]
        %v1250 = vld [vmem:[%s1234 + $0xb0] sm:$0xff]
        %v1251 = vld [vmem:[%s1234 + $0xc0] sm:$0xff]
        %v1252 = vld [vmem:[%s1234 + $0xc8] sm:$0xff]
        %v1253 = vld [vmem:[%s1234 + $0xd8] sm:$0xff]
        %v1254 = vld [vmem:[%s1234 + $0xe0] sm:$0xff]
        %v1255 = vld [vmem:[%s1234 + $0xf0] sm:$0xff]
        %v1256 = vld [vmem:[%s1234 + $0xf8] sm:$0xff]
        %v1257 = vld [vmem:[%s1234 + $0x108] sm:$0xff]
        %v1258 = vld [vmem:[%s1234 + $0x110] sm:$0xff]
        %v1259 = vld [vmem:[%s1234 + $0x120] sm:$0xff]
        %v1260 = vld [vmem:[%s1234 + $0x128] sm:$0xff]
        %v1261 = vld [vmem:[%s1234 + $0x138] sm:$0xff]
        %v1262 = vld [vmem:[%s1234 + $0x140] sm:$0xff]
        %v1263 = vld [vmem:[%s1234 + $0x150] sm:$0xff]
        %v1264 = vld [vmem:[%s1234 + $0x158] sm:$0xff]
        %v1265 = vld [vmem:[%s1234 + $0x168] sm:$0xff]
        %v1266 = vld [vmem:[%s1234 + $0x170] sm:$0xff]
        %1299 = vrot.lane.b32.xlu0 %v1235, 24
        %v1300 = vpop.permute.xlu0 %1299
        %1301 = vrot.lane.b32.xlu0 %v1236, 24
        %v1302 = vpop.permute.xlu0 %1301
        %1303 = vrot.lane.b32.xlu0 %v1237, 24
        %v1304 = vpop.permute.xlu0 %1303
        %1305 = vrot.lane.b32.xlu0 %v1238, 24
        %v1306 = vpop.permute.xlu0 %1305
        %1307 = vrot.lane.b32.xlu0 %v1239, 24
        %v1308 = vpop.permute.xlu0 %1307
        %1309 = vrot.lane.b32.xlu0 %v1240, 24
        %v1310 = vpop.permute.xlu0 %1309
        %1311 = vrot.lane.b32.xlu0 %v1241, 24
        %v1312 = vpop.permute.xlu0 %1311
        %1313 = vrot.lane.b32.xlu0 %v1242, 24
        %v1314 = vpop.permute.xlu0 %1313
        %1315 = vrot.lane.b32.xlu0 %v1243, 24
        %v1316 = vpop.permute.xlu0 %1315
        %1317 = vrot.lane.b32.xlu0 %v1244, 24
        %v1318 = vpop.permute.xlu0 %1317
        %1319 = vrot.lane.b32.xlu0 %v1245, 24
        %v1320 = vpop.permute.xlu0 %1319
        %1321 = vrot.lane.b32.xlu0 %v1246, 24
        %v1322 = vpop.permute.xlu0 %1321
        %1323 = vrot.lane.b32.xlu0 %v1247, 24
        %v1324 = vpop.permute.xlu0 %1323
        %1325 = vrot.lane.b32.xlu0 %v1248, 24
        %v1326 = vpop.permute.xlu0 %1325
        %1327 = vrot.lane.b32.xlu0 %v1249, 24
        %v1328 = vpop.permute.xlu0 %1327
        %1329 = vrot.lane.b32.xlu0 %v1250, 24
        %v1330 = vpop.permute.xlu0 %1329
        %1331 = vrot.lane.b32.xlu0 %v1251, 24
        %v1332 = vpop.permute.xlu0 %1331
        %1333 = vrot.lane.b32.xlu0 %v1252, 24
        %v1334 = vpop.permute.xlu0 %1333
        %1335 = vrot.lane.b32.xlu0 %v1253, 24
        %v1336 = vpop.permute.xlu0 %1335
        %1337 = vrot.lane.b32.xlu0 %v1254, 24
        %v1338 = vpop.permute.xlu0 %1337
        %1339 = vrot.lane.b32.xlu0 %v1255, 24
        %v1340 = vpop.permute.xlu0 %1339
        %1341 = vrot.lane.b32.xlu0 %v1256, 24
        %v1342 = vpop.permute.xlu0 %1341
        %1343 = vrot.lane.b32.xlu0 %v1257, 24
        %v1344 = vpop.permute.xlu0 %1343
        %1345 = vrot.lane.b32.xlu0 %v1258, 24
        %v1346 = vpop.permute.xlu0 %1345
        %1347 = vrot.lane.b32.xlu0 %v1259, 24
        %v1348 = vpop.permute.xlu0 %1347
        %1349 = vrot.lane.b32.xlu0 %v1260, 24
        %v1350 = vpop.permute.xlu0 %1349
        %1351 = vrot.lane.b32.xlu0 %v1261, 24
        %v1352 = vpop.permute.xlu0 %1351
        %1353 = vrot.lane.b32.xlu0 %v1262, 24
        %v1354 = vpop.permute.xlu0 %1353
        %1355 = vrot.lane.b32.xlu0 %v1263, 24
        %v1356 = vpop.permute.xlu0 %1355
        %1357 = vrot.lane.b32.xlu0 %v1264, 24
        %v1358 = vpop.permute.xlu0 %1357
        %1359 = vrot.lane.b32.xlu0 %v1265, 24
        %v1360 = vpop.permute.xlu0 %1359
        %1361 = vrot.lane.b32.xlu0 %v1266, 24
        %v1362 = vpop.permute.xlu0 %1361
        %vm1395 = vcmask 228544
        %1396 = vst.msk [vmem:[#allocation2] sm:$0xff] %vm1395, %v1300
        %1397 = vst.msk [vmem:[#allocation2 + $0x8] sm:$0xff] %vm1395, %v1302
        %1398 = vst.msk [vmem:[#allocation2 + $0x10] sm:$0xff] %vm1395, %v1304
        %1399 = vst.msk [vmem:[#allocation2 + $0x18] sm:$0xff] %vm1395, %v1306
        %1400 = vst.msk [vmem:[#allocation2 + $0x20] sm:$0xff] %vm1395, %v1308
        %1401 = vst.msk [vmem:[#allocation2 + $0x28] sm:$0xff] %vm1395, %v1310
        %1402 = vst.msk [vmem:[#allocation2 + $0x30] sm:$0xff] %vm1395, %v1312
        %1403 = vst.msk [vmem:[#allocation2 + $0x38] sm:$0xff] %vm1395, %v1314
        %1404 = vst.msk [vmem:[#allocation2 + $0x40] sm:$0xff] %vm1395, %v1316
        %1405 = vst.msk [vmem:[#allocation2 + $0x48] sm:$0xff] %vm1395, %v1318
        %1406 = vst.msk [vmem:[#allocation2 + $0x50] sm:$0xff] %vm1395, %v1320
        %1407 = vst.msk [vmem:[#allocation2 + $0x58] sm:$0xff] %vm1395, %v1322
        %1408 = vst.msk [vmem:[#allocation2 + $0x60] sm:$0xff] %vm1395, %v1324
        %1409 = vst.msk [vmem:[#allocation2 + $0x68] sm:$0xff] %vm1395, %v1326
        %1410 = vst.msk [vmem:[#allocation2 + $0x70] sm:$0xff] %vm1395, %v1328
        %1411 = vst.msk [vmem:[#allocation2 + $0x78] sm:$0xff] %vm1395, %v1330
        %1412 = vst.msk [vmem:[#allocation2 + $0x80] sm:$0xff] %vm1395, %v1332
        %1413 = vst.msk [vmem:[#allocation2 + $0x88] sm:$0xff] %vm1395, %v1334
        %1414 = vst.msk [vmem:[#allocation2 + $0x90] sm:$0xff] %vm1395, %v1336
        %1415 = vst.msk [vmem:[#allocation2 + $0x98] sm:$0xff] %vm1395, %v1338
        %1416 = vst.msk [vmem:[#allocation2 + $0xa0] sm:$0xff] %vm1395, %v1340
        %1417 = vst.msk [vmem:[#allocation2 + $0xa8] sm:$0xff] %vm1395, %v1342
        %1418 = vst.msk [vmem:[#allocation2 + $0xb0] sm:$0xff] %vm1395, %v1344
        %1419 = vst.msk [vmem:[#allocation2 + $0xb8] sm:$0xff] %vm1395, %v1346
        %1420 = vst.msk [vmem:[#allocation2 + $0xc0] sm:$0xff] %vm1395, %v1348
        %1421 = vst.msk [vmem:[#allocation2 + $0xc8] sm:$0xff] %vm1395, %v1350
        %1422 = vst.msk [vmem:[#allocation2 + $0xd0] sm:$0xff] %vm1395, %v1352
        %1423 = vst.msk [vmem:[#allocation2 + $0xd8] sm:$0xff] %vm1395, %v1354
        %1424 = vst.msk [vmem:[#allocation2 + $0xe0] sm:$0xff] %vm1395, %v1356
        %1425 = vst.msk [vmem:[#allocation2 + $0xe8] sm:$0xff] %vm1395, %v1358
        %1426 = vst.msk [vmem:[#allocation2 + $0xf0] sm:$0xff] %vm1395, %v1360
        %1427 = vst.msk [vmem:[#allocation2 + $0xf8] sm:$0xff] %vm1395, %v1362
        %v1428 = vld [vmem:[%s1234 + $0x1] sm:$0xff]
        %v1429 = vld [vmem:[%s1234 + $0x9] sm:$0xff]
        %v1430 = vld [vmem:[%s1234 + $0x19] sm:$0xff]
        %v1431 = vld [vmem:[%s1234 + $0x21] sm:$0xff]
        %v1432 = vld [vmem:[%s1234 + $0x31] sm:$0xff]
        %v1433 = vld [vmem:[%s1234 + $0x39] sm:$0xff]
        %v1434 = vld [vmem:[%s1234 + $0x49] sm:$0xff]
        %v1435 = vld [vmem:[%s1234 + $0x51] sm:$0xff]
        %v1436 = vld [vmem:[%s1234 + $0x61] sm:$0xff]
        %v1437 = vld [vmem:[%s1234 + $0x69] sm:$0xff]
        %v1438 = vld [vmem:[%s1234 + $0x79] sm:$0xff]
        %v1439 = vld [vmem:[%s1234 + $0x81] sm:$0xff]
        %v1440 = vld [vmem:[%s1234 + $0x91] sm:$0xff]
        %v1441 = vld [vmem:[%s1234 + $0x99] sm:$0xff]
        %v1442 = vld [vmem:[%s1234 + $0xa9] sm:$0xff]
        %v1443 = vld [vmem:[%s1234 + $0xb1] sm:$0xff]
        %v1444 = vld [vmem:[%s1234 + $0xc1] sm:$0xff]
        %v1445 = vld [vmem:[%s1234 + $0xc9] sm:$0xff]
        %v1446 = vld [vmem:[%s1234 + $0xd9] sm:$0xff]
        %v1447 = vld [vmem:[%s1234 + $0xe1] sm:$0xff]
        %v1448 = vld [vmem:[%s1234 + $0xf1] sm:$0xff]
        %v1449 = vld [vmem:[%s1234 + $0xf9] sm:$0xff]
        %v1450 = vld [vmem:[%s1234 + $0x109] sm:$0xff]
        %v1451 = vld [vmem:[%s1234 + $0x111] sm:$0xff]
        %v1452 = vld [vmem:[%s1234 + $0x121] sm:$0xff]
        %v1453 = vld [vmem:[%s1234 + $0x129] sm:$0xff]
        %v1454 = vld [vmem:[%s1234 + $0x139] sm:$0xff]
        %v1455 = vld [vmem:[%s1234 + $0x141] sm:$0xff]
        %v1456 = vld [vmem:[%s1234 + $0x151] sm:$0xff]
        %v1457 = vld [vmem:[%s1234 + $0x159] sm:$0xff]
        %v1458 = vld [vmem:[%s1234 + $0x169] sm:$0xff]
        %v1459 = vld [vmem:[%s1234 + $0x171] sm:$0xff]
        %1492 = vrot.lane.b32.xlu0 %v1428, 28
        %v1493 = vpop.permute.xlu0 %1492
        %1494 = vrot.lane.b32.xlu0 %v1429, 28
        %v1495 = vpop.permute.xlu0 %1494
        %1496 = vrot.lane.b32.xlu0 %v1430, 28
        %v1497 = vpop.permute.xlu0 %1496
        %1498 = vrot.lane.b32.xlu0 %v1431, 28
        %v1499 = vpop.permute.xlu0 %1498
        %1500 = vrot.lane.b32.xlu0 %v1432, 28
        %v1501 = vpop.permute.xlu0 %1500
        %1502 = vrot.lane.b32.xlu0 %v1433, 28
        %v1503 = vpop.permute.xlu0 %1502
        %1504 = vrot.lane.b32.xlu0 %v1434, 28
        %v1505 = vpop.permute.xlu0 %1504
        %1506 = vrot.lane.b32.xlu0 %v1435, 28
        %v1507 = vpop.permute.xlu0 %1506
        %1508 = vrot.lane.b32.xlu0 %v1436, 28
        %v1509 = vpop.permute.xlu0 %1508
        %1510 = vrot.lane.b32.xlu0 %v1437, 28
        %v1511 = vpop.permute.xlu0 %1510
        %1512 = vrot.lane.b32.xlu0 %v1438, 28
        %v1513 = vpop.permute.xlu0 %1512
        %1514 = vrot.lane.b32.xlu0 %v1439, 28
        %v1515 = vpop.permute.xlu0 %1514
        %1516 = vrot.lane.b32.xlu0 %v1440, 28
        %v1517 = vpop.permute.xlu0 %1516
        %1518 = vrot.lane.b32.xlu0 %v1441, 28
        %v1519 = vpop.permute.xlu0 %1518
        %1520 = vrot.lane.b32.xlu0 %v1442, 28
        %v1521 = vpop.permute.xlu0 %1520
        %1522 = vrot.lane.b32.xlu0 %v1443, 28
        %v1523 = vpop.permute.xlu0 %1522
        %1524 = vrot.lane.b32.xlu0 %v1444, 28
        %v1525 = vpop.permute.xlu0 %1524
        %1526 = vrot.lane.b32.xlu0 %v1445, 28
        %v1527 = vpop.permute.xlu0 %1526
        %1528 = vrot.lane.b32.xlu0 %v1446, 28
        %v1529 = vpop.permute.xlu0 %1528
        %1530 = vrot.lane.b32.xlu0 %v1447, 28
        %v1531 = vpop.permute.xlu0 %1530
        %1532 = vrot.lane.b32.xlu0 %v1448, 28
        %v1533 = vpop.permute.xlu0 %1532
        %1534 = vrot.lane.b32.xlu0 %v1449, 28
        %v1535 = vpop.permute.xlu0 %1534
        %1536 = vrot.lane.b32.xlu0 %v1450, 28
        %v1537 = vpop.permute.xlu0 %1536
        %1538 = vrot.lane.b32.xlu0 %v1451, 28
        %v1539 = vpop.permute.xlu0 %1538
        %1540 = vrot.lane.b32.xlu0 %v1452, 28
        %v1541 = vpop.permute.xlu0 %1540
        %1542 = vrot.lane.b32.xlu0 %v1453, 28
        %v1543 = vpop.permute.xlu0 %1542
        %1544 = vrot.lane.b32.xlu0 %v1454, 28
        %v1545 = vpop.permute.xlu0 %1544
        %1546 = vrot.lane.b32.xlu0 %v1455, 28
        %v1547 = vpop.permute.xlu0 %1546
        %1548 = vrot.lane.b32.xlu0 %v1456, 28
        %v1549 = vpop.permute.xlu0 %1548
        %1550 = vrot.lane.b32.xlu0 %v1457, 28
        %v1551 = vpop.permute.xlu0 %1550
        %1552 = vrot.lane.b32.xlu0 %v1458, 28
        %v1553 = vpop.permute.xlu0 %1552
        %1554 = vrot.lane.b32.xlu0 %v1459, 28
        %v1555 = vpop.permute.xlu0 %1554
        %vm1588 = vcmask 261344
        %1589 = vst.msk [vmem:[#allocation2] sm:$0xff] %vm1588, %v1493
        %1590 = vst.msk [vmem:[#allocation2 + $0x8] sm:$0xff] %vm1588, %v1495
        %1591 = vst.msk [vmem:[#allocation2 + $0x10] sm:$0xff] %vm1588, %v1497
        %1592 = vst.msk [vmem:[#allocation2 + $0x18] sm:$0xff] %vm1588, %v1499
        %1593 = vst.msk [vmem:[#allocation2 + $0x20] sm:$0xff] %vm1588, %v1501
        %1594 = vst.msk [vmem:[#allocation2 + $0x28] sm:$0xff] %vm1588, %v1503
        %1595 = vst.msk [vmem:[#allocation2 + $0x30] sm:$0xff] %vm1588, %v1505
        %1596 = vst.msk [vmem:[#allocation2 + $0x38] sm:$0xff] %vm1588, %v1507
        %1597 = vst.msk [vmem:[#allocation2 + $0x40] sm:$0xff] %vm1588, %v1509
        %1598 = vst.msk [vmem:[#allocation2 + $0x48] sm:$0xff] %vm1588, %v1511
        %1599 = vst.msk [vmem:[#allocation2 + $0x50] sm:$0xff] %vm1588, %v1513
        %1600 = vst.msk [vmem:[#allocation2 + $0x58] sm:$0xff] %vm1588, %v1515
        %1601 = vst.msk [vmem:[#allocation2 + $0x60] sm:$0xff] %vm1588, %v1517
        %1602 = vst.msk [vmem:[#allocation2 + $0x68] sm:$0xff] %vm1588, %v1519
        %1603 = vst.msk [vmem:[#allocation2 + $0x70] sm:$0xff] %vm1588, %v1521
        %1604 = vst.msk [vmem:[#allocation2 + $0x78] sm:$0xff] %vm1588, %v1523
        %1605 = vst.msk [vmem:[#allocation2 + $0x80] sm:$0xff] %vm1588, %v1525
        %1606 = vst.msk [vmem:[#allocation2 + $0x88] sm:$0xff] %vm1588, %v1527
        %1607 = vst.msk [vmem:[#allocation2 + $0x90] sm:$0xff] %vm1588, %v1529
        %1608 = vst.msk [vmem:[#allocation2 + $0x98] sm:$0xff] %vm1588, %v1531
        %1609 = vst.msk [vmem:[#allocation2 + $0xa0] sm:$0xff] %vm1588, %v1533
        %1610 = vst.msk [vmem:[#allocation2 + $0xa8] sm:$0xff] %vm1588, %v1535
        %1611 = vst.msk [vmem:[#allocation2 + $0xb0] sm:$0xff] %vm1588, %v1537
        %1612 = vst.msk [vmem:[#allocation2 + $0xb8] sm:$0xff] %vm1588, %v1539
        %1613 = vst.msk [vmem:[#allocation2 + $0xc0] sm:$0xff] %vm1588, %v1541
        %1614 = vst.msk [vmem:[#allocation2 + $0xc8] sm:$0xff] %vm1588, %v1543
        %1615 = vst.msk [vmem:[#allocation2 + $0xd0] sm:$0xff] %vm1588, %v1545
        %1616 = vst.msk [vmem:[#allocation2 + $0xd8] sm:$0xff] %vm1588, %v1547
        %1617 = vst.msk [vmem:[#allocation2 + $0xe0] sm:$0xff] %vm1588, %v1549
        %1618 = vst.msk [vmem:[#allocation2 + $0xe8] sm:$0xff] %vm1588, %v1551
        %1619 = vst.msk [vmem:[#allocation2 + $0xf0] sm:$0xff] %vm1588, %v1553
        %1620 = vst.msk [vmem:[#allocation2 + $0xf8] sm:$0xff] %vm1588, %v1555
        %v1621 = vld [vmem:[%s1234 + $0x2] sm:$0xff]
        %v1622 = vld [vmem:[%s1234 + $0xa] sm:$0xff]
        %v1623 = vld [vmem:[%s1234 + $0x1a] sm:$0xff]
        %v1624 = vld [vmem:[%s1234 + $0x22] sm:$0xff]
        %v1625 = vld [vmem:[%s1234 + $0x32] sm:$0xff]
        %v1626 = vld [vmem:[%s1234 + $0x3a] sm:$0xff]
        %v1627 = vld [vmem:[%s1234 + $0x4a] sm:$0xff]
        %v1628 = vld [vmem:[%s1234 + $0x52] sm:$0xff]
        %v1629 = vld [vmem:[%s1234 + $0x62] sm:$0xff]
        %v1630 = vld [vmem:[%s1234 + $0x6a] sm:$0xff]
        %v1631 = vld [vmem:[%s1234 + $0x7a] sm:$0xff]
        %v1632 = vld [vmem:[%s1234 + $0x82] sm:$0xff]
        %v1633 = vld [vmem:[%s1234 + $0x92] sm:$0xff]
        %v1634 = vld [vmem:[%s1234 + $0x9a] sm:$0xff]
        %v1635 = vld [vmem:[%s1234 + $0xaa] sm:$0xff]
        %v1636 = vld [vmem:[%s1234 + $0xb2] sm:$0xff]
        %v1637 = vld [vmem:[%s1234 + $0xc2] sm:$0xff]
        %v1638 = vld [vmem:[%s1234 + $0xca] sm:$0xff]
        %v1639 = vld [vmem:[%s1234 + $0xda] sm:$0xff]
        %v1640 = vld [vmem:[%s1234 + $0xe2] sm:$0xff]
        %v1641 = vld [vmem:[%s1234 + $0xf2] sm:$0xff]
        %v1642 = vld [vmem:[%s1234 + $0xfa] sm:$0xff]
        %v1643 = vld [vmem:[%s1234 + $0x10a] sm:$0xff]
        %v1644 = vld [vmem:[%s1234 + $0x112] sm:$0xff]
        %v1645 = vld [vmem:[%s1234 + $0x122] sm:$0xff]
        %v1646 = vld [vmem:[%s1234 + $0x12a] sm:$0xff]
        %v1647 = vld [vmem:[%s1234 + $0x13a] sm:$0xff]
        %v1648 = vld [vmem:[%s1234 + $0x142] sm:$0xff]
        %v1649 = vld [vmem:[%s1234 + $0x152] sm:$0xff]
        %v1650 = vld [vmem:[%s1234 + $0x15a] sm:$0xff]
        %v1651 = vld [vmem:[%s1234 + $0x16a] sm:$0xff]
        %v1652 = vld [vmem:[%s1234 + $0x172] sm:$0xff]
        %1685 = vrot.lane.b32.xlu0 %v1621, 32
        %v1686 = vpop.permute.xlu0 %1685
        %1687 = vrot.lane.b32.xlu0 %v1622, 32
        %v1688 = vpop.permute.xlu0 %1687
        %1689 = vrot.lane.b32.xlu0 %v1623, 32
        %v1690 = vpop.permute.xlu0 %1689
        %1691 = vrot.lane.b32.xlu0 %v1624, 32
        %v1692 = vpop.permute.xlu0 %1691
        %1693 = vrot.lane.b32.xlu0 %v1625, 32
        %v1694 = vpop.permute.xlu0 %1693
        %1695 = vrot.lane.b32.xlu0 %v1626, 32
        %v1696 = vpop.permute.xlu0 %1695
        %1697 = vrot.lane.b32.xlu0 %v1627, 32
        %v1698 = vpop.permute.xlu0 %1697
        %1699 = vrot.lane.b32.xlu0 %v1628, 32
        %v1700 = vpop.permute.xlu0 %1699
        %1701 = vrot.lane.b32.xlu0 %v1629, 32
        %v1702 = vpop.permute.xlu0 %1701
        %1703 = vrot.lane.b32.xlu0 %v1630, 32
        %v1704 = vpop.permute.xlu0 %1703
        %1705 = vrot.lane.b32.xlu0 %v1631, 32
        %v1706 = vpop.permute.xlu0 %1705
        %1707 = vrot.lane.b32.xlu0 %v1632, 32
        %v1708 = vpop.permute.xlu0 %1707
        %1709 = vrot.lane.b32.xlu0 %v1633, 32
        %v1710 = vpop.permute.xlu0 %1709
        %1711 = vrot.lane.b32.xlu0 %v1634, 32
        %v1712 = vpop.permute.xlu0 %1711
        %1713 = vrot.lane.b32.xlu0 %v1635, 32
        %v1714 = vpop.permute.xlu0 %1713
        %1715 = vrot.lane.b32.xlu0 %v1636, 32
        %v1716 = vpop.permute.xlu0 %1715
        %1717 = vrot.lane.b32.xlu0 %v1637, 32
        %v1718 = vpop.permute.xlu0 %1717
        %1719 = vrot.lane.b32.xlu0 %v1638, 32
        %v1720 = vpop.permute.xlu0 %1719
        %1721 = vrot.lane.b32.xlu0 %v1639, 32
        %v1722 = vpop.permute.xlu0 %1721
        %1723 = vrot.lane.b32.xlu0 %v1640, 32
        %v1724 = vpop.permute.xlu0 %1723
        %1725 = vrot.lane.b32.xlu0 %v1641, 32
        %v1726 = vpop.permute.xlu0 %1725
        %1727 = vrot.lane.b32.xlu0 %v1642, 32
        %v1728 = vpop.permute.xlu0 %1727
        %1729 = vrot.lane.b32.xlu0 %v1643, 32
        %v1730 = vpop.permute.xlu0 %1729
        %1731 = vrot.lane.b32.xlu0 %v1644, 32
        %v1732 = vpop.permute.xlu0 %1731
        %1733 = vrot.lane.b32.xlu0 %v1645, 32
        %v1734 = vpop.permute.xlu0 %1733
        %1735 = vrot.lane.b32.xlu0 %v1646, 32
        %v1736 = vpop.permute.xlu0 %1735
        %1737 = vrot.lane.b32.xlu0 %v1647, 32
        %v1738 = vpop.permute.xlu0 %1737
        %1739 = vrot.lane.b32.xlu0 %v1648, 32
        %v1740 = vpop.permute.xlu0 %1739
        %1741 = vrot.lane.b32.xlu0 %v1649, 32
        %v1742 = vpop.permute.xlu0 %1741
        %1743 = vrot.lane.b32.xlu0 %v1650, 32
        %v1744 = vpop.permute.xlu0 %1743
        %1745 = vrot.lane.b32.xlu0 %v1651, 32
        %v1746 = vpop.permute.xlu0 %1745
        %1747 = vrot.lane.b32.xlu0 %v1652, 32
        %v1748 = vpop.permute.xlu0 %1747
        %vm1781 = vcmask 294144
        %1782 = vst.msk [vmem:[#allocation2] sm:$0xff] %vm1781, %v1686
        %1783 = vst.msk [vmem:[#allocation2 + $0x8] sm:$0xff] %vm1781, %v1688
        %1784 = vst.msk [vmem:[#allocation2 + $0x10] sm:$0xff] %vm1781, %v1690
        %1785 = vst.msk [vmem:[#allocation2 + $0x18] sm:$0xff] %vm1781, %v1692
        %1786 = vst.msk [vmem:[#allocation2 + $0x20] sm:$0xff] %vm1781, %v1694
        %1787 = vst.msk [vmem:[#allocation2 + $0x28] sm:$0xff] %vm1781, %v1696
        %1788 = vst.msk [vmem:[#allocation2 + $0x30] sm:$0xff] %vm1781, %v1698
        %1789 = vst.msk [vmem:[#allocation2 + $0x38] sm:$0xff] %vm1781, %v1700
        %1790 = vst.msk [vmem:[#allocation2 + $0x40] sm:$0xff] %vm1781, %v1702
        %1791 = vst.msk [vmem:[#allocation2 + $0x48] sm:$0xff] %vm1781, %v1704
        %1792 = vst.msk [vmem:[#allocation2 + $0x50] sm:$0xff] %vm1781, %v1706
        %1793 = vst.msk [vmem:[#allocation2 + $0x58] sm:$0xff] %vm1781, %v1708
        %1794 = vst.msk [vmem:[#allocation2 + $0x60] sm:$0xff] %vm1781, %v1710
        %1795 = vst.msk [vmem:[#allocation2 + $0x68] sm:$0xff] %vm1781, %v1712
        %1796 = vst.msk [vmem:[#allocation2 + $0x70] sm:$0xff] %vm1781, %v1714
        %1797 = vst.msk [vmem:[#allocation2 + $0x78] sm:$0xff] %vm1781, %v1716
        %1798 = vst.msk [vmem:[#allocation2 + $0x80] sm:$0xff] %vm1781, %v1718
        %1799 = vst.msk [vmem:[#allocation2 + $0x88] sm:$0xff] %vm1781, %v1720
        %1800 = vst.msk [vmem:[#allocation2 + $0x90] sm:$0xff] %vm1781, %v1722
        %1801 = vst.msk [vmem:[#allocation2 + $0x98] sm:$0xff] %vm1781, %v1724
        %1802 = vst.msk [vmem:[#allocation2 + $0xa0] sm:$0xff] %vm1781, %v1726
        %1803 = vst.msk [vmem:[#allocation2 + $0xa8] sm:$0xff] %vm1781, %v1728
        %1804 = vst.msk [vmem:[#allocation2 + $0xb0] sm:$0xff] %vm1781, %v1730
        %1805 = vst.msk [vmem:[#allocation2 + $0xb8] sm:$0xff] %vm1781, %v1732
        %1806 = vst.msk [vmem:[#allocation2 + $0xc0] sm:$0xff] %vm1781, %v1734
        %1807 = vst.msk [vmem:[#allocation2 + $0xc8] sm:$0xff] %vm1781, %v1736
        %1808 = vst.msk [vmem:[#allocation2 + $0xd0] sm:$0xff] %vm1781, %v1738
        %1809 = vst.msk [vmem:[#allocation2 + $0xd8] sm:$0xff] %vm1781, %v1740
        %1810 = vst.msk [vmem:[#allocation2 + $0xe0] sm:$0xff] %vm1781, %v1742
        %1811 = vst.msk [vmem:[#allocation2 + $0xe8] sm:$0xff] %vm1781, %v1744
        %1812 = vst.msk [vmem:[#allocation2 + $0xf0] sm:$0xff] %vm1781, %v1746
        %1813 = vst.msk [vmem:[#allocation2 + $0xf8] sm:$0xff] %vm1781, %v1748
        %v1814 = vld [vmem:[%s2] sm:$0x1]
        %v1815 = vld [vmem:[#allocation2] sm:$0xff]
        %v1816 = vld [vmem:[#allocation2 + $0x8] sm:$0xff]
        %v1817 = vld [vmem:[#allocation2 + $0x10] sm:$0xff]
        %v1818 = vld [vmem:[#allocation2 + $0x18] sm:$0xff]
        %v1819 = vld [vmem:[#allocation2 + $0x20] sm:$0xff]
        %v1820 = vld [vmem:[#allocation2 + $0x28] sm:$0xff]
        %v1821 = vld [vmem:[#allocation2 + $0x30] sm:$0xff]
        %v1822 = vld [vmem:[#allocation2 + $0x38] sm:$0xff]
        %v1823 = vld [vmem:[#allocation2 + $0x40] sm:$0xff]
        %v1824 = vld [vmem:[#allocation2 + $0x48] sm:$0xff]
        %v1825 = vld [vmem:[#allocation2 + $0x50] sm:$0xff]
        %v1826 = vld [vmem:[#allocation2 + $0x58] sm:$0xff]
        %v1827 = vld [vmem:[#allocation2 + $0x60] sm:$0xff]
        %v1828 = vld [vmem:[#allocation2 + $0x68] sm:$0xff]
        %v1829 = vld [vmem:[#allocation2 + $0x70] sm:$0xff]
        %v1830 = vld [vmem:[#allocation2 + $0x78] sm:$0xff]
        %v1831 = vld [vmem:[#allocation2 + $0x80] sm:$0xff]
        %v1832 = vld [vmem:[#allocation2 + $0x88] sm:$0xff]
        %v1833 = vld [vmem:[#allocation2 + $0x90] sm:$0xff]
        %v1834 = vld [vmem:[#allocation2 + $0x98] sm:$0xff]
        %v1835 = vld [vmem:[#allocation2 + $0xa0] sm:$0xff]
        %v1836 = vld [vmem:[#allocation2 + $0xa8] sm:$0xff]
        %v1837 = vld [vmem:[#allocation2 + $0xb0] sm:$0xff]
        %v1838 = vld [vmem:[#allocation2 + $0xb8] sm:$0xff]
        %v1839 = vld [vmem:[#allocation2 + $0xc0] sm:$0xff]
        %v1840 = vld [vmem:[#allocation2 + $0xc8] sm:$0xff]
        %v1841 = vld [vmem:[#allocation2 + $0xd0] sm:$0xff]
        %v1842 = vld [vmem:[#allocation2 + $0xd8] sm:$0xff]
        %v1843 = vld [vmem:[#allocation2 + $0xe0] sm:$0xff]
        %v1844 = vld [vmem:[#allocation2 + $0xe8] sm:$0xff]
        %v1845 = vld [vmem:[#allocation2 + $0xf0] sm:$0xff]
        %v1846 = vld [vmem:[#allocation2 + $0xf8] sm:$0xff]
        %v1847 = vld [vmem:[%s1] sm:$0xff]
        %v1848 = vld [vmem:[%s1 + $0x8] sm:$0xff]
        %v1849 = vld [vmem:[%s1 + $0x10] sm:$0xff]
        %v1850 = vld [vmem:[%s1 + $0x18] sm:$0xff]
        %v1851 = vld [vmem:[%s1 + $0x20] sm:$0xff]
        %v1852 = vld [vmem:[%s1 + $0x28] sm:$0xff]
        %v1853 = vld [vmem:[%s1 + $0x30] sm:$0xff]
        %v1854 = vld [vmem:[%s1 + $0x38] sm:$0xff]
        %v1855 = vld [vmem:[%s1 + $0x40] sm:$0xff]
        %v1856 = vld [vmem:[%s1 + $0x48] sm:$0xff]
        %v1857 = vld [vmem:[%s1 + $0x50] sm:$0xff]
        %v1858 = vld [vmem:[%s1 + $0x58] sm:$0xff]
        %v1859 = vld [vmem:[%s1 + $0x60] sm:$0xff]
        %v1860 = vld [vmem:[%s1 + $0x68] sm:$0xff]
        %v1861 = vld [vmem:[%s1 + $0x70] sm:$0xff]
        %v1862 = vld [vmem:[%s1 + $0x78] sm:$0xff]
        %v1864 = vlaneseq
        %v1865 = vshrl.u32 %v1864, 7
        %v1866 = vsub.s32 0, %v1865
        %v1867 = vrot.slane %v1814, %v1866
        %1869 = vmatprep.subr.mxu0 0.0
        %1870 = vmatpush1.msra.mxu0 %v1862
        %1871 = vmatprep.subr.mxu0 0.0
        %1872 = vmatpush1.msra.mxu0 %v1861
        %1873 = vmatprep.subr.mxu0 0.0
        %1874 = vmatpush1.msra.mxu0 %v1860
        %1875 = vmatprep.subr.mxu0 0.0
        %1876 = vmatpush1.msra.mxu0 %v1859
        %1877 = vmatprep.subr.mxu0 0.0
        %1878 = vmatpush1.msra.mxu0 %v1858
        %1879 = vmatprep.subr.mxu0 0.0
        %1880 = vmatpush1.msra.mxu0 %v1857
        %1881 = vmatprep.subr.mxu0 0.0
        %1882 = vmatpush1.msra.mxu0 %v1856
        %1883 = vmatprep.subr.mxu0 0.0
        %1884 = vmatpush1.msra.mxu0 %v1855
        %1885 = vmatprep.subr.mxu0 0.0
        %1886 = vmatpush1.msra.mxu0 %v1854
        %1887 = vmatprep.subr.mxu0 0.0
        %1888 = vmatpush1.msra.mxu0 %v1853
        %1889 = vmatprep.subr.mxu0 0.0
        %1890 = vmatpush1.msra.mxu0 %v1852
        %1891 = vmatprep.subr.mxu0 0.0
        %1892 = vmatpush1.msra.mxu0 %v1851
        %1893 = vmatprep.subr.mxu0 0.0
        %1894 = vmatpush1.msra.mxu0 %v1850
        %1895 = vmatprep.subr.mxu0 0.0
        %1896 = vmatpush1.msra.mxu0 %v1849
        %1897 = vmatprep.subr.mxu0 0.0
        %1898 = vmatpush1.msra.mxu0 %v1848
        %1899 = vmatprep.subr.mxu0 0.0
        %1900 = vmatpush1.msra.mxu0 %v1847
        %1901 = vmatprep.subr.mxu0 0.0
        %1902 = vmatpush2.msra.mxu0 0.0
        %1903 = vmatprep.subr.mxu0 0.0
        %1904 = vmatpush2.msra.mxu0 0.0
        %1905 = vmatprep.subr.mxu0 0.0
        %1906 = vmatpush2.msra.mxu0 0.0
        %1907 = vmatprep.subr.mxu0 0.0
        %1908 = vmatpush2.msra.mxu0 0.0
        %1909 = vmatprep.subr.mxu0 0.0
        %1910 = vmatpush2.msra.mxu0 0.0
        %1911 = vmatprep.subr.mxu0 0.0
        %1912 = vmatpush2.msra.mxu0 0.0
        %1913 = vmatprep.subr.mxu0 0.0
        %1914 = vmatpush2.msra.mxu0 0.0
        %1915 = vmatprep.subr.mxu0 0.0
        %1916 = vmatpush2.msra.mxu0 0.0
        %1917 = vmatprep.subr.mxu0 0.0
        %1918 = vmatpush2.msra.mxu0 0.0
        %1919 = vmatprep.subr.mxu0 0.0
        %1920 = vmatpush2.msra.mxu0 0.0
        %1921 = vmatprep.subr.mxu0 0.0
        %1922 = vmatpush2.msra.mxu0 0.0
        %1923 = vmatprep.subr.mxu0 0.0
        %1924 = vmatpush2.msra.mxu0 0.0
        %1925 = vmatprep.subr.mxu0 0.0
        %1926 = vmatpush2.msra.mxu0 0.0
        %1927 = vmatprep.subr.mxu0 0.0
        %1928 = vmatpush2.msra.mxu0 0.0
        %1929 = vmatprep.subr.mxu0 0.0
        %1930 = vmatpush2.msra.mxu0 0.0
        %1931 = vmatprep.subr.mxu0 0.0
        %1932 = vmatpush2.msra.mxu0 0.0
        %1933 = vmatprep.mubr.f32.mxu0 0.0
        %1934 = vmatmul.mubr.f32.gmra.mxu0 %v1815
        %v1935 = vpop.f32.mrf.mxu0
        %v1936 = vadd.f32 %v1867, %v1935
        %v1937 = vpop.f32.mrf.mxu0
        %1938 = vmatprep.mubr.f32.mxu0 0.0
        %1939 = vmatmul.mubr.f32.gmra.mxu0 %v1816
        %v1940 = vpop.f32.mrf.mxu0
        %v1941 = vadd.f32 %v1867, %v1940
        %v1942 = vpop.f32.mrf.mxu0
        %1943 = vmatprep.mubr.f32.mxu0 0.0
        %1944 = vmatmul.mubr.f32.gmra.mxu0 %v1817
        %v1945 = vpop.f32.mrf.mxu0
        %v1946 = vadd.f32 %v1867, %v1945
        %v1947 = vpop.f32.mrf.mxu0
        %1948 = vmatprep.mubr.f32.mxu0 0.0
        %1949 = vmatmul.mubr.f32.gmra.mxu0 %v1818
        %v1950 = vpop.f32.mrf.mxu0
        %v1951 = vadd.f32 %v1867, %v1950
        %v1952 = vpop.f32.mrf.mxu0
        %1953 = vmatprep.mubr.f32.mxu0 0.0
        %1954 = vmatmul.mubr.f32.gmra.mxu0 %v1819
        %v1955 = vpop.f32.mrf.mxu0
        %v1956 = vadd.f32 %v1867, %v1955
        %v1957 = vpop.f32.mrf.mxu0
        %1958 = vmatprep.mubr.f32.mxu0 0.0
        %1959 = vmatmul.mubr.f32.gmra.mxu0 %v1820
        %v1960 = vpop.f32.mrf.mxu0
        %v1961 = vadd.f32 %v1867, %v1960
        %v1962 = vpop.f32.mrf.mxu0
        %1963 = vmatprep.mubr.f32.mxu0 0.0
        %1964 = vmatmul.mubr.f32.gmra.mxu0 %v1821
        %v1965 = vpop.f32.mrf.mxu0
        %v1966 = vadd.f32 %v1867, %v1965
        %v1967 = vpop.f32.mrf.mxu0
        %1968 = vmatprep.mubr.f32.mxu0 0.0
        %1969 = vmatmul.mubr.f32.gmra.mxu0 %v1822
        %v1970 = vpop.f32.mrf.mxu0
        %v1971 = vadd.f32 %v1867, %v1970
        %v1972 = vpop.f32.mrf.mxu0
        %1973 = vmatprep.mubr.f32.mxu0 0.0
        %1974 = vmatmul.mubr.f32.gmra.mxu0 %v1823
        %v1975 = vpop.f32.mrf.mxu0
        %v1976 = vadd.f32 %v1867, %v1975
        %v1977 = vpop.f32.mrf.mxu0
        %1978 = vmatprep.mubr.f32.mxu0 0.0
        %1979 = vmatmul.mubr.f32.gmra.mxu0 %v1824
        %v1980 = vpop.f32.mrf.mxu0
        %v1981 = vadd.f32 %v1867, %v1980
        %v1982 = vpop.f32.mrf.mxu0
        %1983 = vmatprep.mubr.f32.mxu0 0.0
        %1984 = vmatmul.mubr.f32.gmra.mxu0 %v1825
        %v1985 = vpop.f32.mrf.mxu0
        %v1986 = vadd.f32 %v1867, %v1985
        %v1987 = vpop.f32.mrf.mxu0
        %1988 = vmatprep.mubr.f32.mxu0 0.0
        %1989 = vmatmul.mubr.f32.gmra.mxu0 %v1826
        %v1990 = vpop.f32.mrf.mxu0
        %v1991 = vadd.f32 %v1867, %v1990
        %v1992 = vpop.f32.mrf.mxu0
        %1993 = vmatprep.mubr.f32.mxu0 0.0
        %1994 = vmatmul.mubr.f32.gmra.mxu0 %v1827
        %v1995 = vpop.f32.mrf.mxu0
        %v1996 = vadd.f32 %v1867, %v1995
        %v1997 = vpop.f32.mrf.mxu0
        %1998 = vmatprep.mubr.f32.mxu0 0.0
        %1999 = vmatmul.mubr.f32.gmra.mxu0 %v1828
        %v2000 = vpop.f32.mrf.mxu0
        %v2001 = vadd.f32 %v1867, %v2000
        %v2002 = vpop.f32.mrf.mxu0
        %2003 = vmatprep.mubr.f32.mxu0 0.0
        %2004 = vmatmul.mubr.f32.gmra.mxu0 %v1829
        %v2005 = vpop.f32.mrf.mxu0
        %v2006 = vadd.f32 %v1867, %v2005
        %v2007 = vpop.f32.mrf.mxu0
        %2008 = vmatprep.mubr.f32.mxu0 0.0
        %2009 = vmatmul.mubr.f32.gmra.mxu0 %v1830
        %v2010 = vpop.f32.mrf.mxu0
        %v2011 = vadd.f32 %v1867, %v2010
        %v2012 = vpop.f32.mrf.mxu0
        %2013 = vmatprep.mubr.f32.mxu0 0.0
        %2014 = vmatmul.mubr.f32.gmra.mxu0 %v1831
        %v2015 = vpop.f32.mrf.mxu0
        %v2016 = vadd.f32 %v1867, %v2015
        %v2017 = vpop.f32.mrf.mxu0
        %2018 = vmatprep.mubr.f32.mxu0 0.0
        %2019 = vmatmul.mubr.f32.gmra.mxu0 %v1832
        %v2020 = vpop.f32.mrf.mxu0
        %v2021 = vadd.f32 %v1867, %v2020
        %v2022 = vpop.f32.mrf.mxu0
        %2023 = vmatprep.mubr.f32.mxu0 0.0
        %2024 = vmatmul.mubr.f32.gmra.mxu0 %v1833
        %v2025 = vpop.f32.mrf.mxu0
        %v2026 = vadd.f32 %v1867, %v2025
        %v2027 = vpop.f32.mrf.mxu0
        %2028 = vmatprep.mubr.f32.mxu0 0.0
        %2029 = vmatmul.mubr.f32.gmra.mxu0 %v1834
        %v2030 = vpop.f32.mrf.mxu0
        %v2031 = vadd.f32 %v1867, %v2030
        %v2032 = vpop.f32.mrf.mxu0
        %2033 = vmatprep.mubr.f32.mxu0 0.0
        %2034 = vmatmul.mubr.f32.gmra.mxu0 %v1835
        %v2035 = vpop.f32.mrf.mxu0
        %v2036 = vadd.f32 %v1867, %v2035
        %v2037 = vpop.f32.mrf.mxu0
        %2038 = vmatprep.mubr.f32.mxu0 0.0
        %2039 = vmatmul.mubr.f32.gmra.mxu0 %v1836
        %v2040 = vpop.f32.mrf.mxu0
        %v2041 = vadd.f32 %v1867, %v2040
        %v2042 = vpop.f32.mrf.mxu0
        %2043 = vmatprep.mubr.f32.mxu0 0.0
        %2044 = vmatmul.mubr.f32.gmra.mxu0 %v1837
        %v2045 = vpop.f32.mrf.mxu0
        %v2046 = vadd.f32 %v1867, %v2045
        %v2047 = vpop.f32.mrf.mxu0
        %2048 = vmatprep.mubr.f32.mxu0 0.0
        %2049 = vmatmul.mubr.f32.gmra.mxu0 %v1838
        %v2050 = vpop.f32.mrf.mxu0
        %v2051 = vadd.f32 %v1867, %v2050
        %v2052 = vpop.f32.mrf.mxu0
        %2053 = vmatprep.mubr.f32.mxu0 0.0
        %2054 = vmatmul.mubr.f32.gmra.mxu0 %v1839
        %v2055 = vpop.f32.mrf.mxu0
        %v2056 = vadd.f32 %v1867, %v2055
        %v2057 = vpop.f32.mrf.mxu0
        %2058 = vmatprep.mubr.f32.mxu0 0.0
        %2059 = vmatmul.mubr.f32.gmra.mxu0 %v1840
        %v2060 = vpop.f32.mrf.mxu0
        %v2061 = vadd.f32 %v1867, %v2060
        %v2062 = vpop.f32.mrf.mxu0
        %2063 = vmatprep.mubr.f32.mxu0 0.0
        %2064 = vmatmul.mubr.f32.gmra.mxu0 %v1841
        %v2065 = vpop.f32.mrf.mxu0
        %v2066 = vadd.f32 %v1867, %v2065
        %v2067 = vpop.f32.mrf.mxu0
        %2068 = vmatprep.mubr.f32.mxu0 0.0
        %2069 = vmatmul.mubr.f32.gmra.mxu0 %v1842
        %v2070 = vpop.f32.mrf.mxu0
        %v2071 = vadd.f32 %v1867, %v2070
        %v2072 = vpop.f32.mrf.mxu0
        %2073 = vmatprep.mubr.f32.mxu0 0.0
        %2074 = vmatmul.mubr.f32.gmra.mxu0 %v1843
        %v2075 = vpop.f32.mrf.mxu0
        %v2076 = vadd.f32 %v1867, %v2075
        %v2077 = vpop.f32.mrf.mxu0
        %2078 = vmatprep.mubr.f32.mxu0 0.0
        %2079 = vmatmul.mubr.f32.gmra.mxu0 %v1844
        %v2080 = vpop.f32.mrf.mxu0
        %v2081 = vadd.f32 %v1867, %v2080
        %v2082 = vpop.f32.mrf.mxu0
        %2083 = vmatprep.mubr.f32.mxu0 0.0
        %2084 = vmatmul.mubr.f32.gmra.mxu0 %v1845
        %v2085 = vpop.f32.mrf.mxu0
        %v2086 = vadd.f32 %v1867, %v2085
        %v2087 = vpop.f32.mrf.mxu0
        %2088 = vmatprep.mubr.f32.mxu0 0.0
        %2089 = vmatmul.mubr.f32.gmra.mxu0 %v1846
        %v2090 = vpop.f32.mrf.mxu0
        %v2091 = vadd.f32 %v1867, %v2090
        %v2092 = vpop.f32.mrf.mxu0
        %2093 = vdwg.mxu0
        %v2094 = vmax.f32 %v1936, 0.0
        %v2095 = vmax.f32 %v1941, 0.0
        %v2096 = vmax.f32 %v1946, 0.0
        %v2097 = vmax.f32 %v1951, 0.0
        %v2098 = vmax.f32 %v1956, 0.0
        %v2099 = vmax.f32 %v1961, 0.0
        %v2100 = vmax.f32 %v1966, 0.0
        %v2101 = vmax.f32 %v1971, 0.0
        %v2102 = vmax.f32 %v1976, 0.0
        %v2103 = vmax.f32 %v1981, 0.0
        %v2104 = vmax.f32 %v1986, 0.0
        %v2105 = vmax.f32 %v1991, 0.0
        %v2106 = vmax.f32 %v1996, 0.0
        %v2107 = vmax.f32 %v2001, 0.0
        %v2108 = vmax.f32 %v2006, 0.0
        %v2109 = vmax.f32 %v2011, 0.0
        %v2110 = vmax.f32 %v2016, 0.0
        %v2111 = vmax.f32 %v2021, 0.0
        %v2112 = vmax.f32 %v2026, 0.0
        %v2113 = vmax.f32 %v2031, 0.0
        %v2114 = vmax.f32 %v2036, 0.0
        %v2115 = vmax.f32 %v2041, 0.0
        %v2116 = vmax.f32 %v2046, 0.0
        %v2117 = vmax.f32 %v2051, 0.0
        %v2118 = vmax.f32 %v2056, 0.0
        %v2119 = vmax.f32 %v2061, 0.0
        %v2120 = vmax.f32 %v2066, 0.0
        %v2121 = vmax.f32 %v2071, 0.0
        %v2122 = vmax.f32 %v2076, 0.0
        %v2123 = vmax.f32 %v2081, 0.0
        %v2124 = vmax.f32 %v2086, 0.0
        %v2125 = vmax.f32 %v2091, 0.0
        %v2126 = vmin.f32 %v2094, 6.0
        %v2127 = vmin.f32 %v2095, 6.0
        %v2128 = vmin.f32 %v2096, 6.0
        %v2129 = vmin.f32 %v2097, 6.0
        %v2130 = vmin.f32 %v2098, 6.0
        %v2131 = vmin.f32 %v2099, 6.0
        %v2132 = vmin.f32 %v2100, 6.0
        %v2133 = vmin.f32 %v2101, 6.0
        %v2134 = vmin.f32 %v2102, 6.0
        %v2135 = vmin.f32 %v2103, 6.0
        %v2136 = vmin.f32 %v2104, 6.0
        %v2137 = vmin.f32 %v2105, 6.0
        %v2138 = vmin.f32 %v2106, 6.0
        %v2139 = vmin.f32 %v2107, 6.0
        %v2140 = vmin.f32 %v2108, 6.0
        %v2141 = vmin.f32 %v2109, 6.0
        %v2142 = vmin.f32 %v2110, 6.0
        %v2143 = vmin.f32 %v2111, 6.0
        %v2144 = vmin.f32 %v2112, 6.0
        %v2145 = vmin.f32 %v2113, 6.0
        %v2146 = vmin.f32 %v2114, 6.0
        %v2147 = vmin.f32 %v2115, 6.0
        %v2148 = vmin.f32 %v2116, 6.0
        %v2149 = vmin.f32 %v2117, 6.0
        %v2150 = vmin.f32 %v2118, 6.0
        %v2151 = vmin.f32 %v2119, 6.0
        %v2152 = vmin.f32 %v2120, 6.0
        %v2153 = vmin.f32 %v2121, 6.0
        %v2154 = vmin.f32 %v2122, 6.0
        %v2155 = vmin.f32 %v2123, 6.0
        %v2156 = vmin.f32 %v2124, 6.0
        %v2157 = vmin.f32 %v2125, 6.0
        %2158 = vst [vmem:[%s163] sm:$0xff] %v2126
        %2159 = vst [vmem:[%s163 + $0x8] sm:$0xff] %v2127
        %2160 = vst [vmem:[%s163 + $0x10] sm:$0xff] %v2128
        %2161 = vst [vmem:[%s163 + $0x18] sm:$0xff] %v2129
        %2162 = vst [vmem:[%s163 + $0x20] sm:$0xff] %v2130
        %2163 = vst [vmem:[%s163 + $0x28] sm:$0xff] %v2131
        %2164 = vst [vmem:[%s163 + $0x30] sm:$0xff] %v2132
        %2165 = vst [vmem:[%s163 + $0x38] sm:$0xff] %v2133
        %2166 = vst [vmem:[%s163 + $0x40] sm:$0xff] %v2134
        %2167 = vst [vmem:[%s163 + $0x48] sm:$0xff] %v2135
        %2168 = vst [vmem:[%s163 + $0x50] sm:$0xff] %v2136
        %2169 = vst [vmem:[%s163 + $0x58] sm:$0xff] %v2137
        %2170 = vst [vmem:[%s163 + $0x60] sm:$0xff] %v2138
        %2171 = vst [vmem:[%s163 + $0x68] sm:$0xff] %v2139
        %2172 = vst [vmem:[%s163 + $0x70] sm:$0xff] %v2140
        %2173 = vst [vmem:[%s163 + $0x78] sm:$0xff] %v2141
        %2174 = vst [vmem:[%s163 + $0x80] sm:$0xff] %v2142
        %2175 = vst [vmem:[%s163 + $0x88] sm:$0xff] %v2143
        %2176 = vst [vmem:[%s163 + $0x90] sm:$0xff] %v2144
        %2177 = vst [vmem:[%s163 + $0x98] sm:$0xff] %v2145
        %2178 = vst [vmem:[%s163 + $0xa0] sm:$0xff] %v2146
        %2179 = vst [vmem:[%s163 + $0xa8] sm:$0xff] %v2147
        %2180 = vst [vmem:[%s163 + $0xb0] sm:$0xff] %v2148
        %2181 = vst [vmem:[%s163 + $0xb8] sm:$0xff] %v2149
        %2182 = vst [vmem:[%s163 + $0xc0] sm:$0xff] %v2150
        %2183 = vst [vmem:[%s163 + $0xc8] sm:$0xff] %v2151
        %2184 = vst [vmem:[%s163 + $0xd0] sm:$0xff] %v2152
        %2185 = vst [vmem:[%s163 + $0xd8] sm:$0xff] %v2153
        %2186 = vst [vmem:[%s163 + $0xe0] sm:$0xff] %v2154
        %2187 = vst [vmem:[%s163 + $0xe8] sm:$0xff] %v2155
        %2188 = vst [vmem:[%s163 + $0xf0] sm:$0xff] %v2156
        %2189 = vst [vmem:[%s163 + $0xf8] sm:$0xff] %v2157
        %s2190 = sand.u32 %s93, 1
        %s2191 = scalar_lea.sflag [#allocation4], %s2190
        %s2192 = sand.u32 %s93, 1
        %s2193 = smul.addr %s2192, 256
        %s2194 = scalar_lea.vmem [#allocation3], %s2193
        // Predicated region
        $region33: #{tpu_custom_call.1} parent=31 // pred_check
          %p2195 = pneg %p103
        $region34: #{tpu_custom_call.1} parent=31 // pred_check_branch
          %2197 = sbr.rel (%p2195) target = $region36
        $region35: #{tpu_custom_call.1} parent=31 // pred_region
          %s2198 = smul.u32 32, %s17
          %s2200 = ssub.s32 4096, 4096
          %2201 = vsyncadd %s2191, %s2200
          %s2202 = smul.addr %s2198, 128
          %s2203 = scalar_lea.hbm %s3, %s2202
          %s2204 = sshll.u32 %s2194, 4
          %s2205 = int_to_ptr.vmem [resolvable:$true] %s2204
          %2210 = dma.vmem_to_hbm [thread:$0]  %s2205, 4096, %s2203, %s2191, 128, 128, 8
        $region36: #{tpu_custom_call.1} parent=31 // pred_fallthru
          _
      $region32: #{tpu_custom_call.1} parent=5 // pred_fallthru
        _
      %p2211 = scmp.le.s32.totalorder 2, %s12
      // Predicated region
      $region37: #{tpu_custom_call.1} parent=5 // pred_check
        %p2212 = pneg %p2211
      $region38: #{tpu_custom_call.1} parent=5 // pred_check_branch
        %2214 = sbr.rel (%p2212) target = $region40
      $region39: #{tpu_custom_call.1} parent=5 // pred_region
        %s2215 = ssub.s32 %s12, 2
        // Predicated region
        $region41: #{tpu_custom_call.1} parent=39 // pred_check
          %p2216 = pneg %p109
        $region42: #{tpu_custom_call.1} parent=39 // pred_check_branch
          %2218 = sbr.rel (%p2216) target = $region44
        $region43: #{tpu_custom_call.1} parent=39 // pred_region
          %s2219 = sand.u32 %s94, 1
          %s2220 = scalar_lea.sflag [#allocation4], %s2219
          %s2221 = sand.u32 %s94, 1
          %s2222 = smul.addr %s2221, 256
          %s2223 = scalar_lea.vmem [#allocation3], %s2222
          %2224 = dma.done %s2220, 4096
        $region44: #{tpu_custom_call.1} parent=39 // pred_fallthru
          _
      $region40: #{tpu_custom_call.1} parent=5 // pred_fallthru
        _
    $region6: #{tpu_custom_call.1} parent=1 // loop_footer
      %s16 = sadd.s32 1, %s12
    $region7: #{tpu_custom_call.1} parent=1 // loop_footer_branch
      %11 = sbr.rel target = $region3
    $region8: #{tpu_custom_call.1} parent=1 // loop_exit
      _
    %2225 = vsyncpa [#allocation4], 1
    %s2226 = scalar_lea.sflag [#allocation4], 1
    %2227 = vsyncpa %s2226, 1

// kernel: tpu_custom_call.1
$region0: #{tpu_custom_call.1}
  #allocation0 [shape = 'u32[]', space=smem, size = 0x4, offset = 0x4, fixed_abs, tag = 'smem constant byte address 0x4 - core index']
  #allocation1 [shape = 'u32[144,128]{1,0:T(1,128)}', space=vmem, size = 0x12000, scoped, tag = 'internal scratch']
  #allocation2 [shape = 'f32[256,128]{1,0:T(8,128)}', space=vmem, size = 0x20000, scoped, tag = 'scratch operand']
  %s0 = inlined_call_operand.vmem [shape: f32[2,18,18,4], index: 0, kind: input, shape index: {}]
  %s1 = inlined_call_operand.vmem [shape: f32[128,128], index: 1, kind: input, shape index: {}]
  %s2 = inlined_call_operand.vmem [shape: f32[1,128], index: 2, kind: input, shape index: {}]
  %s3 = inlined_call_operand.hbm [shape: f32[512,128], index: 3, kind: output, shape index: {}]
  %s4 = sld [smem:[#allocation0]]
  $region45: #{tpu_custom_call.1} parent=0
    _
  %s6 = ssub.s32 1, %s4
  %s7 = scalar_select 0, %s6, %s4
  $region1: #{tpu_custom_call.1} parent=0
    #allocation3 [shape = 'u8[262144]{0}', space=vmem, size = 0x40000, scoped, tag = 'output window, operand 0']
    #allocation4 [shape = 's32[2]{0}', space=sflag, size = 0x8, scoped, tag = 'scoped memory for tpu_custom_call.1']
    %8 = vsyncpa [#allocation4], 0
    %s9 = scalar_lea.sflag [#allocation4], 1
    %10 = vsyncpa %s9, 0
    loop: start=0, step=1, limit=4
    $region2: #{tpu_custom_call.1} parent=1 // loop_pre_header
      _
    $region3: #{tpu_custom_call.1} parent=1 // loop_header
      %s12 = sphi 0, %s16
      %p13 = scmp.ge.s32.totalorder %s12, 4
      %s22 = sphi 0, %s24
      %s25 = sphi 0, %s22
      %s26 = sphi 0, %s25
      %s42 = sphi 0, %s26
      %s46 = sphi 0, %s46
      %s48 = sphi 0, %s46
      %s49 = sphi 0, %s48
      %s63 = sphi 0, %s49
      %s67 = sphi 0, %s67
      %s69 = sphi 0, %s67
      %s70 = sphi 0, %s69
      %s84 = sphi 0, %s70
      %s90 = sphi 0, %s92
      %s93 = sphi 0, %s90
      %s94 = sphi 0, %s93
      %s110 = sphi 0, %s94
    $region4: #{tpu_custom_call.1} parent=1 // loop_header_branch
      %15 = sbr.rel (%p13) target = $region8
    $region5: #{tpu_custom_call.1} parent=1 // loop_body
      %s17 = ssub.s32 %s12, 1
      %s18 = ssub.s32 %s12, 2
      %s19 = sadd.s32 %s12, 1
      %s20 = ssub.s32 %s12, %s19
      %p21 = scmp.eq.s32.totalorder %s20, 0
      %s23 = sadd.s32 %s22, 1
      %s24 = scalar_select %p21, %s22, %s23
      %p27 = pneg %p21
      %p28 = scmp.eq.s32.totalorder %s12, 1
      %p29 = por %p27, %p28
      %p30 = scmp.ne.s32.totalorder %s22, %s25
      %p31 = scmp.eq.s32.totalorder %s12, 0
      %p32 = por %p30, %p31
      %p33 = scmp.ne.s32.totalorder %s22, %s25
      %p34 = scmp.eq.s32.totalorder %s17, 1
      %p35 = por %p33, %p34
      %p36 = scmp.ne.s32.totalorder %s25, %s26
      %p37 = scmp.eq.s32.totalorder %s17, 0
      %p38 = por %p36, %p37
      %p39 = scmp.ne.s32.totalorder %s25, %s26
      %p40 = scmp.eq.s32.totalorder %s18, 1
      %p41 = por %p39, %p40
      %p43 = scmp.ne.s32.totalorder %s26, %s42
      %p44 = scmp.eq.s32.totalorder %s18, 0
      %p45 = por %p43, %p44
      %s47 = sadd.s32 %s46, 1
      %p50 = scmp.eq.s32.totalorder %s12, 1
      %p51 = scmp.ne.s32.totalorder %s46, %s48
      %p52 = scmp.eq.s32.totalorder %s12, 0
      %p53 = por %p51, %p52
      %p54 = scmp.ne.s32.totalorder %s46, %s48
      %p55 = scmp.eq.s32.totalorder %s17, 1
      %p56 = por %p54, %p55
      %p57 = scmp.ne.s32.totalorder %s48, %s49
      %p58 = scmp.eq.s32.totalorder %s17, 0
      %p59 = por %p57, %p58
      %p60 = scmp.ne.s32.totalorder %s48, %s49
      %p61 = scmp.eq.s32.totalorder %s18, 1
      %p62 = por %p60, %p61
      %p64 = scmp.ne.s32.totalorder %s49, %s63
      %p65 = scmp.eq.s32.totalorder %s18, 0
      %p66 = por %p64, %p65
      %s68 = sadd.s32 %s67, 1
      %p71 = scmp.eq.s32.totalorder %s12, 1
      %p72 = scmp.ne.s32.totalorder %s67, %s69
      %p73 = scmp.eq.s32.totalorder %s12, 0
      %p74 = por %p72, %p73
      %p75 = scmp.ne.s32.totalorder %s67, %s69
      %p76 = scmp.eq.s32.totalorder %s17, 1
      %p77 = por %p75, %p76
      %p78 = scmp.ne.s32.totalorder %s69, %s70
      %p79 = scmp.eq.s32.totalorder %s17, 0
      %p80 = por %p78, %p79
      %p81 = scmp.ne.s32.totalorder %s69, %s70
      %p82 = scmp.eq.s32.totalorder %s18, 1
      %p83 = por %p81, %p82
      %p85 = scmp.ne.s32.totalorder %s70, %s84
      %p86 = scmp.eq.s32.totalorder %s18, 0
      %p87 = por %p85, %p86
      %s88 = ssub.s32 %s12, %s19
      %p89 = scmp.eq.s32.totalorder %s88, 0
      %s91 = sadd.s32 %s90, 1
      %s92 = scalar_select %p89, %s90, %s91
      %p95 = pneg %p89
      %p96 = scmp.eq.s32.totalorder %s12, 1
      %p97 = por %p95, %p96
      %p98 = scmp.ne.s32.totalorder %s90, %s93
      %p99 = scmp.eq.s32.totalorder %s12, 0
      %p100 = por %p98, %p99
      %p101 = scmp.ne.s32.totalorder %s90, %s93
      %p102 = scmp.eq.s32.totalorder %s17, 1
      %p103 = por %p101, %p102
      %p104 = scmp.ne.s32.totalorder %s93, %s94
      %p105 = scmp.eq.s32.totalorder %s17, 0
      %p106 = por %p104, %p105
      %p107 = scmp.ne.s32.totalorder %s93, %s94
      %p108 = scmp.eq.s32.totalorder %s18, 1
      %p109 = por %p107, %p108
      %p111 = scmp.ne.s32.totalorder %s94, %s110
      %p112 = scmp.eq.s32.totalorder %s18, 0
      %p113 = por %p111, %p112
      %p114 = scmp.le.s32.totalorder 1, %s12
      %p115 = scmp.lt.s32.totalorder %s12, 3
      %p116 = pnand %p114, %p115
      %p117 = pneg %p116
      // Predicated region
      $region9: #{tpu_custom_call.1} parent=5 // pred_check
        _
      $region10: #{tpu_custom_call.1} parent=5 // pred_check_branch
        %119 = sbr.rel (%p116) target = $region12
      $region11: #{tpu_custom_call.1} parent=5 // pred_region
        %s120 = ssub.s32 %s12, 1
        // Predicated region
        $region13: #{tpu_custom_call.1} parent=11 // pred_check
          %p121 = pneg %p59
        $region14: #{tpu_custom_call.1} parent=11 // pred_check_branch
          %123 = sbr.rel (%p121) target = $region16
        $region15: #{tpu_custom_call.1} parent=11 // pred_region
          _
        $region16: #{tpu_custom_call.1} parent=11 // pred_fallthru
          _
        // Predicated region
        $region17: #{tpu_custom_call.1} parent=11 // pred_check
          %p124 = pneg %p80
        $region18: #{tpu_custom_call.1} parent=11 // pred_check_branch
          %126 = sbr.rel (%p124) target = $region20
        $region19: #{tpu_custom_call.1} parent=11 // pred_region
          _
        $region20: #{tpu_custom_call.1} parent=11 // pred_fallthru
          _
      $region12: #{tpu_custom_call.1} parent=5 // pred_fallthru
        _
      %p127 = scmp.lt.s32.totalorder %s12, 2
      // Predicated region
      $region21: #{tpu_custom_call.1} parent=5 // pred_check
        %p128 = pneg %p127
      $region22: #{tpu_custom_call.1} parent=5 // pred_check_branch
        %130 = sbr.rel (%p128) target = $region24
      $region23: #{tpu_custom_call.1} parent=5 // pred_region
        // Predicated region
        $region25: #{tpu_custom_call.1} parent=23 // pred_check
          %p131 = pneg %p32
        $region26: #{tpu_custom_call.1} parent=23 // pred_check_branch
          %133 = sbr.rel (%p131) target = $region28
        $region27: #{tpu_custom_call.1} parent=23 // pred_region
          %p134 = scmp.lt.s32.totalorder %s12, 1
          %s135 = scalar_select %p134, %s12, 1
          %s136 = smul.addr %s135, 54
          %s137 = smul.addr %s136, 8
          %s138 = scalar_lea.vmem %s0, %s137
        $region28: #{tpu_custom_call.1} parent=23 // pred_fallthru
          _
      $region24: #{tpu_custom_call.1} parent=5 // pred_fallthru
        _
      %p139 = scmp.le.s32.totalorder 1, %s12
      %p140 = scmp.lt.s32.totalorder %s12, 3
      %p141 = pnand %p139, %p140
      %p142 = pneg %p141
      // Predicated region
      $region29: #{tpu_custom_call.1} parent=5 // pred_check
        _
      $region30: #{tpu_custom_call.1} parent=5 // pred_check_branch
        %144 = sbr.rel (%p141) target = $region32
      $region31: #{tpu_custom_call.1} parent=5 // pred_region
        %s145 = ssub.s32 %s12, 1
        %p146 = scmp.lt.s32.totalorder %s17, 1
        %s147 = scalar_select %p146, %s17, 1
        %s148 = smul.addr %s147, 54
        %s149 = smul.addr %s148, 8
        %s150 = scalar_lea.vmem %s0, %s149
        %p151 = pneg %p38
        %p152 = pneg %p35
        %p153 = pneg %p59
        %p154 = pneg %p56
        %p155 = pneg %p80
        %p156 = pneg %p77
        %p157 = pneg %p106
        %p158 = pneg %p103
        %s159 = sand.u32 %s93, 1
        %s160 = scalar_lea.sflag [#allocation4], %s159
        %s161 = sand.u32 %s93, 1
        %s162 = smul.addr %s161, 256
        %s163 = scalar_lea.vmem [#allocation3], %s162
        %p164 = scmp.lt.s32.totalorder %s17, 1
        %s165 = scalar_select %p164, %s17, 1
        %s166 = smul.addr %s165, 54
        %s167 = smul.addr %s166, 8
        %s168 = scalar_lea.vmem %s0, %s167
        %s169 = smul.u32 32, %s17
        %vm170 = vcmask 1047840
        %171 = vst.msk [vmem:[#allocation2] sm:$0xff] %vm170, 0.0
        %172 = vst.msk [vmem:[#allocation2 + $0x8] sm:$0xff] %vm170, 0.0
        %173 = vst.msk [vmem:[#allocation2 + $0x10] sm:$0xff] %vm170, 0.0
        %174 = vst.msk [vmem:[#allocation2 + $0x18] sm:$0xff] %vm170, 0.0
        %175 = vst.msk [vmem:[#allocation2 + $0x20] sm:$0xff] %vm170, 0.0
        %176 = vst.msk [vmem:[#allocation2 + $0x28] sm:$0xff] %vm170, 0.0
        %177 = vst.msk [vmem:[#allocation2 + $0x30] sm:$0xff] %vm170, 0.0
        %178 = vst.msk [vmem:[#allocation2 + $0x38] sm:$0xff] %vm170, 0.0
        %179 = vst.msk [vmem:[#allocation2 + $0x40] sm:$0xff] %vm170, 0.0
        %180 = vst.msk [vmem:[#allocation2 + $0x48] sm:$0xff] %vm170, 0.0
        %181 = vst.msk [vmem:[#allocation2 + $0x50] sm:$0xff] %vm170, 0.0
        %182 = vst.msk [vmem:[#allocation2 + $0x58] sm:$0xff] %vm170, 0.0
        %183 = vst.msk [vmem:[#allocation2 + $0x60] sm:$0xff] %vm170, 0.0
        %184 = vst.msk [vmem:[#allocation2 + $0x68] sm:$0xff] %vm170, 0.0
        %185 = vst.msk [vmem:[#allocation2 + $0x70] sm:$0xff] %vm170, 0.0
        %186 = vst.msk [vmem:[#allocation2 + $0x78] sm:$0xff] %vm170, 0.0
        %187 = vst.msk [vmem:[#allocation2 + $0x80] sm:$0xff] %vm170, 0.0
        %188 = vst.msk [vmem:[#allocation2 + $0x88] sm:$0xff] %vm170, 0.0
        %189 = vst.msk [vmem:[#allocation2 + $0x90] sm:$0xff] %vm170, 0.0
        %190 = vst.msk [vmem:[#allocation2 + $0x98] sm:$0xff] %vm170, 0.0
        %191 = vst.msk [vmem:[#allocation2 + $0xa0] sm:$0xff] %vm170, 0.0
        %192 = vst.msk [vmem:[#allocation2 + $0xa8] sm:$0xff] %vm170, 0.0
        %193 = vst.msk [vmem:[#allocation2 + $0xb0] sm:$0xff] %vm170, 0.0
        %194 = vst.msk [vmem:[#allocation2 + $0xb8] sm:$0xff] %vm170, 0.0
        %195 = vst.msk [vmem:[#allocation2 + $0xc0] sm:$0xff] %vm170, 0.0
        %196 = vst.msk [vmem:[#allocation2 + $0xc8] sm:$0xff] %vm170, 0.0
        %197 = vst.msk [vmem:[#allocation2 + $0xd0] sm:$0xff] %vm170, 0.0
        %198 = vst.msk [vmem:[#allocation2 + $0xd8] sm:$0xff] %vm170, 0.0
        %199 = vst.msk [vmem:[#allocation2 + $0xe0] sm:$0xff] %vm170, 0.0
        %200 = vst.msk [vmem:[#allocation2 + $0xe8] sm:$0xff] %vm170, 0.0
        %201 = vst.msk [vmem:[#allocation2 + $0xf0] sm:$0xff] %vm170, 0.0
        %202 = vst.msk [vmem:[#allocation2 + $0xf8] sm:$0xff] %vm170, 0.0
        %v203 = vld [vmem:[%s168] sm:$0xff]
        %v204 = vld [vmem:[%s168 + $0x8] sm:$0xff]
        %v205 = vld [vmem:[%s168 + $0x18] sm:$0xff]
        %v206 = vld [vmem:[%s168 + $0x20] sm:$0xff]
        %v207 = vld [vmem:[%s168 + $0x30] sm:$0xff]
        %v208 = vld [vmem:[%s168 + $0x38] sm:$0xff]
        %v209 = vld [vmem:[%s168 + $0x48] sm:$0xff]
        %v210 = vld [vmem:[%s168 + $0x50] sm:$0xff]
        %v211 = vld [vmem:[%s168 + $0x60] sm:$0xff]
        %v212 = vld [vmem:[%s168 + $0x68] sm:$0xff]
        %v213 = vld [vmem:[%s168 + $0x78] sm:$0xff]
        %v214 = vld [vmem:[%s168 + $0x80] sm:$0xff]
        %v215 = vld [vmem:[%s168 + $0x90] sm:$0xff]
        %v216 = vld [vmem:[%s168 + $0x98] sm:$0xff]
        %v217 = vld [vmem:[%s168 + $0xa8] sm:$0xff]
        %v218 = vld [vmem:[%s168 + $0xb0] sm:$0xff]
        %v219 = vld [vmem:[%s168 + $0xc0] sm:$0xff]
        %v220 = vld [vmem:[%s168 + $0xc8] sm:$0xff]
        %v221 = vld [vmem:[%s168 + $0xd8] sm:$0xff]
        %v222 = vld [vmem:[%s168 + $0xe0] sm:$0xff]
        %v223 = vld [vmem:[%s168 + $0xf0] sm:$0xff]
        %v224 = vld [vmem:[%s168 + $0xf8] sm:$0xff]
        %v225 = vld [vmem:[%s168 + $0x108] sm:$0xff]
        %v226 = vld [vmem:[%s168 + $0x110] sm:$0xff]
        %v227 = vld [vmem:[%s168 + $0x120] sm:$0xff]
        %v228 = vld [vmem:[%s168 + $0x128] sm:$0xff]
        %v229 = vld [vmem:[%s168 + $0x138] sm:$0xff]
        %v230 = vld [vmem:[%s168 + $0x140] sm:$0xff]
        %v231 = vld [vmem:[%s168 + $0x150] sm:$0xff]
        %v232 = vld [vmem:[%s168 + $0x158] sm:$0xff]
        %v233 = vld [vmem:[%s168 + $0x168] sm:$0xff]
        %v234 = vld [vmem:[%s168 + $0x170] sm:$0xff]
        %vm235 = vcmask 31744
        %236 = vst.msk [vmem:[#allocation2] sm:$0xff] %vm235, %v203
        %237 = vst.msk [vmem:[#allocation2 + $0x8] sm:$0xff] %vm235, %v204
        %238 = vst.msk [vmem:[#allocation2 + $0x10] sm:$0xff] %vm235, %v205
        %239 = vst.msk [vmem:[#allocation2 + $0x18] sm:$0xff] %vm235, %v206
        %240 = vst.msk [vmem:[#allocation2 + $0x20] sm:$0xff] %vm235, %v207
        %241 = vst.msk [vmem:[#allocation2 + $0x28] sm:$0xff] %vm235, %v208
        %242 = vst.msk [vmem:[#allocation2 + $0x30] sm:$0xff] %vm235, %v209
        %243 = vst.msk [vmem:[#allocation2 + $0x38] sm:$0xff] %vm235, %v210
        %244 = vst.msk [vmem:[#allocation2 + $0x40] sm:$0xff] %vm235, %v211
        %245 = vst.msk [vmem:[#allocation2 + $0x48] sm:$0xff] %vm235, %v212
        %246 = vst.msk [vmem:[#allocation2 + $0x50] sm:$0xff] %vm235, %v213
        %247 = vst.msk [vmem:[#allocation2 + $0x58] sm:$0xff] %vm235, %v214
        %248 = vst.msk [vmem:[#allocation2 + $0x60] sm:$0xff] %vm235, %v215
        %249 = vst.msk [vmem:[#allocation2 + $0x68] sm:$0xff] %vm235, %v216
        %250 = vst.msk [vmem:[#allocation2 + $0x70] sm:$0xff] %vm235, %v217
        %251 = vst.msk [vmem:[#allocation2 + $0x78] sm:$0xff] %vm235, %v218
        %252 = vst.msk [vmem:[#allocation2 + $0x80] sm:$0xff] %vm235, %v219
        %253 = vst.msk [vmem:[#allocation2 + $0x88] sm:$0xff] %vm235, %v220
        %254 = vst.msk [vmem:[#allocation2 + $0x90] sm:$0xff] %vm235, %v221
        %255 = vst.msk [vmem:[#allocation2 + $0x98] sm:$0xff] %vm235, %v222
        %256 = vst.msk [vmem:[#allocation2 + $0xa0] sm:$0xff] %vm235, %v223
        %257 = vst.msk [vmem:[#allocation2 + $0xa8] sm:$0xff] %vm235, %v224
        %258 = vst.msk [vmem:[#allocation2 + $0xb0] sm:$0xff] %vm235, %v225
        %259 = vst.msk [vmem:[#allocation2 + $0xb8] sm:$0xff] %vm235, %v226
        %260 = vst.msk [vmem:[#allocation2 + $0xc0] sm:$0xff] %vm235, %v227
        %261 = vst.msk [vmem:[#allocation2 + $0xc8] sm:$0xff] %vm235, %v228
        %262 = vst.msk [vmem:[#allocation2 + $0xd0] sm:$0xff] %vm235, %v229
        %263 = vst.msk [vmem:[#allocation2 + $0xd8] sm:$0xff] %vm235, %v230
        %264 = vst.msk [vmem:[#allocation2 + $0xe0] sm:$0xff] %vm235, %v231
        %265 = vst.msk [vmem:[#allocation2 + $0xe8] sm:$0xff] %vm235, %v232
        %266 = vst.msk [vmem:[#allocation2 + $0xf0] sm:$0xff] %vm235, %v233
        %267 = vst.msk [vmem:[#allocation2 + $0xf8] sm:$0xff] %vm235, %v234
        %v268 = vld [vmem:[%s168 + $0x1] sm:$0xff]
        %v269 = vld [vmem:[%s168 + $0x9] sm:$0xff]
        %v270 = vld [vmem:[%s168 + $0x19] sm:$0xff]
        %v271 = vld [vmem:[%s168 + $0x21] sm:$0xff]
        %v272 = vld [vmem:[%s168 + $0x31] sm:$0xff]
        %v273 = vld [vmem:[%s168 + $0x39] sm:$0xff]
        %v274 = vld [vmem:[%s168 + $0x49] sm:$0xff]
        %v275 = vld [vmem:[%s168 + $0x51] sm:$0xff]
        %v276 = vld [vmem:[%s168 + $0x61] sm:$0xff]
        %v277 = vld [vmem:[%s168 + $0x69] sm:$0xff]
        %v278 = vld [vmem:[%s168 + $0x79] sm:$0xff]
        %v279 = vld [vmem:[%s168 + $0x81] sm:$0xff]
        %v280 = vld [vmem:[%s168 + $0x91] sm:$0xff]
        %v281 = vld [vmem:[%s168 + $0x99] sm:$0xff]
        %v282 = vld [vmem:[%s168 + $0xa9] sm:$0xff]
        %v283 = vld [vmem:[%s168 + $0xb1] sm:$0xff]
        %v284 = vld [vmem:[%s168 + $0xc1] sm:$0xff]
        %v285 = vld [vmem:[%s168 + $0xc9] sm:$0xff]
        %v286 = vld [vmem:[%s168 + $0xd9] sm:$0xff]
        %v287 = vld [vmem:[%s168 + $0xe1] sm:$0xff]
        %v288 = vld [vmem:[%s168 + $0xf1] sm:$0xff]
        %v289 = vld [vmem:[%s168 + $0xf9] sm:$0xff]
        %v290 = vld [vmem:[%s168 + $0x109] sm:$0xff]
        %v291 = vld [vmem:[%s168 + $0x111] sm:$0xff]
        %v292 = vld [vmem:[%s168 + $0x121] sm:$0xff]
        %v293 = vld [vmem:[%s168 + $0x129] sm:$0xff]
        %v294 = vld [vmem:[%s168 + $0x139] sm:$0xff]
        %v295 = vld [vmem:[%s168 + $0x141] sm:$0xff]
        %v296 = vld [vmem:[%s168 + $0x151] sm:$0xff]
        %v297 = vld [vmem:[%s168 + $0x159] sm:$0xff]
        %v298 = vld [vmem:[%s168 + $0x169] sm:$0xff]
        %v299 = vld [vmem:[%s168 + $0x171] sm:$0xff]
        %332 = vrot.lane.b32.xlu0 %v268, 4
        %v333 = vpop.permute.xlu0 %332
        %334 = vrot.lane.b32.xlu0 %v269, 4
        %v335 = vpop.permute.xlu0 %334
        %336 = vrot.lane.b32.xlu0 %v270, 4
        %v337 = vpop.permute.xlu0 %336
        %338 = vrot.lane.b32.xlu0 %v271, 4
        %v339 = vpop.permute.xlu0 %338
        %340 = vrot.lane.b32.xlu0 %v272, 4
        %v341 = vpop.permute.xlu0 %340
        %342 = vrot.lane.b32.xlu0 %v273, 4
        %v343 = vpop.permute.xlu0 %342
        %344 = vrot.lane.b32.xlu0 %v274, 4
        %v345 = vpop.permute.xlu0 %344
        %346 = vrot.lane.b32.xlu0 %v275, 4
        %v347 = vpop.permute.xlu0 %346
        %348 = vrot.lane.b32.xlu0 %v276, 4
        %v349 = vpop.permute.xlu0 %348
        %350 = vrot.lane.b32.xlu0 %v277, 4
        %v351 = vpop.permute.xlu0 %350
        %352 = vrot.lane.b32.xlu0 %v278, 4
        %v353 = vpop.permute.xlu0 %352
        %354 = vrot.lane.b32.xlu0 %v279, 4
        %v355 = vpop.permute.xlu0 %354
        %356 = vrot.lane.b32.xlu0 %v280, 4
        %v357 = vpop.permute.xlu0 %356
        %358 = vrot.lane.b32.xlu0 %v281, 4
        %v359 = vpop.permute.xlu0 %358
        %360 = vrot.lane.b32.xlu0 %v282, 4
        %v361 = vpop.permute.xlu0 %360
        %362 = vrot.lane.b32.xlu0 %v283, 4
        %v363 = vpop.permute.xlu0 %362
        %364 = vrot.lane.b32.xlu0 %v284, 4
        %v365 = vpop.permute.xlu0 %364
        %366 = vrot.lane.b32.xlu0 %v285, 4
        %v367 = vpop.permute.xlu0 %366
        %368 = vrot.lane.b32.xlu0 %v286, 4
        %v369 = vpop.permute.xlu0 %368
        %370 = vrot.lane.b32.xlu0 %v287, 4
        %v371 = vpop.permute.xlu0 %370
        %372 = vrot.lane.b32.xlu0 %v288, 4
        %v373 = vpop.permute.xlu0 %372
        %374 = vrot.lane.b32.xlu0 %v289, 4
        %v375 = vpop.permute.xlu0 %374
        %376 = vrot.lane.b32.xlu0 %v290, 4
        %v377 = vpop.permute.xlu0 %376
        %378 = vrot.lane.b32.xlu0 %v291, 4
        %v379 = vpop.permute.xlu0 %378
        %380 = vrot.lane.b32.xlu0 %v292, 4
        %v381 = vpop.permute.xlu0 %380
        %382 = vrot.lane.b32.xlu0 %v293, 4
        %v383 = vpop.permute.xlu0 %382
        %384 = vrot.lane.b32.xlu0 %v294, 4
        %v385 = vpop.permute.xlu0 %384
        %386 = vrot.lane.b32.xlu0 %v295, 4
        %v387 = vpop.permute.xlu0 %386
        %388 = vrot.lane.b32.xlu0 %v296, 4
        %v389 = vpop.permute.xlu0 %388
        %390 = vrot.lane.b32.xlu0 %v297, 4
        %v391 = vpop.permute.xlu0 %390
        %392 = vrot.lane.b32.xlu0 %v298, 4
        %v393 = vpop.permute.xlu0 %392
        %394 = vrot.lane.b32.xlu0 %v299, 4
        %v395 = vpop.permute.xlu0 %394
        %vm428 = vcmask 64544
        %429 = vst.msk [vmem:[#allocation2] sm:$0xff] %vm428, %v333
        %430 = vst.msk [vmem:[#allocation2 + $0x8] sm:$0xff] %vm428, %v335
        %431 = vst.msk [vmem:[#allocation2 + $0x10] sm:$0xff] %vm428, %v337
        %432 = vst.msk [vmem:[#allocation2 + $0x18] sm:$0xff] %vm428, %v339
        %433 = vst.msk [vmem:[#allocation2 + $0x20] sm:$0xff] %vm428, %v341
        %434 = vst.msk [vmem:[#allocation2 + $0x28] sm:$0xff] %vm428, %v343
        %435 = vst.msk [vmem:[#allocation2 + $0x30] sm:$0xff] %vm428, %v345
        %436 = vst.msk [vmem:[#allocation2 + $0x38] sm:$0xff] %vm428, %v347
        %437 = vst.msk [vmem:[#allocation2 + $0x40] sm:$0xff] %vm428, %v349
        %438 = vst.msk [vmem:[#allocation2 + $0x48] sm:$0xff] %vm428, %v351
        %439 = vst.msk [vmem:[#allocation2 + $0x50] sm:$0xff] %vm428, %v353
        %440 = vst.msk [vmem:[#allocation2 + $0x58] sm:$0xff] %vm428, %v355
        %441 = vst.msk [vmem:[#allocation2 + $0x60] sm:$0xff] %vm428, %v357
        %442 = vst.msk [vmem:[#allocation2 + $0x68] sm:$0xff] %vm428, %v359
        %443 = vst.msk [vmem:[#allocation2 + $0x70] sm:$0xff] %vm428, %v361
        %444 = vst.msk [vmem:[#allocation2 + $0x78] sm:$0xff] %vm428, %v363
        %445 = vst.msk [vmem:[#allocation2 + $0x80] sm:$0xff] %vm428, %v365
        %446 = vst.msk [vmem:[#allocation2 + $0x88] sm:$0xff] %vm428, %v367
        %447 = vst.msk [vmem:[#allocation2 + $0x90] sm:$0xff] %vm428, %v369
        %448 = vst.msk [vmem:[#allocation2 + $0x98] sm:$0xff] %vm428, %v371
        %449 = vst.msk [vmem:[#allocation2 + $0xa0] sm:$0xff] %vm428, %v373
        %450 = vst.msk [vmem:[#allocation2 + $0xa8] sm:$0xff] %vm428, %v375
        %451 = vst.msk [vmem:[#allocation2 + $0xb0] sm:$0xff] %vm428, %v377
        %452 = vst.msk [vmem:[#allocation2 + $0xb8] sm:$0xff] %vm428, %v379
        %453 = vst.msk [vmem:[#allocation2 + $0xc0] sm:$0xff] %vm428, %v381
        %454 = vst.msk [vmem:[#allocation2 + $0xc8] sm:$0xff] %vm428, %v383
        %455 = vst.msk [vmem:[#allocation2 + $0xd0] sm:$0xff] %vm428, %v385
        %456 = vst.msk [vmem:[#allocation2 + $0xd8] sm:$0xff] %vm428, %v387
        %457 = vst.msk [vmem:[#allocation2 + $0xe0] sm:$0xff] %vm428, %v389
        %458 = vst.msk [vmem:[#allocation2 + $0xe8] sm:$0xff] %vm428, %v391
        %459 = vst.msk [vmem:[#allocation2 + $0xf0] sm:$0xff] %vm428, %v393
        %460 = vst.msk [vmem:[#allocation2 + $0xf8] sm:$0xff] %vm428, %v395
        %v461 = vld [vmem:[%s168 + $0x2] sm:$0xff]
        %v462 = vld [vmem:[%s168 + $0xa] sm:$0xff]
        %v463 = vld [vmem:[%s168 + $0x1a] sm:$0xff]
        %v464 = vld [vmem:[%s168 + $0x22] sm:$0xff]
        %v465 = vld [vmem:[%s168 + $0x32] sm:$0xff]
        %v466 = vld [vmem:[%s168 + $0x3a] sm:$0xff]
        %v467 = vld [vmem:[%s168 + $0x4a] sm:$0xff]
        %v468 = vld [vmem:[%s168 + $0x52] sm:$0xff]
        %v469 = vld [vmem:[%s168 + $0x62] sm:$0xff]
        %v470 = vld [vmem:[%s168 + $0x6a] sm:$0xff]
        %v471 = vld [vmem:[%s168 + $0x7a] sm:$0xff]
        %v472 = vld [vmem:[%s168 + $0x82] sm:$0xff]
        %v473 = vld [vmem:[%s168 + $0x92] sm:$0xff]
        %v474 = vld [vmem:[%s168 + $0x9a] sm:$0xff]
        %v475 = vld [vmem:[%s168 + $0xaa] sm:$0xff]
        %v476 = vld [vmem:[%s168 + $0xb2] sm:$0xff]
        %v477 = vld [vmem:[%s168 + $0xc2] sm:$0xff]
        %v478 = vld [vmem:[%s168 + $0xca] sm:$0xff]
        %v479 = vld [vmem:[%s168 + $0xda] sm:$0xff]
        %v480 = vld [vmem:[%s168 + $0xe2] sm:$0xff]
        %v481 = vld [vmem:[%s168 + $0xf2] sm:$0xff]
        %v482 = vld [vmem:[%s168 + $0xfa] sm:$0xff]
        %v483 = vld [vmem:[%s168 + $0x10a] sm:$0xff]
        %v484 = vld [vmem:[%s168 + $0x112] sm:$0xff]
        %v485 = vld [vmem:[%s168 + $0x122] sm:$0xff]
        %v486 = vld [vmem:[%s168 + $0x12a] sm:$0xff]
        %v487 = vld [vmem:[%s168 + $0x13a] sm:$0xff]
        %v488 = vld [vmem:[%s168 + $0x142] sm:$0xff]
        %v489 = vld [vmem:[%s168 + $0x152] sm:$0xff]
        %v490 = vld [vmem:[%s168 + $0x15a] sm:$0xff]
        %v491 = vld [vmem:[%s168 + $0x16a] sm:$0xff]
        %v492 = vld [vmem:[%s168 + $0x172] sm:$0xff]
        %525 = vrot.lane.b32.xlu0 %v461, 8
        %v526 = vpop.permute.xlu0 %525
        %527 = vrot.lane.b32.xlu0 %v462, 8
        %v528 = vpop.permute.xlu0 %527
        %529 = vrot.lane.b32.xlu0 %v463, 8
        %v530 = vpop.permute.xlu0 %529
        %531 = vrot.lane.b32.xlu0 %v464, 8
        %v532 = vpop.permute.xlu0 %531
        %533 = vrot.lane.b32.xlu0 %v465, 8
        %v534 = vpop.permute.xlu0 %533
        %535 = vrot.lane.b32.xlu0 %v466, 8
        %v536 = vpop.permute.xlu0 %535
        %537 = vrot.lane.b32.xlu0 %v467, 8
        %v538 = vpop.permute.xlu0 %537
        %539 = vrot.lane.b32.xlu0 %v468, 8
        %v540 = vpop.permute.xlu0 %539
        %541 = vrot.lane.b32.xlu0 %v469, 8
        %v542 = vpop.permute.xlu0 %541
        %543 = vrot.lane.b32.xlu0 %v470, 8
        %v544 = vpop.permute.xlu0 %543
        %545 = vrot.lane.b32.xlu0 %v471, 8
        %v546 = vpop.permute.xlu0 %545
        %547 = vrot.lane.b32.xlu0 %v472, 8
        %v548 = vpop.permute.xlu0 %547
        %549 = vrot.lane.b32.xlu0 %v473, 8
        %v550 = vpop.permute.xlu0 %549
        %551 = vrot.lane.b32.xlu0 %v474, 8
        %v552 = vpop.permute.xlu0 %551
        %553 = vrot.lane.b32.xlu0 %v475, 8
        %v554 = vpop.permute.xlu0 %553
        %555 = vrot.lane.b32.xlu0 %v476, 8
        %v556 = vpop.permute.xlu0 %555
        %557 = vrot.lane.b32.xlu0 %v477, 8
        %v558 = vpop.permute.xlu0 %557
        %559 = vrot.lane.b32.xlu0 %v478, 8
        %v560 = vpop.permute.xlu0 %559
        %561 = vrot.lane.b32.xlu0 %v479, 8
        %v562 = vpop.permute.xlu0 %561
        %563 = vrot.lane.b32.xlu0 %v480, 8
        %v564 = vpop.permute.xlu0 %563
        %565 = vrot.lane.b32.xlu0 %v481, 8
        %v566 = vpop.permute.xlu0 %565
        %567 = vrot.lane.b32.xlu0 %v482, 8
        %v568 = vpop.permute.xlu0 %567
        %569 = vrot.lane.b32.xlu0 %v483, 8
        %v570 = vpop.permute.xlu0 %569
        %571 = vrot.lane.b32.xlu0 %v484, 8
        %v572 = vpop.permute.xlu0 %571
        %573 = vrot.lane.b32.xlu0 %v485, 8
        %v574 = vpop.permute.xlu0 %573
        %575 = vrot.lane.b32.xlu0 %v486, 8
        %v576 = vpop.permute.xlu0 %575
        %577 = vrot.lane.b32.xlu0 %v487, 8
        %v578 = vpop.permute.xlu0 %577
        %579 = vrot.lane.b32.xlu0 %v488, 8
        %v580 = vpop.permute.xlu0 %579
        %581 = vrot.lane.b32.xlu0 %v489, 8
        %v582 = vpop.permute.xlu0 %581
        %583 = vrot.lane.b32.xlu0 %v490, 8
        %v584 = vpop.permute.xlu0 %583
        %585 = vrot.lane.b32.xlu0 %v491, 8
        %v586 = vpop.permute.xlu0 %585
        %587 = vrot.lane.b32.xlu0 %v492, 8
        %v588 = vpop.permute.xlu0 %587
        %vm621 = vcmask 97344
        %622 = vst.msk [vmem:[#allocation2] sm:$0xff] %vm621, %v526
        %623 = vst.msk [vmem:[#allocation2 + $0x8] sm:$0xff] %vm621, %v528
        %624 = vst.msk [vmem:[#allocation2 + $0x10] sm:$0xff] %vm621, %v530
        %625 = vst.msk [vmem:[#allocation2 + $0x18] sm:$0xff] %vm621, %v532
        %626 = vst.msk [vmem:[#allocation2 + $0x20] sm:$0xff] %vm621, %v534
        %627 = vst.msk [vmem:[#allocation2 + $0x28] sm:$0xff] %vm621, %v536
        %628 = vst.msk [vmem:[#allocation2 + $0x30] sm:$0xff] %vm621, %v538
        %629 = vst.msk [vmem:[#allocation2 + $0x38] sm:$0xff] %vm621, %v540
        %630 = vst.msk [vmem:[#allocation2 + $0x40] sm:$0xff] %vm621, %v542
        %631 = vst.msk [vmem:[#allocation2 + $0x48] sm:$0xff] %vm621, %v544
        %632 = vst.msk [vmem:[#allocation2 + $0x50] sm:$0xff] %vm621, %v546
        %633 = vst.msk [vmem:[#allocation2 + $0x58] sm:$0xff] %vm621, %v548
        %634 = vst.msk [vmem:[#allocation2 + $0x60] sm:$0xff] %vm621, %v550
        %635 = vst.msk [vmem:[#allocation2 + $0x68] sm:$0xff] %vm621, %v552
        %636 = vst.msk [vmem:[#allocation2 + $0x70] sm:$0xff] %vm621, %v554
        %637 = vst.msk [vmem:[#allocation2 + $0x78] sm:$0xff] %vm621, %v556
        %638 = vst.msk [vmem:[#allocation2 + $0x80] sm:$0xff] %vm621, %v558
        %639 = vst.msk [vmem:[#allocation2 + $0x88] sm:$0xff] %vm621, %v560
        %640 = vst.msk [vmem:[#allocation2 + $0x90] sm:$0xff] %vm621, %v562
        %641 = vst.msk [vmem:[#allocation2 + $0x98] sm:$0xff] %vm621, %v564
        %642 = vst.msk [vmem:[#allocation2 + $0xa0] sm:$0xff] %vm621, %v566
        %643 = vst.msk [vmem:[#allocation2 + $0xa8] sm:$0xff] %vm621, %v568
        %644 = vst.msk [vmem:[#allocation2 + $0xb0] sm:$0xff] %vm621, %v570
        %645 = vst.msk [vmem:[#allocation2 + $0xb8] sm:$0xff] %vm621, %v572
        %646 = vst.msk [vmem:[#allocation2 + $0xc0] sm:$0xff] %vm621, %v574
        %647 = vst.msk [vmem:[#allocation2 + $0xc8] sm:$0xff] %vm621, %v576
        %648 = vst.msk [vmem:[#allocation2 + $0xd0] sm:$0xff] %vm621, %v578
        %649 = vst.msk [vmem:[#allocation2 + $0xd8] sm:$0xff] %vm621, %v580
        %650 = vst.msk [vmem:[#allocation2 + $0xe0] sm:$0xff] %vm621, %v582
        %651 = vst.msk [vmem:[#allocation2 + $0xe8] sm:$0xff] %vm621, %v584
        %652 = vst.msk [vmem:[#allocation2 + $0xf0] sm:$0xff] %vm621, %v586
        %653 = vst.msk [vmem:[#allocation2 + $0xf8] sm:$0xff] %vm621, %v588
        %s654 = scalar_lea.vmem %s168, 24
        %v655 = vld [vmem:[%s654] sm:$0xff]
        %v656 = vld [vmem:[%s654 + $0x8] sm:$0xff]
        %v657 = vld [vmem:[%s654 + $0x18] sm:$0xff]
        %v658 = vld [vmem:[%s654 + $0x20] sm:$0xff]
        %v659 = vld [vmem:[%s654 + $0x30] sm:$0xff]
        %v660 = vld [vmem:[%s654 + $0x38] sm:$0xff]
        %v661 = vld [vmem:[%s654 + $0x48] sm:$0xff]
        %v662 = vld [vmem:[%s654 + $0x50] sm:$0xff]
        %v663 = vld [vmem:[%s654 + $0x60] sm:$0xff]
        %v664 = vld [vmem:[%s654 + $0x68] sm:$0xff]
        %v665 = vld [vmem:[%s654 + $0x78] sm:$0xff]
        %v666 = vld [vmem:[%s654 + $0x80] sm:$0xff]
        %v667 = vld [vmem:[%s654 + $0x90] sm:$0xff]
        %v668 = vld [vmem:[%s654 + $0x98] sm:$0xff]
        %v669 = vld [vmem:[%s654 + $0xa8] sm:$0xff]
        %v670 = vld [vmem:[%s654 + $0xb0] sm:$0xff]
        %v671 = vld [vmem:[%s654 + $0xc0] sm:$0xff]
        %v672 = vld [vmem:[%s654 + $0xc8] sm:$0xff]
        %v673 = vld [vmem:[%s654 + $0xd8] sm:$0xff]
        %v674 = vld [vmem:[%s654 + $0xe0] sm:$0xff]
        %v675 = vld [vmem:[%s654 + $0xf0] sm:$0xff]
        %v676 = vld [vmem:[%s654 + $0xf8] sm:$0xff]
        %v677 = vld [vmem:[%s654 + $0x108] sm:$0xff]
        %v678 = vld [vmem:[%s654 + $0x110] sm:$0xff]
        %v679 = vld [vmem:[%s654 + $0x120] sm:$0xff]
        %v680 = vld [vmem:[%s654 + $0x128] sm:$0xff]
        %v681 = vld [vmem:[%s654 + $0x138] sm:$0xff]
        %v682 = vld [vmem:[%s654 + $0x140] sm:$0xff]
        %v683 = vld [vmem:[%s654 + $0x150] sm:$0xff]
        %v684 = vld [vmem:[%s654 + $0x158] sm:$0xff]
        %v685 = vld [vmem:[%s654 + $0x168] sm:$0xff]
        %v686 = vld [vmem:[%s654 + $0x170] sm:$0xff]
        %719 = vrot.lane.b32.xlu0 %v655, 12
        %v720 = vpop.permute.xlu0 %719
        %721 = vrot.lane.b32.xlu0 %v656, 12
        %v722 = vpop.permute.xlu0 %721
        %723 = vrot.lane.b32.xlu0 %v657, 12
        %v724 = vpop.permute.xlu0 %723
        %725 = vrot.lane.b32.xlu0 %v658, 12
        %v726 = vpop.permute.xlu0 %725
        %727 = vrot.lane.b32.xlu0 %v659, 12
        %v728 = vpop.permute.xlu0 %727
        %729 = vrot.lane.b32.xlu0 %v660, 12
        %v730 = vpop.permute.xlu0 %729
        %731 = vrot.lane.b32.xlu0 %v661, 12
        %v732 = vpop.permute.xlu0 %731
        %733 = vrot.lane.b32.xlu0 %v662, 12
        %v734 = vpop.permute.xlu0 %733
        %735 = vrot.lane.b32.xlu0 %v663, 12
        %v736 = vpop.permute.xlu0 %735
        %737 = vrot.lane.b32.xlu0 %v664, 12
        %v738 = vpop.permute.xlu0 %737
        %739 = vrot.lane.b32.xlu0 %v665, 12
        %v740 = vpop.permute.xlu0 %739
        %741 = vrot.lane.b32.xlu0 %v666, 12
        %v742 = vpop.permute.xlu0 %741
        %743 = vrot.lane.b32.xlu0 %v667, 12
        %v744 = vpop.permute.xlu0 %743
        %745 = vrot.lane.b32.xlu0 %v668, 12
        %v746 = vpop.permute.xlu0 %745
        %747 = vrot.lane.b32.xlu0 %v669, 12
        %v748 = vpop.permute.xlu0 %747
        %749 = vrot.lane.b32.xlu0 %v670, 12
        %v750 = vpop.permute.xlu0 %749
        %751 = vrot.lane.b32.xlu0 %v671, 12
        %v752 = vpop.permute.xlu0 %751
        %753 = vrot.lane.b32.xlu0 %v672, 12
        %v754 = vpop.permute.xlu0 %753
        %755 = vrot.lane.b32.xlu0 %v673, 12
        %v756 = vpop.permute.xlu0 %755
        %757 = vrot.lane.b32.xlu0 %v674, 12
        %v758 = vpop.permute.xlu0 %757
        %759 = vrot.lane.b32.xlu0 %v675, 12
        %v760 = vpop.permute.xlu0 %759
        %761 = vrot.lane.b32.xlu0 %v676, 12
        %v762 = vpop.permute.xlu0 %761
        %763 = vrot.lane.b32.xlu0 %v677, 12
        %v764 = vpop.permute.xlu0 %763
        %765 = vrot.lane.b32.xlu0 %v678, 12
        %v766 = vpop.permute.xlu0 %765
        %767 = vrot.lane.b32.xlu0 %v679, 12
        %v768 = vpop.permute.xlu0 %767
        %769 = vrot.lane.b32.xlu0 %v680, 12
        %v770 = vpop.permute.xlu0 %769
        %771 = vrot.lane.b32.xlu0 %v681, 12
        %v772 = vpop.permute.xlu0 %771
        %773 = vrot.lane.b32.xlu0 %v682, 12
        %v774 = vpop.permute.xlu0 %773
        %775 = vrot.lane.b32.xlu0 %v683, 12
        %v776 = vpop.permute.xlu0 %775
        %777 = vrot.lane.b32.xlu0 %v684, 12
        %v778 = vpop.permute.xlu0 %777
        %779 = vrot.lane.b32.xlu0 %v685, 12
        %v780 = vpop.permute.xlu0 %779
        %781 = vrot.lane.b32.xlu0 %v686, 12
        %v782 = vpop.permute.xlu0 %781
        %vm815 = vcmask 130144
        %816 = vst.msk [vmem:[#allocation2] sm:$0xff] %vm815, %v720
        %817 = vst.msk [vmem:[#allocation2 + $0x8] sm:$0xff] %vm815, %v722
        %818 = vst.msk [vmem:[#allocation2 + $0x10] sm:$0xff] %vm815, %v724
        %819 = vst.msk [vmem:[#allocation2 + $0x18] sm:$0xff] %vm815, %v726
        %820 = vst.msk [vmem:[#allocation2 + $0x20] sm:$0xff] %vm815, %v728
        %821 = vst.msk [vmem:[#allocation2 + $0x28] sm:$0xff] %vm815, %v730
        %822 = vst.msk [vmem:[#allocation2 + $0x30] sm:$0xff] %vm815, %v732
        %823 = vst.msk [vmem:[#allocation2 + $0x38] sm:$0xff] %vm815, %v734
        %824 = vst.msk [vmem:[#allocation2 + $0x40] sm:$0xff] %vm815, %v736
        %825 = vst.msk [vmem:[#allocation2 + $0x48] sm:$0xff] %vm815, %v738
        %826 = vst.msk [vmem:[#allocation2 + $0x50] sm:$0xff] %vm815, %v740
        %827 = vst.msk [vmem:[#allocation2 + $0x58] sm:$0xff] %vm815, %v742
        %828 = vst.msk [vmem:[#allocation2 + $0x60] sm:$0xff] %vm815, %v744
        %829 = vst.msk [vmem:[#allocation2 + $0x68] sm:$0xff] %vm815, %v746
        %830 = vst.msk [vmem:[#allocation2 + $0x70] sm:$0xff] %vm815, %v748
        %831 = vst.msk [vmem:[#allocation2 + $0x78] sm:$0xff] %vm815, %v750
        %832 = vst.msk [vmem:[#allocation2 + $0x80] sm:$0xff] %vm815, %v752
        %833 = vst.msk [vmem:[#allocation2 + $0x88] sm:$0xff] %vm815, %v754
        %834 = vst.msk [vmem:[#allocation2 + $0x90] sm:$0xff] %vm815, %v756
        %835 = vst.msk [vmem:[#allocation2 + $0x98] sm:$0xff] %vm815, %v758
        %836 = vst.msk [vmem:[#allocation2 + $0xa0] sm:$0xff] %vm815, %v760
        %837 = vst.msk [vmem:[#allocation2 + $0xa8] sm:$0xff] %vm815, %v762
        %838 = vst.msk [vmem:[#allocation2 + $0xb0] sm:$0xff] %vm815, %v764
        %839 = vst.msk [vmem:[#allocation2 + $0xb8] sm:$0xff] %vm815, %v766
        %840 = vst.msk [vmem:[#allocation2 + $0xc0] sm:$0xff] %vm815, %v768
        %841 = vst.msk [vmem:[#allocation2 + $0xc8] sm:$0xff] %vm815, %v770
        %842 = vst.msk [vmem:[#allocation2 + $0xd0] sm:$0xff] %vm815, %v772
        %843 = vst.msk [vmem:[#allocation2 + $0xd8] sm:$0xff] %vm815, %v774
        %844 = vst.msk [vmem:[#allocation2 + $0xe0] sm:$0xff] %vm815, %v776
        %845 = vst.msk [vmem:[#allocation2 + $0xe8] sm:$0xff] %vm815, %v778
        %846 = vst.msk [vmem:[#allocation2 + $0xf0] sm:$0xff] %vm815, %v780
        %847 = vst.msk [vmem:[#allocation2 + $0xf8] sm:$0xff] %vm815, %v782
        %v848 = vld [vmem:[%s654 + $0x1] sm:$0xff]
        %v849 = vld [vmem:[%s654 + $0x9] sm:$0xff]
        %v850 = vld [vmem:[%s654 + $0x19] sm:$0xff]
        %v851 = vld [vmem:[%s654 + $0x21] sm:$0xff]
        %v852 = vld [vmem:[%s654 + $0x31] sm:$0xff]
        %v853 = vld [vmem:[%s654 + $0x39] sm:$0xff]
        %v854 = vld [vmem:[%s654 + $0x49] sm:$0xff]
        %v855 = vld [vmem:[%s654 + $0x51] sm:$0xff]
        %v856 = vld [vmem:[%s654 + $0x61] sm:$0xff]
        %v857 = vld [vmem:[%s654 + $0x69] sm:$0xff]
        %v858 = vld [vmem:[%s654 + $0x79] sm:$0xff]
        %v859 = vld [vmem:[%s654 + $0x81] sm:$0xff]
        %v860 = vld [vmem:[%s654 + $0x91] sm:$0xff]
        %v861 = vld [vmem:[%s654 + $0x99] sm:$0xff]
        %v862 = vld [vmem:[%s654 + $0xa9] sm:$0xff]
        %v863 = vld [vmem:[%s654 + $0xb1] sm:$0xff]
        %v864 = vld [vmem:[%s654 + $0xc1] sm:$0xff]
        %v865 = vld [vmem:[%s654 + $0xc9] sm:$0xff]
        %v866 = vld [vmem:[%s654 + $0xd9] sm:$0xff]
        %v867 = vld [vmem:[%s654 + $0xe1] sm:$0xff]
        %v868 = vld [vmem:[%s654 + $0xf1] sm:$0xff]
        %v869 = vld [vmem:[%s654 + $0xf9] sm:$0xff]
        %v870 = vld [vmem:[%s654 + $0x109] sm:$0xff]
        %v871 = vld [vmem:[%s654 + $0x111] sm:$0xff]
        %v872 = vld [vmem:[%s654 + $0x121] sm:$0xff]
        %v873 = vld [vmem:[%s654 + $0x129] sm:$0xff]
        %v874 = vld [vmem:[%s654 + $0x139] sm:$0xff]
        %v875 = vld [vmem:[%s654 + $0x141] sm:$0xff]
        %v876 = vld [vmem:[%s654 + $0x151] sm:$0xff]
        %v877 = vld [vmem:[%s654 + $0x159] sm:$0xff]
        %v878 = vld [vmem:[%s654 + $0x169] sm:$0xff]
        %v879 = vld [vmem:[%s654 + $0x171] sm:$0xff]
        %912 = vrot.lane.b32.xlu0 %v848, 16
        %v913 = vpop.permute.xlu0 %912
        %914 = vrot.lane.b32.xlu0 %v849, 16
        %v915 = vpop.permute.xlu0 %914
        %916 = vrot.lane.b32.xlu0 %v850, 16
        %v917 = vpop.permute.xlu0 %916
        %918 = vrot.lane.b32.xlu0 %v851, 16
        %v919 = vpop.permute.xlu0 %918
        %920 = vrot.lane.b32.xlu0 %v852, 16
        %v921 = vpop.permute.xlu0 %920
        %922 = vrot.lane.b32.xlu0 %v853, 16
        %v923 = vpop.permute.xlu0 %922
        %924 = vrot.lane.b32.xlu0 %v854, 16
        %v925 = vpop.permute.xlu0 %924
        %926 = vrot.lane.b32.xlu0 %v855, 16
        %v927 = vpop.permute.xlu0 %926
        %928 = vrot.lane.b32.xlu0 %v856, 16
        %v929 = vpop.permute.xlu0 %928
        %930 = vrot.lane.b32.xlu0 %v857, 16
        %v931 = vpop.permute.xlu0 %930
        %932 = vrot.lane.b32.xlu0 %v858, 16
        %v933 = vpop.permute.xlu0 %932
        %934 = vrot.lane.b32.xlu0 %v859, 16
        %v935 = vpop.permute.xlu0 %934
        %936 = vrot.lane.b32.xlu0 %v860, 16
        %v937 = vpop.permute.xlu0 %936
        %938 = vrot.lane.b32.xlu0 %v861, 16
        %v939 = vpop.permute.xlu0 %938
        %940 = vrot.lane.b32.xlu0 %v862, 16
        %v941 = vpop.permute.xlu0 %940
        %942 = vrot.lane.b32.xlu0 %v863, 16
        %v943 = vpop.permute.xlu0 %942
        %944 = vrot.lane.b32.xlu0 %v864, 16
        %v945 = vpop.permute.xlu0 %944
        %946 = vrot.lane.b32.xlu0 %v865, 16
        %v947 = vpop.permute.xlu0 %946
        %948 = vrot.lane.b32.xlu0 %v866, 16
        %v949 = vpop.permute.xlu0 %948
        %950 = vrot.lane.b32.xlu0 %v867, 16
        %v951 = vpop.permute.xlu0 %950
        %952 = vrot.lane.b32.xlu0 %v868, 16
        %v953 = vpop.permute.xlu0 %952
        %954 = vrot.lane.b32.xlu0 %v869, 16
        %v955 = vpop.permute.xlu0 %954
        %956 = vrot.lane.b32.xlu0 %v870, 16
        %v957 = vpop.permute.xlu0 %956
        %958 = vrot.lane.b32.xlu0 %v871, 16
        %v959 = vpop.permute.xlu0 %958
        %960 = vrot.lane.b32.xlu0 %v872, 16
        %v961 = vpop.permute.xlu0 %960
        %962 = vrot.lane.b32.xlu0 %v873, 16
        %v963 = vpop.permute.xlu0 %962
        %964 = vrot.lane.b32.xlu0 %v874, 16
        %v965 = vpop.permute.xlu0 %964
        %966 = vrot.lane.b32.xlu0 %v875, 16
        %v967 = vpop.permute.xlu0 %966
        %968 = vrot.lane.b32.xlu0 %v876, 16
        %v969 = vpop.permute.xlu0 %968
        %970 = vrot.lane.b32.xlu0 %v877, 16
        %v971 = vpop.permute.xlu0 %970
        %972 = vrot.lane.b32.xlu0 %v878, 16
        %v973 = vpop.permute.xlu0 %972
        %974 = vrot.lane.b32.xlu0 %v879, 16
        %v975 = vpop.permute.xlu0 %974
        %vm1008 = vcmask 162944
        %1009 = vst.msk [vmem:[#allocation2] sm:$0xff] %vm1008, %v913
        %1010 = vst.msk [vmem:[#allocation2 + $0x8] sm:$0xff] %vm1008, %v915
        %1011 = vst.msk [vmem:[#allocation2 + $0x10] sm:$0xff] %vm1008, %v917
        %1012 = vst.msk [vmem:[#allocation2 + $0x18] sm:$0xff] %vm1008, %v919
        %1013 = vst.msk [vmem:[#allocation2 + $0x20] sm:$0xff] %vm1008, %v921
        %1014 = vst.msk [vmem:[#allocation2 + $0x28] sm:$0xff] %vm1008, %v923
        %1015 = vst.msk [vmem:[#allocation2 + $0x30] sm:$0xff] %vm1008, %v925
        %1016 = vst.msk [vmem:[#allocation2 + $0x38] sm:$0xff] %vm1008, %v927
        %1017 = vst.msk [vmem:[#allocation2 + $0x40] sm:$0xff] %vm1008, %v929
        %1018 = vst.msk [vmem:[#allocation2 + $0x48] sm:$0xff] %vm1008, %v931
        %1019 = vst.msk [vmem:[#allocation2 + $0x50] sm:$0xff] %vm1008, %v933
        %1020 = vst.msk [vmem:[#allocation2 + $0x58] sm:$0xff] %vm1008, %v935
        %1021 = vst.msk [vmem:[#allocation2 + $0x60] sm:$0xff] %vm1008, %v937
        %1022 = vst.msk [vmem:[#allocation2 + $0x68] sm:$0xff] %vm1008, %v939
        %1023 = vst.msk [vmem:[#allocation2 + $0x70] sm:$0xff] %vm1008, %v941
        %1024 = vst.msk [vmem:[#allocation2 + $0x78] sm:$0xff] %vm1008, %v943
        %1025 = vst.msk [vmem:[#allocation2 + $0x80] sm:$0xff] %vm1008, %v945
        %1026 = vst.msk [vmem:[#allocation2 + $0x88] sm:$0xff] %vm1008, %v947
        %1027 = vst.msk [vmem:[#allocation2 + $0x90] sm:$0xff] %vm1008, %v949
        %1028 = vst.msk [vmem:[#allocation2 + $0x98] sm:$0xff] %vm1008, %v951
        %1029 = vst.msk [vmem:[#allocation2 + $0xa0] sm:$0xff] %vm1008, %v953
        %1030 = vst.msk [vmem:[#allocation2 + $0xa8] sm:$0xff] %vm1008, %v955
        %1031 = vst.msk [vmem:[#allocation2 + $0xb0] sm:$0xff] %vm1008, %v957
        %1032 = vst.msk [vmem:[#allocation2 + $0xb8] sm:$0xff] %vm1008, %v959
        %1033 = vst.msk [vmem:[#allocation2 + $0xc0] sm:$0xff] %vm1008, %v961
        %1034 = vst.msk [vmem:[#allocation2 + $0xc8] sm:$0xff] %vm1008, %v963
        %1035 = vst.msk [vmem:[#allocation2 + $0xd0] sm:$0xff] %vm1008, %v965
        %1036 = vst.msk [vmem:[#allocation2 + $0xd8] sm:$0xff] %vm1008, %v967
        %1037 = vst.msk [vmem:[#allocation2 + $0xe0] sm:$0xff] %vm1008, %v969
        %1038 = vst.msk [vmem:[#allocation2 + $0xe8] sm:$0xff] %vm1008, %v971
        %1039 = vst.msk [vmem:[#allocation2 + $0xf0] sm:$0xff] %vm1008, %v973
        %1040 = vst.msk [vmem:[#allocation2 + $0xf8] sm:$0xff] %vm1008, %v975
        %v1041 = vld [vmem:[%s654 + $0x2] sm:$0xff]
        %v1042 = vld [vmem:[%s654 + $0xa] sm:$0xff]
        %v1043 = vld [vmem:[%s654 + $0x1a] sm:$0xff]
        %v1044 = vld [vmem:[%s654 + $0x22] sm:$0xff]
        %v1045 = vld [vmem:[%s654 + $0x32] sm:$0xff]
        %v1046 = vld [vmem:[%s654 + $0x3a] sm:$0xff]
        %v1047 = vld [vmem:[%s654 + $0x4a] sm:$0xff]
        %v1048 = vld [vmem:[%s654 + $0x52] sm:$0xff]
        %v1049 = vld [vmem:[%s654 + $0x62] sm:$0xff]
        %v1050 = vld [vmem:[%s654 + $0x6a] sm:$0xff]
        %v1051 = vld [vmem:[%s654 + $0x7a] sm:$0xff]
        %v1052 = vld [vmem:[%s654 + $0x82] sm:$0xff]
        %v1053 = vld [vmem:[%s654 + $0x92] sm:$0xff]
        %v1054 = vld [vmem:[%s654 + $0x9a] sm:$0xff]
        %v1055 = vld [vmem:[%s654 + $0xaa] sm:$0xff]
        %v1056 = vld [vmem:[%s654 + $0xb2] sm:$0xff]
        %v1057 = vld [vmem:[%s654 + $0xc2] sm:$0xff]
        %v1058 = vld [vmem:[%s654 + $0xca] sm:$0xff]
        %v1059 = vld [vmem:[%s654 + $0xda] sm:$0xff]
        %v1060 = vld [vmem:[%s654 + $0xe2] sm:$0xff]
        %v1061 = vld [vmem:[%s654 + $0xf2] sm:$0xff]
        %v1062 = vld [vmem:[%s654 + $0xfa] sm:$0xff]
        %v1063 = vld [vmem:[%s654 + $0x10a] sm:$0xff]
        %v1064 = vld [vmem:[%s654 + $0x112] sm:$0xff]
        %v1065 = vld [vmem:[%s654 + $0x122] sm:$0xff]
        %v1066 = vld [vmem:[%s654 + $0x12a] sm:$0xff]
        %v1067 = vld [vmem:[%s654 + $0x13a] sm:$0xff]
        %v1068 = vld [vmem:[%s654 + $0x142] sm:$0xff]
        %v1069 = vld [vmem:[%s654 + $0x152] sm:$0xff]
        %v1070 = vld [vmem:[%s654 + $0x15a] sm:$0xff]
        %v1071 = vld [vmem:[%s654 + $0x16a] sm:$0xff]
        %v1072 = vld [vmem:[%s654 + $0x172] sm:$0xff]
        %1105 = vrot.lane.b32.xlu0 %v1041, 20
        %v1106 = vpop.permute.xlu0 %1105
        %1107 = vrot.lane.b32.xlu0 %v1042, 20
        %v1108 = vpop.permute.xlu0 %1107
        %1109 = vrot.lane.b32.xlu0 %v1043, 20
        %v1110 = vpop.permute.xlu0 %1109
        %1111 = vrot.lane.b32.xlu0 %v1044, 20
        %v1112 = vpop.permute.xlu0 %1111
        %1113 = vrot.lane.b32.xlu0 %v1045, 20
        %v1114 = vpop.permute.xlu0 %1113
        %1115 = vrot.lane.b32.xlu0 %v1046, 20
        %v1116 = vpop.permute.xlu0 %1115
        %1117 = vrot.lane.b32.xlu0 %v1047, 20
        %v1118 = vpop.permute.xlu0 %1117
        %1119 = vrot.lane.b32.xlu0 %v1048, 20
        %v1120 = vpop.permute.xlu0 %1119
        %1121 = vrot.lane.b32.xlu0 %v1049, 20
        %v1122 = vpop.permute.xlu0 %1121
        %1123 = vrot.lane.b32.xlu0 %v1050, 20
        %v1124 = vpop.permute.xlu0 %1123
        %1125 = vrot.lane.b32.xlu0 %v1051, 20
        %v1126 = vpop.permute.xlu0 %1125
        %1127 = vrot.lane.b32.xlu0 %v1052, 20
        %v1128 = vpop.permute.xlu0 %1127
        %1129 = vrot.lane.b32.xlu0 %v1053, 20
        %v1130 = vpop.permute.xlu0 %1129
        %1131 = vrot.lane.b32.xlu0 %v1054, 20
        %v1132 = vpop.permute.xlu0 %1131
        %1133 = vrot.lane.b32.xlu0 %v1055, 20
        %v1134 = vpop.permute.xlu0 %1133
        %1135 = vrot.lane.b32.xlu0 %v1056, 20
        %v1136 = vpop.permute.xlu0 %1135
        %1137 = vrot.lane.b32.xlu0 %v1057, 20
        %v1138 = vpop.permute.xlu0 %1137
        %1139 = vrot.lane.b32.xlu0 %v1058, 20
        %v1140 = vpop.permute.xlu0 %1139
        %1141 = vrot.lane.b32.xlu0 %v1059, 20
        %v1142 = vpop.permute.xlu0 %1141
        %1143 = vrot.lane.b32.xlu0 %v1060, 20
        %v1144 = vpop.permute.xlu0 %1143
        %1145 = vrot.lane.b32.xlu0 %v1061, 20
        %v1146 = vpop.permute.xlu0 %1145
        %1147 = vrot.lane.b32.xlu0 %v1062, 20
        %v1148 = vpop.permute.xlu0 %1147
        %1149 = vrot.lane.b32.xlu0 %v1063, 20
        %v1150 = vpop.permute.xlu0 %1149
        %1151 = vrot.lane.b32.xlu0 %v1064, 20
        %v1152 = vpop.permute.xlu0 %1151
        %1153 = vrot.lane.b32.xlu0 %v1065, 20
        %v1154 = vpop.permute.xlu0 %1153
        %1155 = vrot.lane.b32.xlu0 %v1066, 20
        %v1156 = vpop.permute.xlu0 %1155
        %1157 = vrot.lane.b32.xlu0 %v1067, 20
        %v1158 = vpop.permute.xlu0 %1157
        %1159 = vrot.lane.b32.xlu0 %v1068, 20
        %v1160 = vpop.permute.xlu0 %1159
        %1161 = vrot.lane.b32.xlu0 %v1069, 20
        %v1162 = vpop.permute.xlu0 %1161
        %1163 = vrot.lane.b32.xlu0 %v1070, 20
        %v1164 = vpop.permute.xlu0 %1163
        %1165 = vrot.lane.b32.xlu0 %v1071, 20
        %v1166 = vpop.permute.xlu0 %1165
        %1167 = vrot.lane.b32.xlu0 %v1072, 20
        %v1168 = vpop.permute.xlu0 %1167
        %vm1201 = vcmask 195744
        %1202 = vst.msk [vmem:[#allocation2] sm:$0xff] %vm1201, %v1106
        %1203 = vst.msk [vmem:[#allocation2 + $0x8] sm:$0xff] %vm1201, %v1108
        %1204 = vst.msk [vmem:[#allocation2 + $0x10] sm:$0xff] %vm1201, %v1110
        %1205 = vst.msk [vmem:[#allocation2 + $0x18] sm:$0xff] %vm1201, %v1112
        %1206 = vst.msk [vmem:[#allocation2 + $0x20] sm:$0xff] %vm1201, %v1114
        %1207 = vst.msk [vmem:[#allocation2 + $0x28] sm:$0xff] %vm1201, %v1116
        %1208 = vst.msk [vmem:[#allocation2 + $0x30] sm:$0xff] %vm1201, %v1118
        %1209 = vst.msk [vmem:[#allocation2 + $0x38] sm:$0xff] %vm1201, %v1120
        %1210 = vst.msk [vmem:[#allocation2 + $0x40] sm:$0xff] %vm1201, %v1122
        %1211 = vst.msk [vmem:[#allocation2 + $0x48] sm:$0xff] %vm1201, %v1124
        %1212 = vst.msk [vmem:[#allocation2 + $0x50] sm:$0xff] %vm1201, %v1126
        %1213 = vst.msk [vmem:[#allocation2 + $0x58] sm:$0xff] %vm1201, %v1128
        %1214 = vst.msk [vmem:[#allocation2 + $0x60] sm:$0xff] %vm1201, %v1130
        %1215 = vst.msk [vmem:[#allocation2 + $0x68] sm:$0xff] %vm1201, %v1132
        %1216 = vst.msk [vmem:[#allocation2 + $0x70] sm:$0xff] %vm1201, %v1134
        %1217 = vst.msk [vmem:[#allocation2 + $0x78] sm:$0xff] %vm1201, %v1136
        %1218 = vst.msk [vmem:[#allocation2 + $0x80] sm:$0xff] %vm1201, %v1138
        %1219 = vst.msk [vmem:[#allocation2 + $0x88] sm:$0xff] %vm1201, %v1140
        %1220 = vst.msk [vmem:[#allocation2 + $0x90] sm:$0xff] %vm1201, %v1142
        %1221 = vst.msk [vmem:[#allocation2 + $0x98] sm:$0xff] %vm1201, %v1144
        %1222 = vst.msk [vmem:[#allocation2 + $0xa0] sm:$0xff] %vm1201, %v1146
        %1223 = vst.msk [vmem:[#allocation2 + $0xa8] sm:$0xff] %vm1201, %v1148
        %1224 = vst.msk [vmem:[#allocation2 + $0xb0] sm:$0xff] %vm1201, %v1150
        %1225 = vst.msk [vmem:[#allocation2 + $0xb8] sm:$0xff] %vm1201, %v1152
        %1226 = vst.msk [vmem:[#allocation2 + $0xc0] sm:$0xff] %vm1201, %v1154
        %1227 = vst.msk [vmem:[#allocation2 + $0xc8] sm:$0xff] %vm1201, %v1156
        %1228 = vst.msk [vmem:[#allocation2 + $0xd0] sm:$0xff] %vm1201, %v1158
        %1229 = vst.msk [vmem:[#allocation2 + $0xd8] sm:$0xff] %vm1201, %v1160
        %1230 = vst.msk [vmem:[#allocation2 + $0xe0] sm:$0xff] %vm1201, %v1162
        %1231 = vst.msk [vmem:[#allocation2 + $0xe8] sm:$0xff] %vm1201, %v1164
        %1232 = vst.msk [vmem:[#allocation2 + $0xf0] sm:$0xff] %vm1201, %v1166
        %1233 = vst.msk [vmem:[#allocation2 + $0xf8] sm:$0xff] %vm1201, %v1168
        %s1234 = scalar_lea.vmem %s168, 48
        %v1235 = vld [vmem:[%s1234] sm:$0xff]
        %v1236 = vld [vmem:[%s1234 + $0x8] sm:$0xff]
        %v1237 = vld [vmem:[%s1234 + $0x18] sm:$0xff]
        %v1238 = vld [vmem:[%s1234 + $0x20] sm:$0xff]
        %v1239 = vld [vmem:[%s1234 + $0x30] sm:$0xff]
        %v1240 = vld [vmem:[%s1234 + $0x38] sm:$0xff]
        %v1241 = vld [vmem:[%s1234 + $0x48] sm:$0xff]
        %v1242 = vld [vmem:[%s1234 + $0x50] sm:$0xff]
        %v1243 = vld [vmem:[%s1234 + $0x60] sm:$0xff]
        %v1244 = vld [vmem:[%s1234 + $0x68] sm:$0xff]
        %v1245 = vld [vmem:[%s1234 + $0x78] sm:$0xff]
        %v1246 = vld [vmem:[%s1234 + $0x80] sm:$0xff]
        %v1247 = vld [vmem:[%s1234 + $0x90] sm:$0xff]
        %v1248 = vld [vmem:[%s1234 + $0x98] sm:$0xff]
        %v1249 = vld [vmem:[%s1234 + $0xa8] sm:$0xff]
        %v1250 = vld [vmem:[%s1234 + $0xb0] sm:$0xff]
        %v1251 = vld [vmem:[%s1234 + $0xc0] sm:$0xff]
        %v1252 = vld [vmem:[%s1234 + $0xc8] sm:$0xff]
        %v1253 = vld [vmem:[%s1234 + $0xd8] sm:$0xff]
        %v1254 = vld [vmem:[%s1234 + $0xe0] sm:$0xff]
        %v1255 = vld [vmem:[%s1234 + $0xf0] sm:$0xff]
        %v1256 = vld [vmem:[%s1234 + $0xf8] sm:$0xff]
        %v1257 = vld [vmem:[%s1234 + $0x108] sm:$0xff]
        %v1258 = vld [vmem:[%s1234 + $0x110] sm:$0xff]
        %v1259 = vld [vmem:[%s1234 + $0x120] sm:$0xff]
        %v1260 = vld [vmem:[%s1234 + $0x128] sm:$0xff]
        %v1261 = vld [vmem:[%s1234 + $0x138] sm:$0xff]
        %v1262 = vld [vmem:[%s1234 + $0x140] sm:$0xff]
        %v1263 = vld [vmem:[%s1234 + $0x150] sm:$0xff]
        %v1264 = vld [vmem:[%s1234 + $0x158] sm:$0xff]
        %v1265 = vld [vmem:[%s1234 + $0x168] sm:$0xff]
        %v1266 = vld [vmem:[%s1234 + $0x170] sm:$0xff]
        %1299 = vrot.lane.b32.xlu0 %v1235, 24
        %v1300 = vpop.permute.xlu0 %1299
        %1301 = vrot.lane.b32.xlu0 %v1236, 24
        %v1302 = vpop.permute.xlu0 %1301
        %1303 = vrot.lane.b32.xlu0 %v1237, 24
        %v1304 = vpop.permute.xlu0 %1303
        %1305 = vrot.lane.b32.xlu0 %v1238, 24
        %v1306 = vpop.permute.xlu0 %1305
        %1307 = vrot.lane.b32.xlu0 %v1239, 24
        %v1308 = vpop.permute.xlu0 %1307
        %1309 = vrot.lane.b32.xlu0 %v1240, 24
        %v1310 = vpop.permute.xlu0 %1309
        %1311 = vrot.lane.b32.xlu0 %v1241, 24
        %v1312 = vpop.permute.xlu0 %1311
        %1313 = vrot.lane.b32.xlu0 %v1242, 24
        %v1314 = vpop.permute.xlu0 %1313
        %1315 = vrot.lane.b32.xlu0 %v1243, 24
        %v1316 = vpop.permute.xlu0 %1315
        %1317 = vrot.lane.b32.xlu0 %v1244, 24
        %v1318 = vpop.permute.xlu0 %1317
        %1319 = vrot.lane.b32.xlu0 %v1245, 24
        %v1320 = vpop.permute.xlu0 %1319
        %1321 = vrot.lane.b32.xlu0 %v1246, 24
        %v1322 = vpop.permute.xlu0 %1321
        %1323 = vrot.lane.b32.xlu0 %v1247, 24
        %v1324 = vpop.permute.xlu0 %1323
        %1325 = vrot.lane.b32.xlu0 %v1248, 24
        %v1326 = vpop.permute.xlu0 %1325
        %1327 = vrot.lane.b32.xlu0 %v1249, 24
        %v1328 = vpop.permute.xlu0 %1327
        %1329 = vrot.lane.b32.xlu0 %v1250, 24
        %v1330 = vpop.permute.xlu0 %1329
        %1331 = vrot.lane.b32.xlu0 %v1251, 24
        %v1332 = vpop.permute.xlu0 %1331
        %1333 = vrot.lane.b32.xlu0 %v1252, 24
        %v1334 = vpop.permute.xlu0 %1333
        %1335 = vrot.lane.b32.xlu0 %v1253, 24
        %v1336 = vpop.permute.xlu0 %1335
        %1337 = vrot.lane.b32.xlu0 %v1254, 24
        %v1338 = vpop.permute.xlu0 %1337
        %1339 = vrot.lane.b32.xlu0 %v1255, 24
        %v1340 = vpop.permute.xlu0 %1339
        %1341 = vrot.lane.b32.xlu0 %v1256, 24
        %v1342 = vpop.permute.xlu0 %1341
        %1343 = vrot.lane.b32.xlu0 %v1257, 24
        %v1344 = vpop.permute.xlu0 %1343
        %1345 = vrot.lane.b32.xlu0 %v1258, 24
        %v1346 = vpop.permute.xlu0 %1345
        %1347 = vrot.lane.b32.xlu0 %v1259, 24
        %v1348 = vpop.permute.xlu0 %1347
        %1349 = vrot.lane.b32.xlu0 %v1260, 24
        %v1350 = vpop.permute.xlu0 %1349
        %1351 = vrot.lane.b32.xlu0 %v1261, 24
        %v1352 = vpop.permute.xlu0 %1351
        %1353 = vrot.lane.b32.xlu0 %v1262, 24
        %v1354 = vpop.permute.xlu0 %1353
        %1355 = vrot.lane.b32.xlu0 %v1263, 24
        %v1356 = vpop.permute.xlu0 %1355
        %1357 = vrot.lane.b32.xlu0 %v1264, 24
        %v1358 = vpop.permute.xlu0 %1357
        %1359 = vrot.lane.b32.xlu0 %v1265, 24
        %v1360 = vpop.permute.xlu0 %1359
        %1361 = vrot.lane.b32.xlu0 %v1266, 24
        %v1362 = vpop.permute.xlu0 %1361
        %vm1395 = vcmask 228544
        %1396 = vst.msk [vmem:[#allocation2] sm:$0xff] %vm1395, %v1300
        %1397 = vst.msk [vmem:[#allocation2 + $0x8] sm:$0xff] %vm1395, %v1302
        %1398 = vst.msk [vmem:[#allocation2 + $0x10] sm:$0xff] %vm1395, %v1304
        %1399 = vst.msk [vmem:[#allocation2 + $0x18] sm:$0xff] %vm1395, %v1306
        %1400 = vst.msk [vmem:[#allocation2 + $0x20] sm:$0xff] %vm1395, %v1308
        %1401 = vst.msk [vmem:[#allocation2 + $0x28] sm:$0xff] %vm1395, %v1310
        %1402 = vst.msk [vmem:[#allocation2 + $0x30] sm:$0xff] %vm1395, %v1312
        %1403 = vst.msk [vmem:[#allocation2 + $0x38] sm:$0xff] %vm1395, %v1314
        %1404 = vst.msk [vmem:[#allocation2 + $0x40] sm:$0xff] %vm1395, %v1316
        %1405 = vst.msk [vmem:[#allocation2 + $0x48] sm:$0xff] %vm1395, %v1318
        %1406 = vst.msk [vmem:[#allocation2 + $0x50] sm:$0xff] %vm1395, %v1320
        %1407 = vst.msk [vmem:[#allocation2 + $0x58] sm:$0xff] %vm1395, %v1322
        %1408 = vst.msk [vmem:[#allocation2 + $0x60] sm:$0xff] %vm1395, %v1324
        %1409 = vst.msk [vmem:[#allocation2 + $0x68] sm:$0xff] %vm1395, %v1326
        %1410 = vst.msk [vmem:[#allocation2 + $0x70] sm:$0xff] %vm1395, %v1328
        %1411 = vst.msk [vmem:[#allocation2 + $0x78] sm:$0xff] %vm1395, %v1330
        %1412 = vst.msk [vmem:[#allocation2 + $0x80] sm:$0xff] %vm1395, %v1332
        %1413 = vst.msk [vmem:[#allocation2 + $0x88] sm:$0xff] %vm1395, %v1334
        %1414 = vst.msk [vmem:[#allocation2 + $0x90] sm:$0xff] %vm1395, %v1336
        %1415 = vst.msk [vmem:[#allocation2 + $0x98] sm:$0xff] %vm1395, %v1338
        %1416 = vst.msk [vmem:[#allocation2 + $0xa0] sm:$0xff] %vm1395, %v1340
        %1417 = vst.msk [vmem:[#allocation2 + $0xa8] sm:$0xff] %vm1395, %v1342
        %1418 = vst.msk [vmem:[#allocation2 + $0xb0] sm:$0xff] %vm1395, %v1344
        %1419 = vst.msk [vmem:[#allocation2 + $0xb8] sm:$0xff] %vm1395, %v1346
        %1420 = vst.msk [vmem:[#allocation2 + $0xc0] sm:$0xff] %vm1395, %v1348
        %1421 = vst.msk [vmem:[#allocation2 + $0xc8] sm:$0xff] %vm1395, %v1350
        %1422 = vst.msk [vmem:[#allocation2 + $0xd0] sm:$0xff] %vm1395, %v1352
        %1423 = vst.msk [vmem:[#allocation2 + $0xd8] sm:$0xff] %vm1395, %v1354
        %1424 = vst.msk [vmem:[#allocation2 + $0xe0] sm:$0xff] %vm1395, %v1356
        %1425 = vst.msk [vmem:[#allocation2 + $0xe8] sm:$0xff] %vm1395, %v1358
        %1426 = vst.msk [vmem:[#allocation2 + $0xf0] sm:$0xff] %vm1395, %v1360
        %1427 = vst.msk [vmem:[#allocation2 + $0xf8] sm:$0xff] %vm1395, %v1362
        %v1428 = vld [vmem:[%s1234 + $0x1] sm:$0xff]
        %v1429 = vld [vmem:[%s1234 + $0x9] sm:$0xff]
        %v1430 = vld [vmem:[%s1234 + $0x19] sm:$0xff]
        %v1431 = vld [vmem:[%s1234 + $0x21] sm:$0xff]
        %v1432 = vld [vmem:[%s1234 + $0x31] sm:$0xff]
        %v1433 = vld [vmem:[%s1234 + $0x39] sm:$0xff]
        %v1434 = vld [vmem:[%s1234 + $0x49] sm:$0xff]
        %v1435 = vld [vmem:[%s1234 + $0x51] sm:$0xff]
        %v1436 = vld [vmem:[%s1234 + $0x61] sm:$0xff]
        %v1437 = vld [vmem:[%s1234 + $0x69] sm:$0xff]
        %v1438 = vld [vmem:[%s1234 + $0x79] sm:$0xff]
        %v1439 = vld [vmem:[%s1234 + $0x81] sm:$0xff]
        %v1440 = vld [vmem:[%s1234 + $0x91] sm:$0xff]
        %v1441 = vld [vmem:[%s1234 + $0x99] sm:$0xff]
        %v1442 = vld [vmem:[%s1234 + $0xa9] sm:$0xff]
        %v1443 = vld [vmem:[%s1234 + $0xb1] sm:$0xff]
        %v1444 = vld [vmem:[%s1234 + $0xc1] sm:$0xff]
        %v1445 = vld [vmem:[%s1234 + $0xc9] sm:$0xff]
        %v1446 = vld [vmem:[%s1234 + $0xd9] sm:$0xff]
        %v1447 = vld [vmem:[%s1234 + $0xe1] sm:$0xff]
        %v1448 = vld [vmem:[%s1234 + $0xf1] sm:$0xff]
        %v1449 = vld [vmem:[%s1234 + $0xf9] sm:$0xff]
        %v1450 = vld [vmem:[%s1234 + $0x109] sm:$0xff]
        %v1451 = vld [vmem:[%s1234 + $0x111] sm:$0xff]
        %v1452 = vld [vmem:[%s1234 + $0x121] sm:$0xff]
        %v1453 = vld [vmem:[%s1234 + $0x129] sm:$0xff]
        %v1454 = vld [vmem:[%s1234 + $0x139] sm:$0xff]
        %v1455 = vld [vmem:[%s1234 + $0x141] sm:$0xff]
        %v1456 = vld [vmem:[%s1234 + $0x151] sm:$0xff]
        %v1457 = vld [vmem:[%s1234 + $0x159] sm:$0xff]
        %v1458 = vld [vmem:[%s1234 + $0x169] sm:$0xff]
        %v1459 = vld [vmem:[%s1234 + $0x171] sm:$0xff]
        %1492 = vrot.lane.b32.xlu0 %v1428, 28
        %v1493 = vpop.permute.xlu0 %1492
        %1494 = vrot.lane.b32.xlu0 %v1429, 28
        %v1495 = vpop.permute.xlu0 %1494
        %1496 = vrot.lane.b32.xlu0 %v1430, 28
        %v1497 = vpop.permute.xlu0 %1496
        %1498 = vrot.lane.b32.xlu0 %v1431, 28
        %v1499 = vpop.permute.xlu0 %1498
        %1500 = vrot.lane.b32.xlu0 %v1432, 28
        %v1501 = vpop.permute.xlu0 %1500
        %1502 = vrot.lane.b32.xlu0 %v1433, 28
        %v1503 = vpop.permute.xlu0 %1502
        %1504 = vrot.lane.b32.xlu0 %v1434, 28
        %v1505 = vpop.permute.xlu0 %1504
        %1506 = vrot.lane.b32.xlu0 %v1435, 28
        %v1507 = vpop.permute.xlu0 %1506
        %1508 = vrot.lane.b32.xlu0 %v1436, 28
        %v1509 = vpop.permute.xlu0 %1508
        %1510 = vrot.lane.b32.xlu0 %v1437, 28
        %v1511 = vpop.permute.xlu0 %1510
        %1512 = vrot.lane.b32.xlu0 %v1438, 28
        %v1513 = vpop.permute.xlu0 %1512
        %1514 = vrot.lane.b32.xlu0 %v1439, 28
        %v1515 = vpop.permute.xlu0 %1514
        %1516 = vrot.lane.b32.xlu0 %v1440, 28
        %v1517 = vpop.permute.xlu0 %1516
        %1518 = vrot.lane.b32.xlu0 %v1441, 28
        %v1519 = vpop.permute.xlu0 %1518
        %1520 = vrot.lane.b32.xlu0 %v1442, 28
        %v1521 = vpop.permute.xlu0 %1520
        %1522 = vrot.lane.b32.xlu0 %v1443, 28
        %v1523 = vpop.permute.xlu0 %1522
        %1524 = vrot.lane.b32.xlu0 %v1444, 28
        %v1525 = vpop.permute.xlu0 %1524
        %1526 = vrot.lane.b32.xlu0 %v1445, 28
        %v1527 = vpop.permute.xlu0 %1526
        %1528 = vrot.lane.b32.xlu0 %v1446, 28
        %v1529 = vpop.permute.xlu0 %1528
        %1530 = vrot.lane.b32.xlu0 %v1447, 28
        %v1531 = vpop.permute.xlu0 %1530
        %1532 = vrot.lane.b32.xlu0 %v1448, 28
        %v1533 = vpop.permute.xlu0 %1532
        %1534 = vrot.lane.b32.xlu0 %v1449, 28
        %v1535 = vpop.permute.xlu0 %1534
        %1536 = vrot.lane.b32.xlu0 %v1450, 28
        %v1537 = vpop.permute.xlu0 %1536
        %1538 = vrot.lane.b32.xlu0 %v1451, 28
        %v1539 = vpop.permute.xlu0 %1538
        %1540 = vrot.lane.b32.xlu0 %v1452, 28
        %v1541 = vpop.permute.xlu0 %1540
        %1542 = vrot.lane.b32.xlu0 %v1453, 28
        %v1543 = vpop.permute.xlu0 %1542
        %1544 = vrot.lane.b32.xlu0 %v1454, 28
        %v1545 = vpop.permute.xlu0 %1544
        %1546 = vrot.lane.b32.xlu0 %v1455, 28
        %v1547 = vpop.permute.xlu0 %1546
        %1548 = vrot.lane.b32.xlu0 %v1456, 28
        %v1549 = vpop.permute.xlu0 %1548
        %1550 = vrot.lane.b32.xlu0 %v1457, 28
        %v1551 = vpop.permute.xlu0 %1550
        %1552 = vrot.lane.b32.xlu0 %v1458, 28
        %v1553 = vpop.permute.xlu0 %1552
        %1554 = vrot.lane.b32.xlu0 %v1459, 28
        %v1555 = vpop.permute.xlu0 %1554
        %vm1588 = vcmask 261344
        %1589 = vst.msk [vmem:[#allocation2] sm:$0xff] %vm1588, %v1493
        %1590 = vst.msk [vmem:[#allocation2 + $0x8] sm:$0xff] %vm1588, %v1495
        %1591 = vst.msk [vmem:[#allocation2 + $0x10] sm:$0xff] %vm1588, %v1497
        %1592 = vst.msk [vmem:[#allocation2 + $0x18] sm:$0xff] %vm1588, %v1499
        %1593 = vst.msk [vmem:[#allocation2 + $0x20] sm:$0xff] %vm1588, %v1501
        %1594 = vst.msk [vmem:[#allocation2 + $0x28] sm:$0xff] %vm1588, %v1503
        %1595 = vst.msk [vmem:[#allocation2 + $0x30] sm:$0xff] %vm1588, %v1505
        %1596 = vst.msk [vmem:[#allocation2 + $0x38] sm:$0xff] %vm1588, %v1507
        %1597 = vst.msk [vmem:[#allocation2 + $0x40] sm:$0xff] %vm1588, %v1509
        %1598 = vst.msk [vmem:[#allocation2 + $0x48] sm:$0xff] %vm1588, %v1511
        %1599 = vst.msk [vmem:[#allocation2 + $0x50] sm:$0xff] %vm1588, %v1513
        %1600 = vst.msk [vmem:[#allocation2 + $0x58] sm:$0xff] %vm1588, %v1515
        %1601 = vst.msk [vmem:[#allocation2 + $0x60] sm:$0xff] %vm1588, %v1517
        %1602 = vst.msk [vmem:[#allocation2 + $0x68] sm:$0xff] %vm1588, %v1519
        %1603 = vst.msk [vmem:[#allocation2 + $0x70] sm:$0xff] %vm1588, %v1521
        %1604 = vst.msk [vmem:[#allocation2 + $0x78] sm:$0xff] %vm1588, %v1523
        %1605 = vst.msk [vmem:[#allocation2 + $0x80] sm:$0xff] %vm1588, %v1525
        %1606 = vst.msk [vmem:[#allocation2 + $0x88] sm:$0xff] %vm1588, %v1527
        %1607 = vst.msk [vmem:[#allocation2 + $0x90] sm:$0xff] %vm1588, %v1529
        %1608 = vst.msk [vmem:[#allocation2 + $0x98] sm:$0xff] %vm1588, %v1531
        %1609 = vst.msk [vmem:[#allocation2 + $0xa0] sm:$0xff] %vm1588, %v1533
        %1610 = vst.msk [vmem:[#allocation2 + $0xa8] sm:$0xff] %vm1588, %v1535
        %1611 = vst.msk [vmem:[#allocation2 + $0xb0] sm:$0xff] %vm1588, %v1537
        %1612 = vst.msk [vmem:[#allocation2 + $0xb8] sm:$0xff] %vm1588, %v1539
        %1613 = vst.msk [vmem:[#allocation2 + $0xc0] sm:$0xff] %vm1588, %v1541
        %1614 = vst.msk [vmem:[#allocation2 + $0xc8] sm:$0xff] %vm1588, %v1543
        %1615 = vst.msk [vmem:[#allocation2 + $0xd0] sm:$0xff] %vm1588, %v1545
        %1616 = vst.msk [vmem:[#allocation2 + $0xd8] sm:$0xff] %vm1588, %v1547
        %1617 = vst.msk [vmem:[#allocation2 + $0xe0] sm:$0xff] %vm1588, %v1549
        %1618 = vst.msk [vmem:[#allocation2 + $0xe8] sm:$0xff] %vm1588, %v1551
        %1619 = vst.msk [vmem:[#allocation2 + $0xf0] sm:$0xff] %vm1588, %v1553
        %1620 = vst.msk [vmem:[#allocation2 + $0xf8] sm:$0xff] %vm1588, %v1555
        %v1621 = vld [vmem:[%s1234 + $0x2] sm:$0xff]
        %v1622 = vld [vmem:[%s1234 + $0xa] sm:$0xff]
        %v1623 = vld [vmem:[%s1234 + $0x1a] sm:$0xff]
        %v1624 = vld [vmem:[%s1234 + $0x22] sm:$0xff]
        %v1625 = vld [vmem:[%s1234 + $0x32] sm:$0xff]
        %v1626 = vld [vmem:[%s1234 + $0x3a] sm:$0xff]
        %v1627 = vld [vmem:[%s1234 + $0x4a] sm:$0xff]
        %v1628 = vld [vmem:[%s1234 + $0x52] sm:$0xff]
        %v1629 = vld [vmem:[%s1234 + $0x62] sm:$0xff]
        %v1630 = vld [vmem:[%s1234 + $0x6a] sm:$0xff]
        %v1631 = vld [vmem:[%s1234 + $0x7a] sm:$0xff]
        %v1632 = vld [vmem:[%s1234 + $0x82] sm:$0xff]
        %v1633 = vld [vmem:[%s1234 + $0x92] sm:$0xff]
        %v1634 = vld [vmem:[%s1234 + $0x9a] sm:$0xff]
        %v1635 = vld [vmem:[%s1234 + $0xaa] sm:$0xff]
        %v1636 = vld [vmem:[%s1234 + $0xb2] sm:$0xff]
        %v1637 = vld [vmem:[%s1234 + $0xc2] sm:$0xff]
        %v1638 = vld [vmem:[%s1234 + $0xca] sm:$0xff]
        %v1639 = vld [vmem:[%s1234 + $0xda] sm:$0xff]
        %v1640 = vld [vmem:[%s1234 + $0xe2] sm:$0xff]
        %v1641 = vld [vmem:[%s1234 + $0xf2] sm:$0xff]
        %v1642 = vld [vmem:[%s1234 + $0xfa] sm:$0xff]
        %v1643 = vld [vmem:[%s1234 + $0x10a] sm:$0xff]
        %v1644 = vld [vmem:[%s1234 + $0x112] sm:$0xff]
        %v1645 = vld [vmem:[%s1234 + $0x122] sm:$0xff]
        %v1646 = vld [vmem:[%s1234 + $0x12a] sm:$0xff]
        %v1647 = vld [vmem:[%s1234 + $0x13a] sm:$0xff]
        %v1648 = vld [vmem:[%s1234 + $0x142] sm:$0xff]
        %v1649 = vld [vmem:[%s1234 + $0x152] sm:$0xff]
        %v1650 = vld [vmem:[%s1234 + $0x15a] sm:$0xff]
        %v1651 = vld [vmem:[%s1234 + $0x16a] sm:$0xff]
        %v1652 = vld [vmem:[%s1234 + $0x172] sm:$0xff]
        %1685 = vrot.lane.b32.xlu0 %v1621, 32
        %v1686 = vpop.permute.xlu0 %1685
        %1687 = vrot.lane.b32.xlu0 %v1622, 32
        %v1688 = vpop.permute.xlu0 %1687
        %1689 = vrot.lane.b32.xlu0 %v1623, 32
        %v1690 = vpop.permute.xlu0 %1689
        %1691 = vrot.lane.b32.xlu0 %v1624, 32
        %v1692 = vpop.permute.xlu0 %1691
        %1693 = vrot.lane.b32.xlu0 %v1625, 32
        %v1694 = vpop.permute.xlu0 %1693
        %1695 = vrot.lane.b32.xlu0 %v1626, 32
        %v1696 = vpop.permute.xlu0 %1695
        %1697 = vrot.lane.b32.xlu0 %v1627, 32
        %v1698 = vpop.permute.xlu0 %1697
        %1699 = vrot.lane.b32.xlu0 %v1628, 32
        %v1700 = vpop.permute.xlu0 %1699
        %1701 = vrot.lane.b32.xlu0 %v1629, 32
        %v1702 = vpop.permute.xlu0 %1701
        %1703 = vrot.lane.b32.xlu0 %v1630, 32
        %v1704 = vpop.permute.xlu0 %1703
        %1705 = vrot.lane.b32.xlu0 %v1631, 32
        %v1706 = vpop.permute.xlu0 %1705
        %1707 = vrot.lane.b32.xlu0 %v1632, 32
        %v1708 = vpop.permute.xlu0 %1707
        %1709 = vrot.lane.b32.xlu0 %v1633, 32
        %v1710 = vpop.permute.xlu0 %1709
        %1711 = vrot.lane.b32.xlu0 %v1634, 32
        %v1712 = vpop.permute.xlu0 %1711
        %1713 = vrot.lane.b32.xlu0 %v1635, 32
        %v1714 = vpop.permute.xlu0 %1713
        %1715 = vrot.lane.b32.xlu0 %v1636, 32
        %v1716 = vpop.permute.xlu0 %1715
        %1717 = vrot.lane.b32.xlu0 %v1637, 32
        %v1718 = vpop.permute.xlu0 %1717
        %1719 = vrot.lane.b32.xlu0 %v1638, 32
        %v1720 = vpop.permute.xlu0 %1719
        %1721 = vrot.lane.b32.xlu0 %v1639, 32
        %v1722 = vpop.permute.xlu0 %1721
        %1723 = vrot.lane.b32.xlu0 %v1640, 32
        %v1724 = vpop.permute.xlu0 %1723
        %1725 = vrot.lane.b32.xlu0 %v1641, 32
        %v1726 = vpop.permute.xlu0 %1725
        %1727 = vrot.lane.b32.xlu0 %v1642, 32
        %v1728 = vpop.permute.xlu0 %1727
        %1729 = vrot.lane.b32.xlu0 %v1643, 32
        %v1730 = vpop.permute.xlu0 %1729
        %1731 = vrot.lane.b32.xlu0 %v1644, 32
        %v1732 = vpop.permute.xlu0 %1731
        %1733 = vrot.lane.b32.xlu0 %v1645, 32
        %v1734 = vpop.permute.xlu0 %1733
        %1735 = vrot.lane.b32.xlu0 %v1646, 32
        %v1736 = vpop.permute.xlu0 %1735
        %1737 = vrot.lane.b32.xlu0 %v1647, 32
        %v1738 = vpop.permute.xlu0 %1737
        %1739 = vrot.lane.b32.xlu0 %v1648, 32
        %v1740 = vpop.permute.xlu0 %1739
        %1741 = vrot.lane.b32.xlu0 %v1649, 32
        %v1742 = vpop.permute.xlu0 %1741
        %1743 = vrot.lane.b32.xlu0 %v1650, 32
        %v1744 = vpop.permute.xlu0 %1743
        %1745 = vrot.lane.b32.xlu0 %v1651, 32
        %v1746 = vpop.permute.xlu0 %1745
        %1747 = vrot.lane.b32.xlu0 %v1652, 32
        %v1748 = vpop.permute.xlu0 %1747
        %vm1781 = vcmask 294144
        %1782 = vst.msk [vmem:[#allocation2] sm:$0xff] %vm1781, %v1686
        %1783 = vst.msk [vmem:[#allocation2 + $0x8] sm:$0xff] %vm1781, %v1688
        %1784 = vst.msk [vmem:[#allocation2 + $0x10] sm:$0xff] %vm1781, %v1690
        %1785 = vst.msk [vmem:[#allocation2 + $0x18] sm:$0xff] %vm1781, %v1692
        %1786 = vst.msk [vmem:[#allocation2 + $0x20] sm:$0xff] %vm1781, %v1694
        %1787 = vst.msk [vmem:[#allocation2 + $0x28] sm:$0xff] %vm1781, %v1696
        %1788 = vst.msk [vmem:[#allocation2 + $0x30] sm:$0xff] %vm1781, %v1698
        %1789 = vst.msk [vmem:[#allocation2 + $0x38] sm:$0xff] %vm1781, %v1700
        %1790 = vst.msk [vmem:[#allocation2 + $0x40] sm:$0xff] %vm1781, %v1702
        %1791 = vst.msk [vmem:[#allocation2 + $0x48] sm:$0xff] %vm1781, %v1704
        %1792 = vst.msk [vmem:[#allocation2 + $0x50] sm:$0xff] %vm1781, %v1706
        %1793 = vst.msk [vmem:[#allocation2 + $0x58] sm:$0xff] %vm1781, %v1708
        %1794 = vst.msk [vmem:[#allocation2 + $0x60] sm:$0xff] %vm1781, %v1710
        %1795 = vst.msk [vmem:[#allocation2 + $0x68] sm:$0xff] %vm1781, %v1712
        %1796 = vst.msk [vmem:[#allocation2 + $0x70] sm:$0xff] %vm1781, %v1714
        %1797 = vst.msk [vmem:[#allocation2 + $0x78] sm:$0xff] %vm1781, %v1716
        %1798 = vst.msk [vmem:[#allocation2 + $0x80] sm:$0xff] %vm1781, %v1718
        %1799 = vst.msk [vmem:[#allocation2 + $0x88] sm:$0xff] %vm1781, %v1720
        %1800 = vst.msk [vmem:[#allocation2 + $0x90] sm:$0xff] %vm1781, %v1722
        %1801 = vst.msk [vmem:[#allocation2 + $0x98] sm:$0xff] %vm1781, %v1724
        %1802 = vst.msk [vmem:[#allocation2 + $0xa0] sm:$0xff] %vm1781, %v1726
        %1803 = vst.msk [vmem:[#allocation2 + $0xa8] sm:$0xff] %vm1781, %v1728
        %1804 = vst.msk [vmem:[#allocation2 + $0xb0] sm:$0xff] %vm1781, %v1730
        %1805 = vst.msk [vmem:[#allocation2 + $0xb8] sm:$0xff] %vm1781, %v1732
        %1806 = vst.msk [vmem:[#allocation2 + $0xc0] sm:$0xff] %vm1781, %v1734
        %1807 = vst.msk [vmem:[#allocation2 + $0xc8] sm:$0xff] %vm1781, %v1736
        %1808 = vst.msk [vmem:[#allocation2 + $0xd0] sm:$0xff] %vm1781, %v1738
        %1809 = vst.msk [vmem:[#allocation2 + $0xd8] sm:$0xff] %vm1781, %v1740
        %1810 = vst.msk [vmem:[#allocation2 + $0xe0] sm:$0xff] %vm1781, %v1742
        %1811 = vst.msk [vmem:[#allocation2 + $0xe8] sm:$0xff] %vm1781, %v1744
        %1812 = vst.msk [vmem:[#allocation2 + $0xf0] sm:$0xff] %vm1781, %v1746
        %1813 = vst.msk [vmem:[#allocation2 + $0xf8] sm:$0xff] %vm1781, %v1748
        %v1814 = vld [vmem:[%s2] sm:$0x1]
        %v1815 = vld [vmem:[#allocation2] sm:$0xff]
        %v1816 = vld [vmem:[#allocation2 + $0x8] sm:$0xff]
        %v1817 = vld [vmem:[#allocation2 + $0x10] sm:$0xff]
        %v1818 = vld [vmem:[#allocation2 + $0x18] sm:$0xff]
        %v1819 = vld [vmem:[#allocation2 + $0x20] sm:$0xff]
        %v1820 = vld [vmem:[#allocation2 + $0x28] sm:$0xff]
        %v1821 = vld [vmem:[#allocation2 + $0x30] sm:$0xff]
        %v1822 = vld [vmem:[#allocation2 + $0x38] sm:$0xff]
        %v1823 = vld [vmem:[#allocation2 + $0x40] sm:$0xff]
        %v1824 = vld [vmem:[#allocation2 + $0x48] sm:$0xff]
        %v1825 = vld [vmem:[#allocation2 + $0x50] sm:$0xff]
        %v1826 = vld [vmem:[#allocation2 + $0x58] sm:$0xff]
        %v1827 = vld [vmem:[#allocation2 + $0x60] sm:$0xff]
        %v1828 = vld [vmem:[#allocation2 + $0x68] sm:$0xff]
        %v1829 = vld [vmem:[#allocation2 + $0x70] sm:$0xff]
        %v1830 = vld [vmem:[#allocation2 + $0x78] sm:$0xff]
        %v1831 = vld [vmem:[#allocation2 + $0x80] sm:$0xff]
        %v1832 = vld [vmem:[#allocation2 + $0x88] sm:$0xff]
        %v1833 = vld [vmem:[#allocation2 + $0x90] sm:$0xff]
        %v1834 = vld [vmem:[#allocation2 + $0x98] sm:$0xff]
        %v1835 = vld [vmem:[#allocation2 + $0xa0] sm:$0xff]
        %v1836 = vld [vmem:[#allocation2 + $0xa8] sm:$0xff]
        %v1837 = vld [vmem:[#allocation2 + $0xb0] sm:$0xff]
        %v1838 = vld [vmem:[#allocation2 + $0xb8] sm:$0xff]
        %v1839 = vld [vmem:[#allocation2 + $0xc0] sm:$0xff]
        %v1840 = vld [vmem:[#allocation2 + $0xc8] sm:$0xff]
        %v1841 = vld [vmem:[#allocation2 + $0xd0] sm:$0xff]
        %v1842 = vld [vmem:[#allocation2 + $0xd8] sm:$0xff]
        %v1843 = vld [vmem:[#allocation2 + $0xe0] sm:$0xff]
        %v1844 = vld [vmem:[#allocation2 + $0xe8] sm:$0xff]
        %v1845 = vld [vmem:[#allocation2 + $0xf0] sm:$0xff]
        %v1846 = vld [vmem:[#allocation2 + $0xf8] sm:$0xff]
        %v1847 = vld [vmem:[%s1] sm:$0xff]
        %v1848 = vld [vmem:[%s1 + $0x8] sm:$0xff]
        %v1849 = vld [vmem:[%s1 + $0x10] sm:$0xff]
        %v1850 = vld [vmem:[%s1 + $0x18] sm:$0xff]
        %v1851 = vld [vmem:[%s1 + $0x20] sm:$0xff]
        %v1852 = vld [vmem:[%s1 + $0x28] sm:$0xff]
        %v1853 = vld [vmem:[%s1 + $0x30] sm:$0xff]
        %v1854 = vld [vmem:[%s1 + $0x38] sm:$0xff]
        %v1855 = vld [vmem:[%s1 + $0x40] sm:$0xff]
        %v1856 = vld [vmem:[%s1 + $0x48] sm:$0xff]
        %v1857 = vld [vmem:[%s1 + $0x50] sm:$0xff]
        %v1858 = vld [vmem:[%s1 + $0x58] sm:$0xff]
        %v1859 = vld [vmem:[%s1 + $0x60] sm:$0xff]
        %v1860 = vld [vmem:[%s1 + $0x68] sm:$0xff]
        %v1861 = vld [vmem:[%s1 + $0x70] sm:$0xff]
        %v1862 = vld [vmem:[%s1 + $0x78] sm:$0xff]
        %v1864 = vlaneseq
        %v1865 = vshrl.u32 %v1864, 7
        %v1866 = vsub.s32 0, %v1865
        %v1867 = vrot.slane %v1814, %v1866
        %1869 = vmatprep.subr.mxu0 0.0
        %1870 = vmatpush1.msra.mxu0 %v1862
        %1871 = vmatprep.subr.mxu0 0.0
        %1872 = vmatpush1.msra.mxu0 %v1861
        %1873 = vmatprep.subr.mxu0 0.0
        %1874 = vmatpush1.msra.mxu0 %v1860
        %1875 = vmatprep.subr.mxu0 0.0
        %1876 = vmatpush1.msra.mxu0 %v1859
        %1877 = vmatprep.subr.mxu0 0.0
        %1878 = vmatpush1.msra.mxu0 %v1858
        %1879 = vmatprep.subr.mxu0 0.0
        %1880 = vmatpush1.msra.mxu0 %v1857
        %1881 = vmatprep.subr.mxu0 0.0
        %1882 = vmatpush1.msra.mxu0 %v1856
        %1883 = vmatprep.subr.mxu0 0.0
        %1884 = vmatpush1.msra.mxu0 %v1855
        %1885 = vmatprep.subr.mxu0 0.0
        %1886 = vmatpush1.msra.mxu0 %v1854
        %1887 = vmatprep.subr.mxu0 0.0
        %1888 = vmatpush1.msra.mxu0 %v1853
        %1889 = vmatprep.subr.mxu0 0.0
        %1890 = vmatpush1.msra.mxu0 %v1852
        %1891 = vmatprep.subr.mxu0 0.0
        %1892 = vmatpush1.msra.mxu0 %v1851
        %1893 = vmatprep.subr.mxu0 0.0
        %1894 = vmatpush1.msra.mxu0 %v1850
        %1895 = vmatprep.subr.mxu0 0.0
        %1896 = vmatpush1.msra.mxu0 %v1849
        %1897 = vmatprep.subr.mxu0 0.0
        %1898 = vmatpush1.msra.mxu0 %v1848
        %1899 = vmatprep.subr.mxu0 0.0
        %1900 = vmatpush1.msra.mxu0 %v1847
        %1901 = vmatprep.subr.mxu0 0.0
        %1902 = vmatpush2.msra.mxu0 0.0
        %1903 = vmatprep.subr.mxu0 0.0
        %1904 = vmatpush2.msra.mxu0 0.0
        %1905 = vmatprep.subr.mxu0 0.0
        %1906 = vmatpush2.msra.mxu0 0.0
        %1907 = vmatprep.subr.mxu0 0.0
        %1908 = vmatpush2.msra.mxu0 0.0
        %1909 = vmatprep.subr.mxu0 0.0
        %1910 = vmatpush2.msra.mxu0 0.0
        %1911 = vmatprep.subr.mxu0 0.0
        %1912 = vmatpush2.msra.mxu0 0.0
        %1913 = vmatprep.subr.mxu0 0.0
        %1914 = vmatpush2.msra.mxu0 0.0
        %1915 = vmatprep.subr.mxu0 0.0
        %1916 = vmatpush2.msra.mxu0 0.0
        %1917 = vmatprep.subr.mxu0 0.0
        %1918 = vmatpush2.msra.mxu0 0.0
        %1919 = vmatprep.subr.mxu0 0.0
        %1920 = vmatpush2.msra.mxu0 0.0
        %1921 = vmatprep.subr.mxu0 0.0
        %1922 = vmatpush2.msra.mxu0 0.0
        %1923 = vmatprep.subr.mxu0 0.0
        %1924 = vmatpush2.msra.mxu0 0.0
        %1925 = vmatprep.subr.mxu0 0.0
        %1926 = vmatpush2.msra.mxu0 0.0
        %1927 = vmatprep.subr.mxu0 0.0
        %1928 = vmatpush2.msra.mxu0 0.0
        %1929 = vmatprep.subr.mxu0 0.0
        %1930 = vmatpush2.msra.mxu0 0.0
        %1931 = vmatprep.subr.mxu0 0.0
        %1932 = vmatpush2.msra.mxu0 0.0
        %1933 = vmatprep.mubr.f32.mxu0 0.0
        %1934 = vmatmul.mubr.f32.gmra.mxu0 %v1815
        %v1935 = vpop.f32.mrf.mxu0
        %v1936 = vadd.f32 %v1867, %v1935
        %v1937 = vpop.f32.mrf.mxu0
        %1938 = vmatprep.mubr.f32.mxu0 0.0
        %1939 = vmatmul.mubr.f32.gmra.mxu0 %v1816
        %v1940 = vpop.f32.mrf.mxu0
        %v1941 = vadd.f32 %v1867, %v1940
        %v1942 = vpop.f32.mrf.mxu0
        %1943 = vmatprep.mubr.f32.mxu0 0.0
        %1944 = vmatmul.mubr.f32.gmra.mxu0 %v1817
        %v1945 = vpop.f32.mrf.mxu0
        %v1946 = vadd.f32 %v1867, %v1945
        %v1947 = vpop.f32.mrf.mxu0
        %1948 = vmatprep.mubr.f32.mxu0 0.0
        %1949 = vmatmul.mubr.f32.gmra.mxu0 %v1818
        %v1950 = vpop.f32.mrf.mxu0
        %v1951 = vadd.f32 %v1867, %v1950
        %v1952 = vpop.f32.mrf.mxu0
        %1953 = vmatprep.mubr.f32.mxu0 0.0
        %1954 = vmatmul.mubr.f32.gmra.mxu0 %v1819
        %v1955 = vpop.f32.mrf.mxu0
        %v1956 = vadd.f32 %v1867, %v1955
        %v1957 = vpop.f32.mrf.mxu0
        %1958 = vmatprep.mubr.f32.mxu0 0.0
        %1959 = vmatmul.mubr.f32.gmra.mxu0 %v1820
        %v1960 = vpop.f32.mrf.mxu0
        %v1961 = vadd.f32 %v1867, %v1960
        %v1962 = vpop.f32.mrf.mxu0
        %1963 = vmatprep.mubr.f32.mxu0 0.0
        %1964 = vmatmul.mubr.f32.gmra.mxu0 %v1821
        %v1965 = vpop.f32.mrf.mxu0
        %v1966 = vadd.f32 %v1867, %v1965
        %v1967 = vpop.f32.mrf.mxu0
        %1968 = vmatprep.mubr.f32.mxu0 0.0
        %1969 = vmatmul.mubr.f32.gmra.mxu0 %v1822
        %v1970 = vpop.f32.mrf.mxu0
        %v1971 = vadd.f32 %v1867, %v1970
        %v1972 = vpop.f32.mrf.mxu0
        %1973 = vmatprep.mubr.f32.mxu0 0.0
        %1974 = vmatmul.mubr.f32.gmra.mxu0 %v1823
        %v1975 = vpop.f32.mrf.mxu0
        %v1976 = vadd.f32 %v1867, %v1975
        %v1977 = vpop.f32.mrf.mxu0
        %1978 = vmatprep.mubr.f32.mxu0 0.0
        %1979 = vmatmul.mubr.f32.gmra.mxu0 %v1824
        %v1980 = vpop.f32.mrf.mxu0
        %v1981 = vadd.f32 %v1867, %v1980
        %v1982 = vpop.f32.mrf.mxu0
        %1983 = vmatprep.mubr.f32.mxu0 0.0
        %1984 = vmatmul.mubr.f32.gmra.mxu0 %v1825
        %v1985 = vpop.f32.mrf.mxu0
        %v1986 = vadd.f32 %v1867, %v1985
        %v1987 = vpop.f32.mrf.mxu0
        %1988 = vmatprep.mubr.f32.mxu0 0.0
        %1989 = vmatmul.mubr.f32.gmra.mxu0 %v1826
        %v1990 = vpop.f32.mrf.mxu0
        %v1991 = vadd.f32 %v1867, %v1990
        %v1992 = vpop.f32.mrf.mxu0
        %1993 = vmatprep.mubr.f32.mxu0 0.0
        %1994 = vmatmul.mubr.f32.gmra.mxu0 %v1827
        %v1995 = vpop.f32.mrf.mxu0
        %v1996 = vadd.f32 %v1867, %v1995
        %v1997 = vpop.f32.mrf.mxu0
        %1998 = vmatprep.mubr.f32.mxu0 0.0
        %1999 = vmatmul.mubr.f32.gmra.mxu0 %v1828
        %v2000 = vpop.f32.mrf.mxu0
        %v2001 = vadd.f32 %v1867, %v2000
        %v2002 = vpop.f32.mrf.mxu0
        %2003 = vmatprep.mubr.f32.mxu0 0.0
        %2004 = vmatmul.mubr.f32.gmra.mxu0 %v1829
        %v2005 = vpop.f32.mrf.mxu0
        %v2006 = vadd.f32 %v1867, %v2005
        %v2007 = vpop.f32.mrf.mxu0
        %2008 = vmatprep.mubr.f32.mxu0 0.0
        %2009 = vmatmul.mubr.f32.gmra.mxu0 %v1830
        %v2010 = vpop.f32.mrf.mxu0
        %v2011 = vadd.f32 %v1867, %v2010
        %v2012 = vpop.f32.mrf.mxu0
        %2013 = vmatprep.mubr.f32.mxu0 0.0
        %2014 = vmatmul.mubr.f32.gmra.mxu0 %v1831
        %v2015 = vpop.f32.mrf.mxu0
        %v2016 = vadd.f32 %v1867, %v2015
        %v2017 = vpop.f32.mrf.mxu0
        %2018 = vmatprep.mubr.f32.mxu0 0.0
        %2019 = vmatmul.mubr.f32.gmra.mxu0 %v1832
        %v2020 = vpop.f32.mrf.mxu0
        %v2021 = vadd.f32 %v1867, %v2020
        %v2022 = vpop.f32.mrf.mxu0
        %2023 = vmatprep.mubr.f32.mxu0 0.0
        %2024 = vmatmul.mubr.f32.gmra.mxu0 %v1833
        %v2025 = vpop.f32.mrf.mxu0
        %v2026 = vadd.f32 %v1867, %v2025
        %v2027 = vpop.f32.mrf.mxu0
        %2028 = vmatprep.mubr.f32.mxu0 0.0
        %2029 = vmatmul.mubr.f32.gmra.mxu0 %v1834
        %v2030 = vpop.f32.mrf.mxu0
        %v2031 = vadd.f32 %v1867, %v2030
        %v2032 = vpop.f32.mrf.mxu0
        %2033 = vmatprep.mubr.f32.mxu0 0.0
        %2034 = vmatmul.mubr.f32.gmra.mxu0 %v1835
        %v2035 = vpop.f32.mrf.mxu0
        %v2036 = vadd.f32 %v1867, %v2035
        %v2037 = vpop.f32.mrf.mxu0
        %2038 = vmatprep.mubr.f32.mxu0 0.0
        %2039 = vmatmul.mubr.f32.gmra.mxu0 %v1836
        %v2040 = vpop.f32.mrf.mxu0
        %v2041 = vadd.f32 %v1867, %v2040
        %v2042 = vpop.f32.mrf.mxu0
        %2043 = vmatprep.mubr.f32.mxu0 0.0
        %2044 = vmatmul.mubr.f32.gmra.mxu0 %v1837
        %v2045 = vpop.f32.mrf.mxu0
        %v2046 = vadd.f32 %v1867, %v2045
        %v2047 = vpop.f32.mrf.mxu0
        %2048 = vmatprep.mubr.f32.mxu0 0.0
        %2049 = vmatmul.mubr.f32.gmra.mxu0 %v1838
        %v2050 = vpop.f32.mrf.mxu0
        %v2051 = vadd.f32 %v1867, %v2050
        %v2052 = vpop.f32.mrf.mxu0
        %2053 = vmatprep.mubr.f32.mxu0 0.0
        %2054 = vmatmul.mubr.f32.gmra.mxu0 %v1839
        %v2055 = vpop.f32.mrf.mxu0
        %v2056 = vadd.f32 %v1867, %v2055
        %v2057 = vpop.f32.mrf.mxu0
        %2058 = vmatprep.mubr.f32.mxu0 0.0
        %2059 = vmatmul.mubr.f32.gmra.mxu0 %v1840
        %v2060 = vpop.f32.mrf.mxu0
        %v2061 = vadd.f32 %v1867, %v2060
        %v2062 = vpop.f32.mrf.mxu0
        %2063 = vmatprep.mubr.f32.mxu0 0.0
        %2064 = vmatmul.mubr.f32.gmra.mxu0 %v1841
        %v2065 = vpop.f32.mrf.mxu0
        %v2066 = vadd.f32 %v1867, %v2065
        %v2067 = vpop.f32.mrf.mxu0
        %2068 = vmatprep.mubr.f32.mxu0 0.0
        %2069 = vmatmul.mubr.f32.gmra.mxu0 %v1842
        %v2070 = vpop.f32.mrf.mxu0
        %v2071 = vadd.f32 %v1867, %v2070
        %v2072 = vpop.f32.mrf.mxu0
        %2073 = vmatprep.mubr.f32.mxu0 0.0
        %2074 = vmatmul.mubr.f32.gmra.mxu0 %v1843
        %v2075 = vpop.f32.mrf.mxu0
        %v2076 = vadd.f32 %v1867, %v2075
        %v2077 = vpop.f32.mrf.mxu0
        %2078 = vmatprep.mubr.f32.mxu0 0.0
        %2079 = vmatmul.mubr.f32.gmra.mxu0 %v1844
        %v2080 = vpop.f32.mrf.mxu0
        %v2081 = vadd.f32 %v1867, %v2080
        %v2082 = vpop.f32.mrf.mxu0
        %2083 = vmatprep.mubr.f32.mxu0 0.0
        %2084 = vmatmul.mubr.f32.gmra.mxu0 %v1845
        %v2085 = vpop.f32.mrf.mxu0
        %v2086 = vadd.f32 %v1867, %v2085
        %v2087 = vpop.f32.mrf.mxu0
        %2088 = vmatprep.mubr.f32.mxu0 0.0
        %2089 = vmatmul.mubr.f32.gmra.mxu0 %v1846
        %v2090 = vpop.f32.mrf.mxu0
        %v2091 = vadd.f32 %v1867, %v2090
        %v2092 = vpop.f32.mrf.mxu0
        %2093 = vdwg.mxu0
        %v2094 = vmax.f32 %v1936, 0.0
        %v2095 = vmax.f32 %v1941, 0.0
        %v2096 = vmax.f32 %v1946, 0.0
        %v2097 = vmax.f32 %v1951, 0.0
        %v2098 = vmax.f32 %v1956, 0.0
        %v2099 = vmax.f32 %v1961, 0.0
        %v2100 = vmax.f32 %v1966, 0.0
        %v2101 = vmax.f32 %v1971, 0.0
        %v2102 = vmax.f32 %v1976, 0.0
        %v2103 = vmax.f32 %v1981, 0.0
        %v2104 = vmax.f32 %v1986, 0.0
        %v2105 = vmax.f32 %v1991, 0.0
        %v2106 = vmax.f32 %v1996, 0.0
        %v2107 = vmax.f32 %v2001, 0.0
        %v2108 = vmax.f32 %v2006, 0.0
        %v2109 = vmax.f32 %v2011, 0.0
        %v2110 = vmax.f32 %v2016, 0.0
        %v2111 = vmax.f32 %v2021, 0.0
        %v2112 = vmax.f32 %v2026, 0.0
        %v2113 = vmax.f32 %v2031, 0.0
        %v2114 = vmax.f32 %v2036, 0.0
        %v2115 = vmax.f32 %v2041, 0.0
        %v2116 = vmax.f32 %v2046, 0.0
        %v2117 = vmax.f32 %v2051, 0.0
        %v2118 = vmax.f32 %v2056, 0.0
        %v2119 = vmax.f32 %v2061, 0.0
        %v2120 = vmax.f32 %v2066, 0.0
        %v2121 = vmax.f32 %v2071, 0.0
        %v2122 = vmax.f32 %v2076, 0.0
        %v2123 = vmax.f32 %v2081, 0.0
        %v2124 = vmax.f32 %v2086, 0.0
        %v2125 = vmax.f32 %v2091, 0.0
        %v2126 = vmin.f32 %v2094, 6.0
        %v2127 = vmin.f32 %v2095, 6.0
        %v2128 = vmin.f32 %v2096, 6.0
        %v2129 = vmin.f32 %v2097, 6.0
        %v2130 = vmin.f32 %v2098, 6.0
        %v2131 = vmin.f32 %v2099, 6.0
        %v2132 = vmin.f32 %v2100, 6.0
        %v2133 = vmin.f32 %v2101, 6.0
        %v2134 = vmin.f32 %v2102, 6.0
        %v2135 = vmin.f32 %v2103, 6.0
        %v2136 = vmin.f32 %v2104, 6.0
        %v2137 = vmin.f32 %v2105, 6.0
        %v2138 = vmin.f32 %v2106, 6.0
        %v2139 = vmin.f32 %v2107, 6.0
        %v2140 = vmin.f32 %v2108, 6.0
        %v2141 = vmin.f32 %v2109, 6.0
        %v2142 = vmin.f32 %v2110, 6.0
        %v2143 = vmin.f32 %v2111, 6.0
        %v2144 = vmin.f32 %v2112, 6.0
        %v2145 = vmin.f32 %v2113, 6.0
        %v2146 = vmin.f32 %v2114, 6.0
        %v2147 = vmin.f32 %v2115, 6.0
        %v2148 = vmin.f32 %v2116, 6.0
        %v2149 = vmin.f32 %v2117, 6.0
        %v2150 = vmin.f32 %v2118, 6.0
        %v2151 = vmin.f32 %v2119, 6.0
        %v2152 = vmin.f32 %v2120, 6.0
        %v2153 = vmin.f32 %v2121, 6.0
        %v2154 = vmin.f32 %v2122, 6.0
        %v2155 = vmin.f32 %v2123, 6.0
        %v2156 = vmin.f32 %v2124, 6.0
        %v2157 = vmin.f32 %v2125, 6.0
        %2158 = vst [vmem:[%s163] sm:$0xff] %v2126
        %2159 = vst [vmem:[%s163 + $0x8] sm:$0xff] %v2127
        %2160 = vst [vmem:[%s163 + $0x10] sm:$0xff] %v2128
        %2161 = vst [vmem:[%s163 + $0x18] sm:$0xff] %v2129
        %2162 = vst [vmem:[%s163 + $0x20] sm:$0xff] %v2130
        %2163 = vst [vmem:[%s163 + $0x28] sm:$0xff] %v2131
        %2164 = vst [vmem:[%s163 + $0x30] sm:$0xff] %v2132
        %2165 = vst [vmem:[%s163 + $0x38] sm:$0xff] %v2133
        %2166 = vst [vmem:[%s163 + $0x40] sm:$0xff] %v2134
        %2167 = vst [vmem:[%s163 + $0x48] sm:$0xff] %v2135
        %2168 = vst [vmem:[%s163 + $0x50] sm:$0xff] %v2136
        %2169 = vst [vmem:[%s163 + $0x58] sm:$0xff] %v2137
        %2170 = vst [vmem:[%s163 + $0x60] sm:$0xff] %v2138
        %2171 = vst [vmem:[%s163 + $0x68] sm:$0xff] %v2139
        %2172 = vst [vmem:[%s163 + $0x70] sm:$0xff] %v2140
        %2173 = vst [vmem:[%s163 + $0x78] sm:$0xff] %v2141
        %2174 = vst [vmem:[%s163 + $0x80] sm:$0xff] %v2142
        %2175 = vst [vmem:[%s163 + $0x88] sm:$0xff] %v2143
        %2176 = vst [vmem:[%s163 + $0x90] sm:$0xff] %v2144
        %2177 = vst [vmem:[%s163 + $0x98] sm:$0xff] %v2145
        %2178 = vst [vmem:[%s163 + $0xa0] sm:$0xff] %v2146
        %2179 = vst [vmem:[%s163 + $0xa8] sm:$0xff] %v2147
        %2180 = vst [vmem:[%s163 + $0xb0] sm:$0xff] %v2148
        %2181 = vst [vmem:[%s163 + $0xb8] sm:$0xff] %v2149
        %2182 = vst [vmem:[%s163 + $0xc0] sm:$0xff] %v2150
        %2183 = vst [vmem:[%s163 + $0xc8] sm:$0xff] %v2151
        %2184 = vst [vmem:[%s163 + $0xd0] sm:$0xff] %v2152
        %2185 = vst [vmem:[%s163 + $0xd8] sm:$0xff] %v2153
        %2186 = vst [vmem:[%s163 + $0xe0] sm:$0xff] %v2154
        %2187 = vst [vmem:[%s163 + $0xe8] sm:$0xff] %v2155
        %2188 = vst [vmem:[%s163 + $0xf0] sm:$0xff] %v2156
        %2189 = vst [vmem:[%s163 + $0xf8] sm:$0xff] %v2157
        %s2190 = sand.u32 %s93, 1
        %s2191 = scalar_lea.sflag [#allocation4], %s2190
        %s2192 = sand.u32 %s93, 1
        %s2193 = smul.addr %s2192, 256
        %s2194 = scalar_lea.vmem [#allocation3], %s2193
        // Predicated region
        $region33: #{tpu_custom_call.1} parent=31 // pred_check
          %p2195 = pneg %p103
        $region34: #{tpu_custom_call.1} parent=31 // pred_check_branch
          %2197 = sbr.rel (%p2195) target = $region36
        $region35: #{tpu_custom_call.1} parent=31 // pred_region
          %s2198 = smul.u32 32, %s17
          %s2200 = ssub.s32 4096, 4096
          %2201 = vsyncadd %s2191, %s2200
          %s2202 = smul.addr %s2198, 128
          %s2203 = scalar_lea.hbm %s3, %s2202
          %s2204 = sshll.u32 %s2194, 4
          %s2205 = int_to_ptr.vmem [resolvable:$true] %s2204
          %2210 = dma.vmem_to_hbm [thread:$0]  %s2205, 4096, %s2203, %s2191, 128, 128, 8
        $region36: #{tpu_custom_call.1} parent=31 // pred_fallthru
          _
      $region32: #{tpu_custom_call.1} parent=5 // pred_fallthru
        _
      %p2211 = scmp.le.s32.totalorder 2, %s12
      // Predicated region
      $region37: #{tpu_custom_call.1} parent=5 // pred_check
        %p2212 = pneg %p2211
      $region38: #{tpu_custom_call.1} parent=5 // pred_check_branch
        %2214 = sbr.rel (%p2212) target = $region40
      $region39: #{tpu_custom_call.1} parent=5 // pred_region
        %s2215 = ssub.s32 %s12, 2
        // Predicated region
        $region41: #{tpu_custom_call.1} parent=39 // pred_check
          %p2216 = pneg %p109
        $region42: #{tpu_custom_call.1} parent=39 // pred_check_branch
          %2218 = sbr.rel (%p2216) target = $region44
        $region43: #{tpu_custom_call.1} parent=39 // pred_region
          %s2219 = sand.u32 %s94, 1
          %s2220 = scalar_lea.sflag [#allocation4], %s2219
          %s2221 = sand.u32 %s94, 1
          %s2222 = smul.addr %s2221, 256
          %s2223 = scalar_lea.vmem [#allocation3], %s2222
          %2224 = dma.done %s2220, 4096
        $region44: #{tpu_custom_call.1} parent=39 // pred_fallthru
          _
      $region40: #{tpu_custom_call.1} parent=5 // pred_fallthru
        _
    $region6: #{tpu_custom_call.1} parent=1 // loop_footer
      %s16 = sadd.s32 1, %s12
    $region7: #{tpu_custom_call.1} parent=1 // loop_footer_branch
      %11 = sbr.rel target = $region3
    $region8: #{tpu_custom_call.1} parent=1 // loop_exit
      _
    %2225 = vsyncpa [#allocation4], 1
    %s2226 = scalar_lea.sflag [#allocation4], 1
    %2227 = vsyncpa %s2226, 1

</llo_original>
